<compile_context>
chip_gen: v5e
topology: v5e:2x2
jax: 0.10.0
libtpu: 0.0.40
codegen_flags: <defaults>
</compile_context>

<pallas_src>
import functools

import jax
import jax.numpy as jnp
from jax.experimental import pallas as pl
from jax.experimental.pallas import tpu as pltpu


# ----------------------------------------------------------------------------
# Fused kernel: conv1x1+BN+ReLU -> conv3x3+BN+ReLU -> conv3x3+BN+ReLU -> concat
# ----------------------------------------------------------------------------
def _fused_cat_bottleneck_kernel(
    x_ref,    # VMEM [N, Cin*S]          flattened NCHW input (S = H*W)
    w0_ref,   # SMEM [C1, Cin]           1x1 weights, BN scale folded in
    b0_ref,   # SMEM [C1]                folded BN shift
    w1_ref,   # SMEM [C2, C1*9]          3x3 weights, (ci, kh, kw) flattened
    b1_ref,   # SMEM [C2]
    w2_ref,   # SMEM [C3, C2*9]
    b2_ref,   # SMEM [C3]
    o_ref,    # VMEM [N, (C1+C2+C3)*S]   flattened NCHW output (the concat)
    *, N, H, W, Cin, C1, C2, C3,
):
    S = H * W
    # Zero padding on each side of the flat spatial row; padded concat stays
    # 128-lane aligned, and covers the max tap offset |dh*W + dw| <= W + 1.
    PAD = ((W + 1 + 127) // 128) * 128
    PW = PAD + S + PAD

    # Column index (within its image row) of every padded flat position.
    # Padded regions hold zeros, so the (arbitrary) mask value there is harmless.
    pcol = (jax.lax.broadcasted_iota(jnp.int32, (N, PW), 1) - PAD) % W
    keep_for_left_tap = pcol != (W - 1)   # zero source col W-1 when reading w-1
    keep_for_right_tap = pcol != 0        # zero source col 0   when reading w+1
    zero_pad = jnp.zeros((N, PAD), jnp.float32)

    def conv3x3(in_ch, w_ref, b_ref, cout):
        """3x3 conv (stride 1, pad 1) + shift + ReLU on per-channel [N, S] maps."""
        cin = len(in_ch)
        accs = [jnp.zeros((N, S), jnp.float32) for _ in range(cout)]
        for ci in range(cin):
            # Aligned concat: PAD and S are multiples of 128 for this config.
            p = jnp.concatenate([zero_pad, in_ch[ci], zero_pad], axis=-1)
            # Pre-masked source rows, one per horizontal tap position kw.
            srcs = (jnp.where(keep_for_left_tap, p, 0.0),    # kw == 0 (reads w-1)
                    p,                                        # kw == 1
                    jnp.where(keep_for_right_tap, p, 0.0))    # kw == 2 (reads w+1)
            for kh in range(3):
                for kw in range(3):
                    off = PAD + (kh - 1) * W + (kw - 1)       # static lane offset
                    tap = srcs[kw][:, off:off + S]
                    k = ci * 9 + kh * 3 + kw
                    for co in range(cout):
                        accs[co] = accs[co] + w_ref[co, k] * tap
        return [jnp.maximum(accs[co] + b_ref[co], 0.0) for co in range(cout)]

    # ---- stage 0: 1x1 conv + folded BN + ReLU (VPU broadcast-FMA) ----------
    accs = [jnp.zeros((N, S), jnp.float32) for _ in range(C1)]
    for ci in range(Cin):
        xc = x_ref[:, ci * S:(ci + 1) * S]            # [N, S], aligned lane slice
        for co in range(C1):
            accs[co] = accs[co] + w0_ref[co, ci] * xc
    out1 = [jnp.maximum(accs[co] + b0_ref[co], 0.0) for co in range(C1)]

    # ---- stages 1 & 2: 3x3 convs (intermediates never leave VMEM) ----------
    out2 = conv3x3(out1, w1_ref, b1_ref, C2)
    out3 = conv3x3(out2, w2_ref, b2_ref, C3)

    # ---- channel concat (torch.cat dim=1) written straight into the output --
    for c, ch in enumerate(out1 + out2 + out3):
        o_ref[:, c * S:(c + 1) * S] = ch              # aligned, lane-dense stores


# ----------------------------------------------------------------------------
# Wrapper: NCHW in / NCHW out, BN scale folded into weights, one pallas_call.
# ----------------------------------------------------------------------------
@jax.jit
def cat_bottleneck_forward(x_nchw, params):
    (w0, s0, sh0), (w1, s1, sh1), (w2, s2, sh2) = params
    N, Cin, H, W = x_nchw.shape
    S = H * W
    C1, C2, C3 = w0.shape[0], w1.shape[0], w2.shape[0]

    # Fold BN scale into conv weights (tiny, one-off).  torch layout [Co,Ci,kh,kw]
    # -> flatten as (ci, kh, kw), matching the kernel's k = ci*9 + kh*3 + kw.
    w0f = (w0[:, :, 0, 0] * s0[:, None]).astype(jnp.float32)        # [C1, Cin]
    w1f = (w1 * s1[:, None, None, None]).reshape(C2, C1 * 9).astype(jnp.float32)
    w2f = (w2 * s2[:, None, None, None]).reshape(C3, C2 * 9).astype(jnp.float32)

    x2 = x_nchw.astype(jnp.float32).reshape(N, Cin * S)   # metadata-only reshape

    kernel = functools.partial(
        _fused_cat_bottleneck_kernel,
        N=N, H=H, W=W, Cin=Cin, C1=C1, C2=C2, C3=C3)

    out2d = pl.pallas_call(
        kernel,
        out_shape=jax.ShapeDtypeStruct((N, (C1 + C2 + C3) * S), jnp.float32),
        in_specs=[pl.BlockSpec(memory_space=pltpu.MemorySpace.VMEM)]
        + [pl.BlockSpec(memory_space=pltpu.MemorySpace.SMEM) for _ in range(6)],
        out_specs=pl.BlockSpec(memory_space=pltpu.MemorySpace.VMEM),
    )(x2, w0f, sh0.astype(jnp.float32), w1f, sh1.astype(jnp.float32),
      w2f, sh2.astype(jnp.float32))

    # metadata-only reshape back to NCHW
    return out2d.reshape(N, C1 + C2 + C3, H, W)


# ----------------------------------------------------------------------------
# Parameter construction (deterministic, in-script).
# ----------------------------------------------------------------------------
def make_convx_params(key, cin, cout, kernel):
    k1, k2, k3, k4, k5 = jax.random.split(key, 5)
    fan_in = cin * kernel * kernel
    w = jax.random.normal(k1, (cout, cin, kernel, kernel), jnp.float32)
    w = w * (2.0 / fan_in) ** 0.5
    gamma = 1.0 + 0.1 * jax.random.normal(k2, (cout,), jnp.float32)
    beta = 0.1 * jax.random.normal(k3, (cout,), jnp.float32)
    running_mean = 0.1 * jax.random.normal(k4, (cout,), jnp.float32)
    running_var = jnp.abs(jax.random.normal(k5, (cout,), jnp.float32)) + 0.5
    eps = 1e-5
    scale = gamma / jnp.sqrt(running_var + eps)
    shift = beta - running_mean * scale
    return w, scale, shift


def make_cat_bottleneck_params(key, in_planes, out_planes, block_num=3):
    assert block_num == 3, "this script instantiates the block_num=3, stride=1 case"
    k0, k1, k2 = jax.random.split(key, 3)
    return [
        make_convx_params(k0, in_planes, out_planes // 2, 1),
        make_convx_params(k1, out_planes // 2, out_planes // 4, 3),
        make_convx_params(k2, out_planes // 4, out_planes // 4, 3),
    ]


# ----------------------------------------------------------------------------
# Pure-JAX reference (inference-form BN), used to validate the fused kernel.
# ----------------------------------------------------------------------------
def _convx_ref(x, w, scale, shift, pad):
    y = jax.lax.conv_general_dilated(
        x, w, window_strides=(1, 1), padding=((pad, pad), (pad, pad)),
        dimension_numbers=("NCHW", "OIHW", "NCHW"),
        precision=jax.lax.Precision.HIGHEST)
    y = y * scale[None, :, None, None] + shift[None, :, None, None]
    return jnp.maximum(y, 0.0)


def cat_bottleneck_reference(x, params):
    (w0, s0, b0), (w1, s1, b1), (w2, s2, b2) = params
    o1 = _convx_ref(x, w0, s0, b0, 0)
    o2 = _convx_ref(o1, w1, s1, b1, 1)
    o3 = _convx_ref(o2, w2, s2, b2, 1)
    return jnp.concatenate([o1, o2, o3], axis=1)


if __name__ == "__main__":
    key = jax.random.PRNGKey(0)
    kx, kp = jax.random.split(key)

    N, in_planes, H, W = 2, 4, 16, 16
    out_planes = 8

    x = jax.random.normal(kx, (N, in_planes, H, W), jnp.float32)
    params = make_cat_bottleneck_params(kp, in_planes, out_planes, block_num=3)

    out = jax.block_until_ready(cat_bottleneck_forward(x, params))
    assert out.shape == (N, out_planes, H, W), out.shape
    assert jnp.all(jnp.isfinite(out))

    ref = jax.block_until_ready(cat_bottleneck_reference(x, params))
    max_err = float(jnp.max(jnp.abs(out - ref)))
    assert max_err < 1e-3, f"mismatch vs reference: max abs err = {max_err}"

    print("KERNEL_OK")
</pallas_src>

<mosaic_0001>
module attributes {stable_mosaic.version = 11 : i64} {
  func.func @_fused_cat_bottleneck_kernel(%arg0: memref<2x1024xf32, #tpu.memory_space<vmem>>, %arg1: memref<4x4xf32, #tpu.memory_space<smem>>, %arg2: memref<4xf32, #tpu.memory_space<smem>>, %arg3: memref<2x36xf32, #tpu.memory_space<smem>>, %arg4: memref<2xf32, #tpu.memory_space<smem>>, %arg5: memref<2x18xf32, #tpu.memory_space<smem>>, %arg6: memref<2xf32, #tpu.memory_space<smem>>, %arg7: memref<2x2048xf32, #tpu.memory_space<vmem>>) attributes {dimension_semantics = [], scalar_prefetch = 0 : i64, scratch_operands = 0 : i64, tpu.core_type = #tpu.core_type<tc>} {
    %0 = tpu.iota {dimensions = array<i32: 1>} : vector<2x512xi32>
    %c128_i32 = arith.constant 128 : i32
    %1 = vector.broadcast %c128_i32 : i32 to vector<2x512xi32>
    %2 = arith.subi %0, %1 : vector<2x512xi32>
    %c16_i32 = arith.constant 16 : i32
    %c0_i32 = arith.constant 0 : i32
    %3 = arith.cmpi eq, %c16_i32, %c0_i32 : i32
    %c1_i32 = arith.constant 1 : i32
    %4 = arith.select %3, %c1_i32, %c16_i32 : i32
    %5 = vector.broadcast %4 : i32 to vector<2x512xi32>
    %6 = arith.remsi %2, %5 : vector<2x512xi32>
    %c0_i32_0 = arith.constant 0 : i32
    %7 = vector.broadcast %c0_i32_0 : i32 to vector<2x512xi32>
    %8 = arith.cmpi ne, %6, %7 : vector<2x512xi32>
    %c0_i32_1 = arith.constant 0 : i32
    %9 = vector.broadcast %c0_i32_1 : i32 to vector<2x512xi32>
    %10 = arith.cmpi slt, %6, %9 : vector<2x512xi32>
    %c0_i32_2 = arith.constant 0 : i32
    %11 = arith.cmpi slt, %4, %c0_i32_2 : i32
    %12 = vector.broadcast %11 : i1 to vector<2x512xi1>
    %13 = vector.broadcast %12 : vector<2x512xi1> to vector<2x512xi1>
    %14 = arith.xori %10, %13 : vector<2x512xi1>
    %15 = arith.andi %14, %8 : vector<2x512xi1>
    %16 = vector.broadcast %4 : i32 to vector<2x512xi32>
    %17 = arith.addi %6, %16 : vector<2x512xi32>
    %18 = arith.select %15, %17, %6 : vector<2x512xi1>, vector<2x512xi32>
    %c15_i32 = arith.constant 15 : i32
    %19 = vector.broadcast %c15_i32 : i32 to vector<2x512xi32>
    %20 = arith.cmpi ne, %18, %19 : vector<2x512xi32>
    %c0_i32_3 = arith.constant 0 : i32
    %21 = vector.broadcast %c0_i32_3 : i32 to vector<2x512xi32>
    %22 = arith.cmpi ne, %18, %21 : vector<2x512xi32>
    %cst = arith.constant 0.000000e+00 : f32
    %23 = vector.broadcast %cst : f32 to vector<2x128xf32>
    %cst_4 = arith.constant 0.000000e+00 : f32
    %24 = vector.broadcast %cst_4 : f32 to vector<2x256xf32>
    %cst_5 = arith.constant 0.000000e+00 : f32
    %25 = vector.broadcast %cst_5 : f32 to vector<2x256xf32>
    %cst_6 = arith.constant 0.000000e+00 : f32
    %26 = vector.broadcast %cst_6 : f32 to vector<2x256xf32>
    %cst_7 = arith.constant 0.000000e+00 : f32
    %27 = vector.broadcast %cst_7 : f32 to vector<2x256xf32>
    %c0 = arith.constant 0 : index
    %c0_8 = arith.constant 0 : index
    %28 = vector.load %arg0[%c0, %c0_8] : memref<2x1024xf32, #tpu.memory_space<vmem>>, vector<2x256xf32>
    %c0_9 = arith.constant 0 : index
    %c0_10 = arith.constant 0 : index
    %29 = memref.load %arg1[%c0_9, %c0_10] : memref<4x4xf32, #tpu.memory_space<smem>>
    %30 = vector.broadcast %29 : f32 to vector<2x256xf32>
    %31 = arith.mulf %30, %28 : vector<2x256xf32>
    %32 = arith.addf %24, %31 : vector<2x256xf32>
    %c1 = arith.constant 1 : index
    %c0_11 = arith.constant 0 : index
    %33 = memref.load %arg1[%c1, %c0_11] : memref<4x4xf32, #tpu.memory_space<smem>>
    %34 = vector.broadcast %33 : f32 to vector<2x256xf32>
    %35 = arith.mulf %34, %28 : vector<2x256xf32>
    %36 = arith.addf %25, %35 : vector<2x256xf32>
    %c2 = arith.constant 2 : index
    %c0_12 = arith.constant 0 : index
    %37 = memref.load %arg1[%c2, %c0_12] : memref<4x4xf32, #tpu.memory_space<smem>>
    %38 = vector.broadcast %37 : f32 to vector<2x256xf32>
    %39 = arith.mulf %38, %28 : vector<2x256xf32>
    %40 = arith.addf %26, %39 : vector<2x256xf32>
    %c3 = arith.constant 3 : index
    %c0_13 = arith.constant 0 : index
    %41 = memref.load %arg1[%c3, %c0_13] : memref<4x4xf32, #tpu.memory_space<smem>>
    %42 = vector.broadcast %41 : f32 to vector<2x256xf32>
    %43 = arith.mulf %42, %28 : vector<2x256xf32>
    %44 = arith.addf %27, %43 : vector<2x256xf32>
    %c0_14 = arith.constant 0 : index
    %c256 = arith.constant 256 : index
    %45 = vector.load %arg0[%c0_14, %c256] : memref<2x1024xf32, #tpu.memory_space<vmem>>, vector<2x256xf32>
    %c0_15 = arith.constant 0 : index
    %c1_16 = arith.constant 1 : index
    %46 = memref.load %arg1[%c0_15, %c1_16] : memref<4x4xf32, #tpu.memory_space<smem>>
    %47 = vector.broadcast %46 : f32 to vector<2x256xf32>
    %48 = arith.mulf %47, %45 : vector<2x256xf32>
    %49 = arith.addf %32, %48 : vector<2x256xf32>
    %c1_17 = arith.constant 1 : index
    %c1_18 = arith.constant 1 : index
    %50 = memref.load %arg1[%c1_17, %c1_18] : memref<4x4xf32, #tpu.memory_space<smem>>
    %51 = vector.broadcast %50 : f32 to vector<2x256xf32>
    %52 = arith.mulf %51, %45 : vector<2x256xf32>
    %53 = arith.addf %36, %52 : vector<2x256xf32>
    %c2_19 = arith.constant 2 : index
    %c1_20 = arith.constant 1 : index
    %54 = memref.load %arg1[%c2_19, %c1_20] : memref<4x4xf32, #tpu.memory_space<smem>>
    %55 = vector.broadcast %54 : f32 to vector<2x256xf32>
    %56 = arith.mulf %55, %45 : vector<2x256xf32>
    %57 = arith.addf %40, %56 : vector<2x256xf32>
    %c3_21 = arith.constant 3 : index
    %c1_22 = arith.constant 1 : index
    %58 = memref.load %arg1[%c3_21, %c1_22] : memref<4x4xf32, #tpu.memory_space<smem>>
    %59 = vector.broadcast %58 : f32 to vector<2x256xf32>
    %60 = arith.mulf %59, %45 : vector<2x256xf32>
    %61 = arith.addf %44, %60 : vector<2x256xf32>
    %c0_23 = arith.constant 0 : index
    %c512 = arith.constant 512 : index
    %62 = vector.load %arg0[%c0_23, %c512] : memref<2x1024xf32, #tpu.memory_space<vmem>>, vector<2x256xf32>
    %c0_24 = arith.constant 0 : index
    %c2_25 = arith.constant 2 : index
    %63 = memref.load %arg1[%c0_24, %c2_25] : memref<4x4xf32, #tpu.memory_space<smem>>
    %64 = vector.broadcast %63 : f32 to vector<2x256xf32>
    %65 = arith.mulf %64, %62 : vector<2x256xf32>
    %66 = arith.addf %49, %65 : vector<2x256xf32>
    %c1_26 = arith.constant 1 : index
    %c2_27 = arith.constant 2 : index
    %67 = memref.load %arg1[%c1_26, %c2_27] : memref<4x4xf32, #tpu.memory_space<smem>>
    %68 = vector.broadcast %67 : f32 to vector<2x256xf32>
    %69 = arith.mulf %68, %62 : vector<2x256xf32>
    %70 = arith.addf %53, %69 : vector<2x256xf32>
    %c2_28 = arith.constant 2 : index
    %c2_29 = arith.constant 2 : index
    %71 = memref.load %arg1[%c2_28, %c2_29] : memref<4x4xf32, #tpu.memory_space<smem>>
    %72 = vector.broadcast %71 : f32 to vector<2x256xf32>
    %73 = arith.mulf %72, %62 : vector<2x256xf32>
    %74 = arith.addf %57, %73 : vector<2x256xf32>
    %c3_30 = arith.constant 3 : index
    %c2_31 = arith.constant 2 : index
    %75 = memref.load %arg1[%c3_30, %c2_31] : memref<4x4xf32, #tpu.memory_space<smem>>
    %76 = vector.broadcast %75 : f32 to vector<2x256xf32>
    %77 = arith.mulf %76, %62 : vector<2x256xf32>
    %78 = arith.addf %61, %77 : vector<2x256xf32>
    %c0_32 = arith.constant 0 : index
    %c768 = arith.constant 768 : index
    %79 = vector.load %arg0[%c0_32, %c768] : memref<2x1024xf32, #tpu.memory_space<vmem>>, vector<2x256xf32>
    %c0_33 = arith.constant 0 : index
    %c3_34 = arith.constant 3 : index
    %80 = memref.load %arg1[%c0_33, %c3_34] : memref<4x4xf32, #tpu.memory_space<smem>>
    %81 = vector.broadcast %80 : f32 to vector<2x256xf32>
    %82 = arith.mulf %81, %79 : vector<2x256xf32>
    %83 = arith.addf %66, %82 : vector<2x256xf32>
    %c1_35 = arith.constant 1 : index
    %c3_36 = arith.constant 3 : index
    %84 = memref.load %arg1[%c1_35, %c3_36] : memref<4x4xf32, #tpu.memory_space<smem>>
    %85 = vector.broadcast %84 : f32 to vector<2x256xf32>
    %86 = arith.mulf %85, %79 : vector<2x256xf32>
    %87 = arith.addf %70, %86 : vector<2x256xf32>
    %c2_37 = arith.constant 2 : index
    %c3_38 = arith.constant 3 : index
    %88 = memref.load %arg1[%c2_37, %c3_38] : memref<4x4xf32, #tpu.memory_space<smem>>
    %89 = vector.broadcast %88 : f32 to vector<2x256xf32>
    %90 = arith.mulf %89, %79 : vector<2x256xf32>
    %91 = arith.addf %74, %90 : vector<2x256xf32>
    %c3_39 = arith.constant 3 : index
    %c3_40 = arith.constant 3 : index
    %92 = memref.load %arg1[%c3_39, %c3_40] : memref<4x4xf32, #tpu.memory_space<smem>>
    %93 = vector.broadcast %92 : f32 to vector<2x256xf32>
    %94 = arith.mulf %93, %79 : vector<2x256xf32>
    %95 = arith.addf %78, %94 : vector<2x256xf32>
    %c0_41 = arith.constant 0 : index
    %96 = memref.load %arg2[%c0_41] : memref<4xf32, #tpu.memory_space<smem>>
    %97 = vector.broadcast %96 : f32 to vector<2x256xf32>
    %98 = arith.addf %83, %97 : vector<2x256xf32>
    %cst_42 = arith.constant 0.000000e+00 : f32
    %99 = vector.broadcast %cst_42 : f32 to vector<2x256xf32>
    %100 = arith.maximumf %98, %99 : vector<2x256xf32>
    %c1_43 = arith.constant 1 : index
    %101 = memref.load %arg2[%c1_43] : memref<4xf32, #tpu.memory_space<smem>>
    %102 = vector.broadcast %101 : f32 to vector<2x256xf32>
    %103 = arith.addf %87, %102 : vector<2x256xf32>
    %cst_44 = arith.constant 0.000000e+00 : f32
    %104 = vector.broadcast %cst_44 : f32 to vector<2x256xf32>
    %105 = arith.maximumf %103, %104 : vector<2x256xf32>
    %c2_45 = arith.constant 2 : index
    %106 = memref.load %arg2[%c2_45] : memref<4xf32, #tpu.memory_space<smem>>
    %107 = vector.broadcast %106 : f32 to vector<2x256xf32>
    %108 = arith.addf %91, %107 : vector<2x256xf32>
    %cst_46 = arith.constant 0.000000e+00 : f32
    %109 = vector.broadcast %cst_46 : f32 to vector<2x256xf32>
    %110 = arith.maximumf %108, %109 : vector<2x256xf32>
    %c3_47 = arith.constant 3 : index
    %111 = memref.load %arg2[%c3_47] : memref<4xf32, #tpu.memory_space<smem>>
    %112 = vector.broadcast %111 : f32 to vector<2x256xf32>
    %113 = arith.addf %95, %112 : vector<2x256xf32>
    %cst_48 = arith.constant 0.000000e+00 : f32
    %114 = vector.broadcast %cst_48 : f32 to vector<2x256xf32>
    %115 = arith.maximumf %113, %114 : vector<2x256xf32>
    %cst_49 = arith.constant 0.000000e+00 : f32
    %116 = vector.broadcast %cst_49 : f32 to vector<2x256xf32>
    %cst_50 = arith.constant 0.000000e+00 : f32
    %117 = vector.broadcast %cst_50 : f32 to vector<2x256xf32>
    %118 = tpu.concatenate %23, %100, %23 in 1 : vector<2x128xf32>, vector<2x256xf32>, vector<2x128xf32> -> vector<2x512xf32>
    %cst_51 = arith.constant 0.000000e+00 : f32
    %119 = vector.broadcast %cst_51 : f32 to vector<2x512xf32>
    %120 = arith.select %20, %118, %119 : vector<2x512xi1>, vector<2x512xf32>
    %cst_52 = arith.constant 0.000000e+00 : f32
    %121 = vector.broadcast %cst_52 : f32 to vector<2x512xf32>
    %122 = arith.select %22, %118, %121 : vector<2x512xi1>, vector<2x512xf32>
    %123 = vector.extract_strided_slice %120 {offsets = [0, 111], sizes = [2, 256], strides = [1, 1]} : vector<2x512xf32> to vector<2x256xf32>
    %c0_53 = arith.constant 0 : index
    %c0_54 = arith.constant 0 : index
    %124 = memref.load %arg3[%c0_53, %c0_54] : memref<2x36xf32, #tpu.memory_space<smem>>
    %125 = vector.broadcast %124 : f32 to vector<2x256xf32>
    %126 = arith.mulf %125, %123 : vector<2x256xf32>
    %127 = arith.addf %116, %126 : vector<2x256xf32>
    %c1_55 = arith.constant 1 : index
    %c0_56 = arith.constant 0 : index
    %128 = memref.load %arg3[%c1_55, %c0_56] : memref<2x36xf32, #tpu.memory_space<smem>>
    %129 = vector.broadcast %128 : f32 to vector<2x256xf32>
    %130 = arith.mulf %129, %123 : vector<2x256xf32>
    %131 = arith.addf %117, %130 : vector<2x256xf32>
    %132 = vector.extract_strided_slice %118 {offsets = [0, 112], sizes = [2, 256], strides = [1, 1]} : vector<2x512xf32> to vector<2x256xf32>
    %c0_57 = arith.constant 0 : index
    %c1_58 = arith.constant 1 : index
    %133 = memref.load %arg3[%c0_57, %c1_58] : memref<2x36xf32, #tpu.memory_space<smem>>
    %134 = vector.broadcast %133 : f32 to vector<2x256xf32>
    %135 = arith.mulf %134, %132 : vector<2x256xf32>
    %136 = arith.addf %127, %135 : vector<2x256xf32>
    %c1_59 = arith.constant 1 : index
    %c1_60 = arith.constant 1 : index
    %137 = memref.load %arg3[%c1_59, %c1_60] : memref<2x36xf32, #tpu.memory_space<smem>>
    %138 = vector.broadcast %137 : f32 to vector<2x256xf32>
    %139 = arith.mulf %138, %132 : vector<2x256xf32>
    %140 = arith.addf %131, %139 : vector<2x256xf32>
    %141 = vector.extract_strided_slice %122 {offsets = [0, 113], sizes = [2, 256], strides = [1, 1]} : vector<2x512xf32> to vector<2x256xf32>
    %c0_61 = arith.constant 0 : index
    %c2_62 = arith.constant 2 : index
    %142 = memref.load %arg3[%c0_61, %c2_62] : memref<2x36xf32, #tpu.memory_space<smem>>
    %143 = vector.broadcast %142 : f32 to vector<2x256xf32>
    %144 = arith.mulf %143, %141 : vector<2x256xf32>
    %145 = arith.addf %136, %144 : vector<2x256xf32>
    %c1_63 = arith.constant 1 : index
    %c2_64 = arith.constant 2 : index
    %146 = memref.load %arg3[%c1_63, %c2_64] : memref<2x36xf32, #tpu.memory_space<smem>>
    %147 = vector.broadcast %146 : f32 to vector<2x256xf32>
    %148 = arith.mulf %147, %141 : vector<2x256xf32>
    %149 = arith.addf %140, %148 : vector<2x256xf32>
    %150 = vector.extract_strided_slice %120 {offsets = [0, 127], sizes = [2, 256], strides = [1, 1]} : vector<2x512xf32> to vector<2x256xf32>
    %c0_65 = arith.constant 0 : index
    %c3_66 = arith.constant 3 : index
    %151 = memref.load %arg3[%c0_65, %c3_66] : memref<2x36xf32, #tpu.memory_space<smem>>
    %152 = vector.broadcast %151 : f32 to vector<2x256xf32>
    %153 = arith.mulf %152, %150 : vector<2x256xf32>
    %154 = arith.addf %145, %153 : vector<2x256xf32>
    %c1_67 = arith.constant 1 : index
    %c3_68 = arith.constant 3 : index
    %155 = memref.load %arg3[%c1_67, %c3_68] : memref<2x36xf32, #tpu.memory_space<smem>>
    %156 = vector.broadcast %155 : f32 to vector<2x256xf32>
    %157 = arith.mulf %156, %150 : vector<2x256xf32>
    %158 = arith.addf %149, %157 : vector<2x256xf32>
    %159 = vector.extract_strided_slice %118 {offsets = [0, 128], sizes = [2, 256], strides = [1, 1]} : vector<2x512xf32> to vector<2x256xf32>
    %c0_69 = arith.constant 0 : index
    %c4 = arith.constant 4 : index
    %160 = memref.load %arg3[%c0_69, %c4] : memref<2x36xf32, #tpu.memory_space<smem>>
    %161 = vector.broadcast %160 : f32 to vector<2x256xf32>
    %162 = arith.mulf %161, %159 : vector<2x256xf32>
    %163 = arith.addf %154, %162 : vector<2x256xf32>
    %c1_70 = arith.constant 1 : index
    %c4_71 = arith.constant 4 : index
    %164 = memref.load %arg3[%c1_70, %c4_71] : memref<2x36xf32, #tpu.memory_space<smem>>
    %165 = vector.broadcast %164 : f32 to vector<2x256xf32>
    %166 = arith.mulf %165, %159 : vector<2x256xf32>
    %167 = arith.addf %158, %166 : vector<2x256xf32>
    %168 = vector.extract_strided_slice %122 {offsets = [0, 129], sizes = [2, 256], strides = [1, 1]} : vector<2x512xf32> to vector<2x256xf32>
    %c0_72 = arith.constant 0 : index
    %c5 = arith.constant 5 : index
    %169 = memref.load %arg3[%c0_72, %c5] : memref<2x36xf32, #tpu.memory_space<smem>>
    %170 = vector.broadcast %169 : f32 to vector<2x256xf32>
    %171 = arith.mulf %170, %168 : vector<2x256xf32>
    %172 = arith.addf %163, %171 : vector<2x256xf32>
    %c1_73 = arith.constant 1 : index
    %c5_74 = arith.constant 5 : index
    %173 = memref.load %arg3[%c1_73, %c5_74] : memref<2x36xf32, #tpu.memory_space<smem>>
    %174 = vector.broadcast %173 : f32 to vector<2x256xf32>
    %175 = arith.mulf %174, %168 : vector<2x256xf32>
    %176 = arith.addf %167, %175 : vector<2x256xf32>
    %177 = vector.extract_strided_slice %120 {offsets = [0, 143], sizes = [2, 256], strides = [1, 1]} : vector<2x512xf32> to vector<2x256xf32>
    %c0_75 = arith.constant 0 : index
    %c6 = arith.constant 6 : index
    %178 = memref.load %arg3[%c0_75, %c6] : memref<2x36xf32, #tpu.memory_space<smem>>
    %179 = vector.broadcast %178 : f32 to vector<2x256xf32>
    %180 = arith.mulf %179, %177 : vector<2x256xf32>
    %181 = arith.addf %172, %180 : vector<2x256xf32>
    %c1_76 = arith.constant 1 : index
    %c6_77 = arith.constant 6 : index
    %182 = memref.load %arg3[%c1_76, %c6_77] : memref<2x36xf32, #tpu.memory_space<smem>>
    %183 = vector.broadcast %182 : f32 to vector<2x256xf32>
    %184 = arith.mulf %183, %177 : vector<2x256xf32>
    %185 = arith.addf %176, %184 : vector<2x256xf32>
    %186 = vector.extract_strided_slice %118 {offsets = [0, 144], sizes = [2, 256], strides = [1, 1]} : vector<2x512xf32> to vector<2x256xf32>
    %c0_78 = arith.constant 0 : index
    %c7 = arith.constant 7 : index
    %187 = memref.load %arg3[%c0_78, %c7] : memref<2x36xf32, #tpu.memory_space<smem>>
    %188 = vector.broadcast %187 : f32 to vector<2x256xf32>
    %189 = arith.mulf %188, %186 : vector<2x256xf32>
    %190 = arith.addf %181, %189 : vector<2x256xf32>
    %c1_79 = arith.constant 1 : index
    %c7_80 = arith.constant 7 : index
    %191 = memref.load %arg3[%c1_79, %c7_80] : memref<2x36xf32, #tpu.memory_space<smem>>
    %192 = vector.broadcast %191 : f32 to vector<2x256xf32>
    %193 = arith.mulf %192, %186 : vector<2x256xf32>
    %194 = arith.addf %185, %193 : vector<2x256xf32>
    %195 = vector.extract_strided_slice %122 {offsets = [0, 145], sizes = [2, 256], strides = [1, 1]} : vector<2x512xf32> to vector<2x256xf32>
    %c0_81 = arith.constant 0 : index
    %c8 = arith.constant 8 : index
    %196 = memref.load %arg3[%c0_81, %c8] : memref<2x36xf32, #tpu.memory_space<smem>>
    %197 = vector.broadcast %196 : f32 to vector<2x256xf32>
    %198 = arith.mulf %197, %195 : vector<2x256xf32>
    %199 = arith.addf %190, %198 : vector<2x256xf32>
    %c1_82 = arith.constant 1 : index
    %c8_83 = arith.constant 8 : index
    %200 = memref.load %arg3[%c1_82, %c8_83] : memref<2x36xf32, #tpu.memory_space<smem>>
    %201 = vector.broadcast %200 : f32 to vector<2x256xf32>
    %202 = arith.mulf %201, %195 : vector<2x256xf32>
    %203 = arith.addf %194, %202 : vector<2x256xf32>
    %204 = tpu.concatenate %23, %105, %23 in 1 : vector<2x128xf32>, vector<2x256xf32>, vector<2x128xf32> -> vector<2x512xf32>
    %cst_84 = arith.constant 0.000000e+00 : f32
    %205 = vector.broadcast %cst_84 : f32 to vector<2x512xf32>
    %206 = arith.select %20, %204, %205 : vector<2x512xi1>, vector<2x512xf32>
    %cst_85 = arith.constant 0.000000e+00 : f32
    %207 = vector.broadcast %cst_85 : f32 to vector<2x512xf32>
    %208 = arith.select %22, %204, %207 : vector<2x512xi1>, vector<2x512xf32>
    %209 = vector.extract_strided_slice %206 {offsets = [0, 111], sizes = [2, 256], strides = [1, 1]} : vector<2x512xf32> to vector<2x256xf32>
    %c0_86 = arith.constant 0 : index
    %c9 = arith.constant 9 : index
    %210 = memref.load %arg3[%c0_86, %c9] : memref<2x36xf32, #tpu.memory_space<smem>>
    %211 = vector.broadcast %210 : f32 to vector<2x256xf32>
    %212 = arith.mulf %211, %209 : vector<2x256xf32>
    %213 = arith.addf %199, %212 : vector<2x256xf32>
    %c1_87 = arith.constant 1 : index
    %c9_88 = arith.constant 9 : index
    %214 = memref.load %arg3[%c1_87, %c9_88] : memref<2x36xf32, #tpu.memory_space<smem>>
    %215 = vector.broadcast %214 : f32 to vector<2x256xf32>
    %216 = arith.mulf %215, %209 : vector<2x256xf32>
    %217 = arith.addf %203, %216 : vector<2x256xf32>
    %218 = vector.extract_strided_slice %204 {offsets = [0, 112], sizes = [2, 256], strides = [1, 1]} : vector<2x512xf32> to vector<2x256xf32>
    %c0_89 = arith.constant 0 : index
    %c10 = arith.constant 10 : index
    %219 = memref.load %arg3[%c0_89, %c10] : memref<2x36xf32, #tpu.memory_space<smem>>
    %220 = vector.broadcast %219 : f32 to vector<2x256xf32>
    %221 = arith.mulf %220, %218 : vector<2x256xf32>
    %222 = arith.addf %213, %221 : vector<2x256xf32>
    %c1_90 = arith.constant 1 : index
    %c10_91 = arith.constant 10 : index
    %223 = memref.load %arg3[%c1_90, %c10_91] : memref<2x36xf32, #tpu.memory_space<smem>>
    %224 = vector.broadcast %223 : f32 to vector<2x256xf32>
    %225 = arith.mulf %224, %218 : vector<2x256xf32>
    %226 = arith.addf %217, %225 : vector<2x256xf32>
    %227 = vector.extract_strided_slice %208 {offsets = [0, 113], sizes = [2, 256], strides = [1, 1]} : vector<2x512xf32> to vector<2x256xf32>
    %c0_92 = arith.constant 0 : index
    %c11 = arith.constant 11 : index
    %228 = memref.load %arg3[%c0_92, %c11] : memref<2x36xf32, #tpu.memory_space<smem>>
    %229 = vector.broadcast %228 : f32 to vector<2x256xf32>
    %230 = arith.mulf %229, %227 : vector<2x256xf32>
    %231 = arith.addf %222, %230 : vector<2x256xf32>
    %c1_93 = arith.constant 1 : index
    %c11_94 = arith.constant 11 : index
    %232 = memref.load %arg3[%c1_93, %c11_94] : memref<2x36xf32, #tpu.memory_space<smem>>
    %233 = vector.broadcast %232 : f32 to vector<2x256xf32>
    %234 = arith.mulf %233, %227 : vector<2x256xf32>
    %235 = arith.addf %226, %234 : vector<2x256xf32>
    %236 = vector.extract_strided_slice %206 {offsets = [0, 127], sizes = [2, 256], strides = [1, 1]} : vector<2x512xf32> to vector<2x256xf32>
    %c0_95 = arith.constant 0 : index
    %c12 = arith.constant 12 : index
    %237 = memref.load %arg3[%c0_95, %c12] : memref<2x36xf32, #tpu.memory_space<smem>>
    %238 = vector.broadcast %237 : f32 to vector<2x256xf32>
    %239 = arith.mulf %238, %236 : vector<2x256xf32>
    %240 = arith.addf %231, %239 : vector<2x256xf32>
    %c1_96 = arith.constant 1 : index
    %c12_97 = arith.constant 12 : index
    %241 = memref.load %arg3[%c1_96, %c12_97] : memref<2x36xf32, #tpu.memory_space<smem>>
    %242 = vector.broadcast %241 : f32 to vector<2x256xf32>
    %243 = arith.mulf %242, %236 : vector<2x256xf32>
    %244 = arith.addf %235, %243 : vector<2x256xf32>
    %245 = vector.extract_strided_slice %204 {offsets = [0, 128], sizes = [2, 256], strides = [1, 1]} : vector<2x512xf32> to vector<2x256xf32>
    %c0_98 = arith.constant 0 : index
    %c13 = arith.constant 13 : index
    %246 = memref.load %arg3[%c0_98, %c13] : memref<2x36xf32, #tpu.memory_space<smem>>
    %247 = vector.broadcast %246 : f32 to vector<2x256xf32>
    %248 = arith.mulf %247, %245 : vector<2x256xf32>
    %249 = arith.addf %240, %248 : vector<2x256xf32>
    %c1_99 = arith.constant 1 : index
    %c13_100 = arith.constant 13 : index
    %250 = memref.load %arg3[%c1_99, %c13_100] : memref<2x36xf32, #tpu.memory_space<smem>>
    %251 = vector.broadcast %250 : f32 to vector<2x256xf32>
    %252 = arith.mulf %251, %245 : vector<2x256xf32>
    %253 = arith.addf %244, %252 : vector<2x256xf32>
    %254 = vector.extract_strided_slice %208 {offsets = [0, 129], sizes = [2, 256], strides = [1, 1]} : vector<2x512xf32> to vector<2x256xf32>
    %c0_101 = arith.constant 0 : index
    %c14 = arith.constant 14 : index
    %255 = memref.load %arg3[%c0_101, %c14] : memref<2x36xf32, #tpu.memory_space<smem>>
    %256 = vector.broadcast %255 : f32 to vector<2x256xf32>
    %257 = arith.mulf %256, %254 : vector<2x256xf32>
    %258 = arith.addf %249, %257 : vector<2x256xf32>
    %c1_102 = arith.constant 1 : index
    %c14_103 = arith.constant 14 : index
    %259 = memref.load %arg3[%c1_102, %c14_103] : memref<2x36xf32, #tpu.memory_space<smem>>
    %260 = vector.broadcast %259 : f32 to vector<2x256xf32>
    %261 = arith.mulf %260, %254 : vector<2x256xf32>
    %262 = arith.addf %253, %261 : vector<2x256xf32>
    %263 = vector.extract_strided_slice %206 {offsets = [0, 143], sizes = [2, 256], strides = [1, 1]} : vector<2x512xf32> to vector<2x256xf32>
    %c0_104 = arith.constant 0 : index
    %c15 = arith.constant 15 : index
    %264 = memref.load %arg3[%c0_104, %c15] : memref<2x36xf32, #tpu.memory_space<smem>>
    %265 = vector.broadcast %264 : f32 to vector<2x256xf32>
    %266 = arith.mulf %265, %263 : vector<2x256xf32>
    %267 = arith.addf %258, %266 : vector<2x256xf32>
    %c1_105 = arith.constant 1 : index
    %c15_106 = arith.constant 15 : index
    %268 = memref.load %arg3[%c1_105, %c15_106] : memref<2x36xf32, #tpu.memory_space<smem>>
    %269 = vector.broadcast %268 : f32 to vector<2x256xf32>
    %270 = arith.mulf %269, %263 : vector<2x256xf32>
    %271 = arith.addf %262, %270 : vector<2x256xf32>
    %272 = vector.extract_strided_slice %204 {offsets = [0, 144], sizes = [2, 256], strides = [1, 1]} : vector<2x512xf32> to vector<2x256xf32>
    %c0_107 = arith.constant 0 : index
    %c16 = arith.constant 16 : index
    %273 = memref.load %arg3[%c0_107, %c16] : memref<2x36xf32, #tpu.memory_space<smem>>
    %274 = vector.broadcast %273 : f32 to vector<2x256xf32>
    %275 = arith.mulf %274, %272 : vector<2x256xf32>
    %276 = arith.addf %267, %275 : vector<2x256xf32>
    %c1_108 = arith.constant 1 : index
    %c16_109 = arith.constant 16 : index
    %277 = memref.load %arg3[%c1_108, %c16_109] : memref<2x36xf32, #tpu.memory_space<smem>>
    %278 = vector.broadcast %277 : f32 to vector<2x256xf32>
    %279 = arith.mulf %278, %272 : vector<2x256xf32>
    %280 = arith.addf %271, %279 : vector<2x256xf32>
    %281 = vector.extract_strided_slice %208 {offsets = [0, 145], sizes = [2, 256], strides = [1, 1]} : vector<2x512xf32> to vector<2x256xf32>
    %c0_110 = arith.constant 0 : index
    %c17 = arith.constant 17 : index
    %282 = memref.load %arg3[%c0_110, %c17] : memref<2x36xf32, #tpu.memory_space<smem>>
    %283 = vector.broadcast %282 : f32 to vector<2x256xf32>
    %284 = arith.mulf %283, %281 : vector<2x256xf32>
    %285 = arith.addf %276, %284 : vector<2x256xf32>
    %c1_111 = arith.constant 1 : index
    %c17_112 = arith.constant 17 : index
    %286 = memref.load %arg3[%c1_111, %c17_112] : memref<2x36xf32, #tpu.memory_space<smem>>
    %287 = vector.broadcast %286 : f32 to vector<2x256xf32>
    %288 = arith.mulf %287, %281 : vector<2x256xf32>
    %289 = arith.addf %280, %288 : vector<2x256xf32>
    %290 = tpu.concatenate %23, %110, %23 in 1 : vector<2x128xf32>, vector<2x256xf32>, vector<2x128xf32> -> vector<2x512xf32>
    %cst_113 = arith.constant 0.000000e+00 : f32
    %291 = vector.broadcast %cst_113 : f32 to vector<2x512xf32>
    %292 = arith.select %20, %290, %291 : vector<2x512xi1>, vector<2x512xf32>
    %cst_114 = arith.constant 0.000000e+00 : f32
    %293 = vector.broadcast %cst_114 : f32 to vector<2x512xf32>
    %294 = arith.select %22, %290, %293 : vector<2x512xi1>, vector<2x512xf32>
    %295 = vector.extract_strided_slice %292 {offsets = [0, 111], sizes = [2, 256], strides = [1, 1]} : vector<2x512xf32> to vector<2x256xf32>
    %c0_115 = arith.constant 0 : index
    %c18 = arith.constant 18 : index
    %296 = memref.load %arg3[%c0_115, %c18] : memref<2x36xf32, #tpu.memory_space<smem>>
    %297 = vector.broadcast %296 : f32 to vector<2x256xf32>
    %298 = arith.mulf %297, %295 : vector<2x256xf32>
    %299 = arith.addf %285, %298 : vector<2x256xf32>
    %c1_116 = arith.constant 1 : index
    %c18_117 = arith.constant 18 : index
    %300 = memref.load %arg3[%c1_116, %c18_117] : memref<2x36xf32, #tpu.memory_space<smem>>
    %301 = vector.broadcast %300 : f32 to vector<2x256xf32>
    %302 = arith.mulf %301, %295 : vector<2x256xf32>
    %303 = arith.addf %289, %302 : vector<2x256xf32>
    %304 = vector.extract_strided_slice %290 {offsets = [0, 112], sizes = [2, 256], strides = [1, 1]} : vector<2x512xf32> to vector<2x256xf32>
    %c0_118 = arith.constant 0 : index
    %c19 = arith.constant 19 : index
    %305 = memref.load %arg3[%c0_118, %c19] : memref<2x36xf32, #tpu.memory_space<smem>>
    %306 = vector.broadcast %305 : f32 to vector<2x256xf32>
    %307 = arith.mulf %306, %304 : vector<2x256xf32>
    %308 = arith.addf %299, %307 : vector<2x256xf32>
    %c1_119 = arith.constant 1 : index
    %c19_120 = arith.constant 19 : index
    %309 = memref.load %arg3[%c1_119, %c19_120] : memref<2x36xf32, #tpu.memory_space<smem>>
    %310 = vector.broadcast %309 : f32 to vector<2x256xf32>
    %311 = arith.mulf %310, %304 : vector<2x256xf32>
    %312 = arith.addf %303, %311 : vector<2x256xf32>
    %313 = vector.extract_strided_slice %294 {offsets = [0, 113], sizes = [2, 256], strides = [1, 1]} : vector<2x512xf32> to vector<2x256xf32>
    %c0_121 = arith.constant 0 : index
    %c20 = arith.constant 20 : index
    %314 = memref.load %arg3[%c0_121, %c20] : memref<2x36xf32, #tpu.memory_space<smem>>
    %315 = vector.broadcast %314 : f32 to vector<2x256xf32>
    %316 = arith.mulf %315, %313 : vector<2x256xf32>
    %317 = arith.addf %308, %316 : vector<2x256xf32>
    %c1_122 = arith.constant 1 : index
    %c20_123 = arith.constant 20 : index
    %318 = memref.load %arg3[%c1_122, %c20_123] : memref<2x36xf32, #tpu.memory_space<smem>>
    %319 = vector.broadcast %318 : f32 to vector<2x256xf32>
    %320 = arith.mulf %319, %313 : vector<2x256xf32>
    %321 = arith.addf %312, %320 : vector<2x256xf32>
    %322 = vector.extract_strided_slice %292 {offsets = [0, 127], sizes = [2, 256], strides = [1, 1]} : vector<2x512xf32> to vector<2x256xf32>
    %c0_124 = arith.constant 0 : index
    %c21 = arith.constant 21 : index
    %323 = memref.load %arg3[%c0_124, %c21] : memref<2x36xf32, #tpu.memory_space<smem>>
    %324 = vector.broadcast %323 : f32 to vector<2x256xf32>
    %325 = arith.mulf %324, %322 : vector<2x256xf32>
    %326 = arith.addf %317, %325 : vector<2x256xf32>
    %c1_125 = arith.constant 1 : index
    %c21_126 = arith.constant 21 : index
    %327 = memref.load %arg3[%c1_125, %c21_126] : memref<2x36xf32, #tpu.memory_space<smem>>
    %328 = vector.broadcast %327 : f32 to vector<2x256xf32>
    %329 = arith.mulf %328, %322 : vector<2x256xf32>
    %330 = arith.addf %321, %329 : vector<2x256xf32>
    %331 = vector.extract_strided_slice %290 {offsets = [0, 128], sizes = [2, 256], strides = [1, 1]} : vector<2x512xf32> to vector<2x256xf32>
    %c0_127 = arith.constant 0 : index
    %c22 = arith.constant 22 : index
    %332 = memref.load %arg3[%c0_127, %c22] : memref<2x36xf32, #tpu.memory_space<smem>>
    %333 = vector.broadcast %332 : f32 to vector<2x256xf32>
    %334 = arith.mulf %333, %331 : vector<2x256xf32>
    %335 = arith.addf %326, %334 : vector<2x256xf32>
    %c1_128 = arith.constant 1 : index
    %c22_129 = arith.constant 22 : index
    %336 = memref.load %arg3[%c1_128, %c22_129] : memref<2x36xf32, #tpu.memory_space<smem>>
    %337 = vector.broadcast %336 : f32 to vector<2x256xf32>
    %338 = arith.mulf %337, %331 : vector<2x256xf32>
    %339 = arith.addf %330, %338 : vector<2x256xf32>
    %340 = vector.extract_strided_slice %294 {offsets = [0, 129], sizes = [2, 256], strides = [1, 1]} : vector<2x512xf32> to vector<2x256xf32>
    %c0_130 = arith.constant 0 : index
    %c23 = arith.constant 23 : index
    %341 = memref.load %arg3[%c0_130, %c23] : memref<2x36xf32, #tpu.memory_space<smem>>
    %342 = vector.broadcast %341 : f32 to vector<2x256xf32>
    %343 = arith.mulf %342, %340 : vector<2x256xf32>
    %344 = arith.addf %335, %343 : vector<2x256xf32>
    %c1_131 = arith.constant 1 : index
    %c23_132 = arith.constant 23 : index
    %345 = memref.load %arg3[%c1_131, %c23_132] : memref<2x36xf32, #tpu.memory_space<smem>>
    %346 = vector.broadcast %345 : f32 to vector<2x256xf32>
    %347 = arith.mulf %346, %340 : vector<2x256xf32>
    %348 = arith.addf %339, %347 : vector<2x256xf32>
    %349 = vector.extract_strided_slice %292 {offsets = [0, 143], sizes = [2, 256], strides = [1, 1]} : vector<2x512xf32> to vector<2x256xf32>
    %c0_133 = arith.constant 0 : index
    %c24 = arith.constant 24 : index
    %350 = memref.load %arg3[%c0_133, %c24] : memref<2x36xf32, #tpu.memory_space<smem>>
    %351 = vector.broadcast %350 : f32 to vector<2x256xf32>
    %352 = arith.mulf %351, %349 : vector<2x256xf32>
    %353 = arith.addf %344, %352 : vector<2x256xf32>
    %c1_134 = arith.constant 1 : index
    %c24_135 = arith.constant 24 : index
    %354 = memref.load %arg3[%c1_134, %c24_135] : memref<2x36xf32, #tpu.memory_space<smem>>
    %355 = vector.broadcast %354 : f32 to vector<2x256xf32>
    %356 = arith.mulf %355, %349 : vector<2x256xf32>
    %357 = arith.addf %348, %356 : vector<2x256xf32>
    %358 = vector.extract_strided_slice %290 {offsets = [0, 144], sizes = [2, 256], strides = [1, 1]} : vector<2x512xf32> to vector<2x256xf32>
    %c0_136 = arith.constant 0 : index
    %c25 = arith.constant 25 : index
    %359 = memref.load %arg3[%c0_136, %c25] : memref<2x36xf32, #tpu.memory_space<smem>>
    %360 = vector.broadcast %359 : f32 to vector<2x256xf32>
    %361 = arith.mulf %360, %358 : vector<2x256xf32>
    %362 = arith.addf %353, %361 : vector<2x256xf32>
    %c1_137 = arith.constant 1 : index
    %c25_138 = arith.constant 25 : index
    %363 = memref.load %arg3[%c1_137, %c25_138] : memref<2x36xf32, #tpu.memory_space<smem>>
    %364 = vector.broadcast %363 : f32 to vector<2x256xf32>
    %365 = arith.mulf %364, %358 : vector<2x256xf32>
    %366 = arith.addf %357, %365 : vector<2x256xf32>
    %367 = vector.extract_strided_slice %294 {offsets = [0, 145], sizes = [2, 256], strides = [1, 1]} : vector<2x512xf32> to vector<2x256xf32>
    %c0_139 = arith.constant 0 : index
    %c26 = arith.constant 26 : index
    %368 = memref.load %arg3[%c0_139, %c26] : memref<2x36xf32, #tpu.memory_space<smem>>
    %369 = vector.broadcast %368 : f32 to vector<2x256xf32>
    %370 = arith.mulf %369, %367 : vector<2x256xf32>
    %371 = arith.addf %362, %370 : vector<2x256xf32>
    %c1_140 = arith.constant 1 : index
    %c26_141 = arith.constant 26 : index
    %372 = memref.load %arg3[%c1_140, %c26_141] : memref<2x36xf32, #tpu.memory_space<smem>>
    %373 = vector.broadcast %372 : f32 to vector<2x256xf32>
    %374 = arith.mulf %373, %367 : vector<2x256xf32>
    %375 = arith.addf %366, %374 : vector<2x256xf32>
    %376 = tpu.concatenate %23, %115, %23 in 1 : vector<2x128xf32>, vector<2x256xf32>, vector<2x128xf32> -> vector<2x512xf32>
    %cst_142 = arith.constant 0.000000e+00 : f32
    %377 = vector.broadcast %cst_142 : f32 to vector<2x512xf32>
    %378 = arith.select %20, %376, %377 : vector<2x512xi1>, vector<2x512xf32>
    %cst_143 = arith.constant 0.000000e+00 : f32
    %379 = vector.broadcast %cst_143 : f32 to vector<2x512xf32>
    %380 = arith.select %22, %376, %379 : vector<2x512xi1>, vector<2x512xf32>
    %381 = vector.extract_strided_slice %378 {offsets = [0, 111], sizes = [2, 256], strides = [1, 1]} : vector<2x512xf32> to vector<2x256xf32>
    %c0_144 = arith.constant 0 : index
    %c27 = arith.constant 27 : index
    %382 = memref.load %arg3[%c0_144, %c27] : memref<2x36xf32, #tpu.memory_space<smem>>
    %383 = vector.broadcast %382 : f32 to vector<2x256xf32>
    %384 = arith.mulf %383, %381 : vector<2x256xf32>
    %385 = arith.addf %371, %384 : vector<2x256xf32>
    %c1_145 = arith.constant 1 : index
    %c27_146 = arith.constant 27 : index
    %386 = memref.load %arg3[%c1_145, %c27_146] : memref<2x36xf32, #tpu.memory_space<smem>>
    %387 = vector.broadcast %386 : f32 to vector<2x256xf32>
    %388 = arith.mulf %387, %381 : vector<2x256xf32>
    %389 = arith.addf %375, %388 : vector<2x256xf32>
    %390 = vector.extract_strided_slice %376 {offsets = [0, 112], sizes = [2, 256], strides = [1, 1]} : vector<2x512xf32> to vector<2x256xf32>
    %c0_147 = arith.constant 0 : index
    %c28 = arith.constant 28 : index
    %391 = memref.load %arg3[%c0_147, %c28] : memref<2x36xf32, #tpu.memory_space<smem>>
    %392 = vector.broadcast %391 : f32 to vector<2x256xf32>
    %393 = arith.mulf %392, %390 : vector<2x256xf32>
    %394 = arith.addf %385, %393 : vector<2x256xf32>
    %c1_148 = arith.constant 1 : index
    %c28_149 = arith.constant 28 : index
    %395 = memref.load %arg3[%c1_148, %c28_149] : memref<2x36xf32, #tpu.memory_space<smem>>
    %396 = vector.broadcast %395 : f32 to vector<2x256xf32>
    %397 = arith.mulf %396, %390 : vector<2x256xf32>
    %398 = arith.addf %389, %397 : vector<2x256xf32>
    %399 = vector.extract_strided_slice %380 {offsets = [0, 113], sizes = [2, 256], strides = [1, 1]} : vector<2x512xf32> to vector<2x256xf32>
    %c0_150 = arith.constant 0 : index
    %c29 = arith.constant 29 : index
    %400 = memref.load %arg3[%c0_150, %c29] : memref<2x36xf32, #tpu.memory_space<smem>>
    %401 = vector.broadcast %400 : f32 to vector<2x256xf32>
    %402 = arith.mulf %401, %399 : vector<2x256xf32>
    %403 = arith.addf %394, %402 : vector<2x256xf32>
    %c1_151 = arith.constant 1 : index
    %c29_152 = arith.constant 29 : index
    %404 = memref.load %arg3[%c1_151, %c29_152] : memref<2x36xf32, #tpu.memory_space<smem>>
    %405 = vector.broadcast %404 : f32 to vector<2x256xf32>
    %406 = arith.mulf %405, %399 : vector<2x256xf32>
    %407 = arith.addf %398, %406 : vector<2x256xf32>
    %408 = vector.extract_strided_slice %378 {offsets = [0, 127], sizes = [2, 256], strides = [1, 1]} : vector<2x512xf32> to vector<2x256xf32>
    %c0_153 = arith.constant 0 : index
    %c30 = arith.constant 30 : index
    %409 = memref.load %arg3[%c0_153, %c30] : memref<2x36xf32, #tpu.memory_space<smem>>
    %410 = vector.broadcast %409 : f32 to vector<2x256xf32>
    %411 = arith.mulf %410, %408 : vector<2x256xf32>
    %412 = arith.addf %403, %411 : vector<2x256xf32>
    %c1_154 = arith.constant 1 : index
    %c30_155 = arith.constant 30 : index
    %413 = memref.load %arg3[%c1_154, %c30_155] : memref<2x36xf32, #tpu.memory_space<smem>>
    %414 = vector.broadcast %413 : f32 to vector<2x256xf32>
    %415 = arith.mulf %414, %408 : vector<2x256xf32>
    %416 = arith.addf %407, %415 : vector<2x256xf32>
    %417 = vector.extract_strided_slice %376 {offsets = [0, 128], sizes = [2, 256], strides = [1, 1]} : vector<2x512xf32> to vector<2x256xf32>
    %c0_156 = arith.constant 0 : index
    %c31 = arith.constant 31 : index
    %418 = memref.load %arg3[%c0_156, %c31] : memref<2x36xf32, #tpu.memory_space<smem>>
    %419 = vector.broadcast %418 : f32 to vector<2x256xf32>
    %420 = arith.mulf %419, %417 : vector<2x256xf32>
    %421 = arith.addf %412, %420 : vector<2x256xf32>
    %c1_157 = arith.constant 1 : index
    %c31_158 = arith.constant 31 : index
    %422 = memref.load %arg3[%c1_157, %c31_158] : memref<2x36xf32, #tpu.memory_space<smem>>
    %423 = vector.broadcast %422 : f32 to vector<2x256xf32>
    %424 = arith.mulf %423, %417 : vector<2x256xf32>
    %425 = arith.addf %416, %424 : vector<2x256xf32>
    %426 = vector.extract_strided_slice %380 {offsets = [0, 129], sizes = [2, 256], strides = [1, 1]} : vector<2x512xf32> to vector<2x256xf32>
    %c0_159 = arith.constant 0 : index
    %c32 = arith.constant 32 : index
    %427 = memref.load %arg3[%c0_159, %c32] : memref<2x36xf32, #tpu.memory_space<smem>>
    %428 = vector.broadcast %427 : f32 to vector<2x256xf32>
    %429 = arith.mulf %428, %426 : vector<2x256xf32>
    %430 = arith.addf %421, %429 : vector<2x256xf32>
    %c1_160 = arith.constant 1 : index
    %c32_161 = arith.constant 32 : index
    %431 = memref.load %arg3[%c1_160, %c32_161] : memref<2x36xf32, #tpu.memory_space<smem>>
    %432 = vector.broadcast %431 : f32 to vector<2x256xf32>
    %433 = arith.mulf %432, %426 : vector<2x256xf32>
    %434 = arith.addf %425, %433 : vector<2x256xf32>
    %435 = vector.extract_strided_slice %378 {offsets = [0, 143], sizes = [2, 256], strides = [1, 1]} : vector<2x512xf32> to vector<2x256xf32>
    %c0_162 = arith.constant 0 : index
    %c33 = arith.constant 33 : index
    %436 = memref.load %arg3[%c0_162, %c33] : memref<2x36xf32, #tpu.memory_space<smem>>
    %437 = vector.broadcast %436 : f32 to vector<2x256xf32>
    %438 = arith.mulf %437, %435 : vector<2x256xf32>
    %439 = arith.addf %430, %438 : vector<2x256xf32>
    %c1_163 = arith.constant 1 : index
    %c33_164 = arith.constant 33 : index
    %440 = memref.load %arg3[%c1_163, %c33_164] : memref<2x36xf32, #tpu.memory_space<smem>>
    %441 = vector.broadcast %440 : f32 to vector<2x256xf32>
    %442 = arith.mulf %441, %435 : vector<2x256xf32>
    %443 = arith.addf %434, %442 : vector<2x256xf32>
    %444 = vector.extract_strided_slice %376 {offsets = [0, 144], sizes = [2, 256], strides = [1, 1]} : vector<2x512xf32> to vector<2x256xf32>
    %c0_165 = arith.constant 0 : index
    %c34 = arith.constant 34 : index
    %445 = memref.load %arg3[%c0_165, %c34] : memref<2x36xf32, #tpu.memory_space<smem>>
    %446 = vector.broadcast %445 : f32 to vector<2x256xf32>
    %447 = arith.mulf %446, %444 : vector<2x256xf32>
    %448 = arith.addf %439, %447 : vector<2x256xf32>
    %c1_166 = arith.constant 1 : index
    %c34_167 = arith.constant 34 : index
    %449 = memref.load %arg3[%c1_166, %c34_167] : memref<2x36xf32, #tpu.memory_space<smem>>
    %450 = vector.broadcast %449 : f32 to vector<2x256xf32>
    %451 = arith.mulf %450, %444 : vector<2x256xf32>
    %452 = arith.addf %443, %451 : vector<2x256xf32>
    %453 = vector.extract_strided_slice %380 {offsets = [0, 145], sizes = [2, 256], strides = [1, 1]} : vector<2x512xf32> to vector<2x256xf32>
    %c0_168 = arith.constant 0 : index
    %c35 = arith.constant 35 : index
    %454 = memref.load %arg3[%c0_168, %c35] : memref<2x36xf32, #tpu.memory_space<smem>>
    %455 = vector.broadcast %454 : f32 to vector<2x256xf32>
    %456 = arith.mulf %455, %453 : vector<2x256xf32>
    %457 = arith.addf %448, %456 : vector<2x256xf32>
    %c1_169 = arith.constant 1 : index
    %c35_170 = arith.constant 35 : index
    %458 = memref.load %arg3[%c1_169, %c35_170] : memref<2x36xf32, #tpu.memory_space<smem>>
    %459 = vector.broadcast %458 : f32 to vector<2x256xf32>
    %460 = arith.mulf %459, %453 : vector<2x256xf32>
    %461 = arith.addf %452, %460 : vector<2x256xf32>
    %c0_171 = arith.constant 0 : index
    %462 = memref.load %arg4[%c0_171] : memref<2xf32, #tpu.memory_space<smem>>
    %463 = vector.broadcast %462 : f32 to vector<2x256xf32>
    %464 = arith.addf %457, %463 : vector<2x256xf32>
    %cst_172 = arith.constant 0.000000e+00 : f32
    %465 = vector.broadcast %cst_172 : f32 to vector<2x256xf32>
    %466 = arith.maximumf %464, %465 : vector<2x256xf32>
    %c1_173 = arith.constant 1 : index
    %467 = memref.load %arg4[%c1_173] : memref<2xf32, #tpu.memory_space<smem>>
    %468 = vector.broadcast %467 : f32 to vector<2x256xf32>
    %469 = arith.addf %461, %468 : vector<2x256xf32>
    %cst_174 = arith.constant 0.000000e+00 : f32
    %470 = vector.broadcast %cst_174 : f32 to vector<2x256xf32>
    %471 = arith.maximumf %469, %470 : vector<2x256xf32>
    %cst_175 = arith.constant 0.000000e+00 : f32
    %472 = vector.broadcast %cst_175 : f32 to vector<2x256xf32>
    %cst_176 = arith.constant 0.000000e+00 : f32
    %473 = vector.broadcast %cst_176 : f32 to vector<2x256xf32>
    %474 = tpu.concatenate %23, %466, %23 in 1 : vector<2x128xf32>, vector<2x256xf32>, vector<2x128xf32> -> vector<2x512xf32>
    %cst_177 = arith.constant 0.000000e+00 : f32
    %475 = vector.broadcast %cst_177 : f32 to vector<2x512xf32>
    %476 = arith.select %20, %474, %475 : vector<2x512xi1>, vector<2x512xf32>
    %cst_178 = arith.constant 0.000000e+00 : f32
    %477 = vector.broadcast %cst_178 : f32 to vector<2x512xf32>
    %478 = arith.select %22, %474, %477 : vector<2x512xi1>, vector<2x512xf32>
    %479 = vector.extract_strided_slice %476 {offsets = [0, 111], sizes = [2, 256], strides = [1, 1]} : vector<2x512xf32> to vector<2x256xf32>
    %c0_179 = arith.constant 0 : index
    %c0_180 = arith.constant 0 : index
    %480 = memref.load %arg5[%c0_179, %c0_180] : memref<2x18xf32, #tpu.memory_space<smem>>
    %481 = vector.broadcast %480 : f32 to vector<2x256xf32>
    %482 = arith.mulf %481, %479 : vector<2x256xf32>
    %483 = arith.addf %472, %482 : vector<2x256xf32>
    %c1_181 = arith.constant 1 : index
    %c0_182 = arith.constant 0 : index
    %484 = memref.load %arg5[%c1_181, %c0_182] : memref<2x18xf32, #tpu.memory_space<smem>>
    %485 = vector.broadcast %484 : f32 to vector<2x256xf32>
    %486 = arith.mulf %485, %479 : vector<2x256xf32>
    %487 = arith.addf %473, %486 : vector<2x256xf32>
    %488 = vector.extract_strided_slice %474 {offsets = [0, 112], sizes = [2, 256], strides = [1, 1]} : vector<2x512xf32> to vector<2x256xf32>
    %c0_183 = arith.constant 0 : index
    %c1_184 = arith.constant 1 : index
    %489 = memref.load %arg5[%c0_183, %c1_184] : memref<2x18xf32, #tpu.memory_space<smem>>
    %490 = vector.broadcast %489 : f32 to vector<2x256xf32>
    %491 = arith.mulf %490, %488 : vector<2x256xf32>
    %492 = arith.addf %483, %491 : vector<2x256xf32>
    %c1_185 = arith.constant 1 : index
    %c1_186 = arith.constant 1 : index
    %493 = memref.load %arg5[%c1_185, %c1_186] : memref<2x18xf32, #tpu.memory_space<smem>>
    %494 = vector.broadcast %493 : f32 to vector<2x256xf32>
    %495 = arith.mulf %494, %488 : vector<2x256xf32>
    %496 = arith.addf %487, %495 : vector<2x256xf32>
    %497 = vector.extract_strided_slice %478 {offsets = [0, 113], sizes = [2, 256], strides = [1, 1]} : vector<2x512xf32> to vector<2x256xf32>
    %c0_187 = arith.constant 0 : index
    %c2_188 = arith.constant 2 : index
    %498 = memref.load %arg5[%c0_187, %c2_188] : memref<2x18xf32, #tpu.memory_space<smem>>
    %499 = vector.broadcast %498 : f32 to vector<2x256xf32>
    %500 = arith.mulf %499, %497 : vector<2x256xf32>
    %501 = arith.addf %492, %500 : vector<2x256xf32>
    %c1_189 = arith.constant 1 : index
    %c2_190 = arith.constant 2 : index
    %502 = memref.load %arg5[%c1_189, %c2_190] : memref<2x18xf32, #tpu.memory_space<smem>>
    %503 = vector.broadcast %502 : f32 to vector<2x256xf32>
    %504 = arith.mulf %503, %497 : vector<2x256xf32>
    %505 = arith.addf %496, %504 : vector<2x256xf32>
    %506 = vector.extract_strided_slice %476 {offsets = [0, 127], sizes = [2, 256], strides = [1, 1]} : vector<2x512xf32> to vector<2x256xf32>
    %c0_191 = arith.constant 0 : index
    %c3_192 = arith.constant 3 : index
    %507 = memref.load %arg5[%c0_191, %c3_192] : memref<2x18xf32, #tpu.memory_space<smem>>
    %508 = vector.broadcast %507 : f32 to vector<2x256xf32>
    %509 = arith.mulf %508, %506 : vector<2x256xf32>
    %510 = arith.addf %501, %509 : vector<2x256xf32>
    %c1_193 = arith.constant 1 : index
    %c3_194 = arith.constant 3 : index
    %511 = memref.load %arg5[%c1_193, %c3_194] : memref<2x18xf32, #tpu.memory_space<smem>>
    %512 = vector.broadcast %511 : f32 to vector<2x256xf32>
    %513 = arith.mulf %512, %506 : vector<2x256xf32>
    %514 = arith.addf %505, %513 : vector<2x256xf32>
    %515 = vector.extract_strided_slice %474 {offsets = [0, 128], sizes = [2, 256], strides = [1, 1]} : vector<2x512xf32> to vector<2x256xf32>
    %c0_195 = arith.constant 0 : index
    %c4_196 = arith.constant 4 : index
    %516 = memref.load %arg5[%c0_195, %c4_196] : memref<2x18xf32, #tpu.memory_space<smem>>
    %517 = vector.broadcast %516 : f32 to vector<2x256xf32>
    %518 = arith.mulf %517, %515 : vector<2x256xf32>
    %519 = arith.addf %510, %518 : vector<2x256xf32>
    %c1_197 = arith.constant 1 : index
    %c4_198 = arith.constant 4 : index
    %520 = memref.load %arg5[%c1_197, %c4_198] : memref<2x18xf32, #tpu.memory_space<smem>>
    %521 = vector.broadcast %520 : f32 to vector<2x256xf32>
    %522 = arith.mulf %521, %515 : vector<2x256xf32>
    %523 = arith.addf %514, %522 : vector<2x256xf32>
    %524 = vector.extract_strided_slice %478 {offsets = [0, 129], sizes = [2, 256], strides = [1, 1]} : vector<2x512xf32> to vector<2x256xf32>
    %c0_199 = arith.constant 0 : index
    %c5_200 = arith.constant 5 : index
    %525 = memref.load %arg5[%c0_199, %c5_200] : memref<2x18xf32, #tpu.memory_space<smem>>
    %526 = vector.broadcast %525 : f32 to vector<2x256xf32>
    %527 = arith.mulf %526, %524 : vector<2x256xf32>
    %528 = arith.addf %519, %527 : vector<2x256xf32>
    %c1_201 = arith.constant 1 : index
    %c5_202 = arith.constant 5 : index
    %529 = memref.load %arg5[%c1_201, %c5_202] : memref<2x18xf32, #tpu.memory_space<smem>>
    %530 = vector.broadcast %529 : f32 to vector<2x256xf32>
    %531 = arith.mulf %530, %524 : vector<2x256xf32>
    %532 = arith.addf %523, %531 : vector<2x256xf32>
    %533 = vector.extract_strided_slice %476 {offsets = [0, 143], sizes = [2, 256], strides = [1, 1]} : vector<2x512xf32> to vector<2x256xf32>
    %c0_203 = arith.constant 0 : index
    %c6_204 = arith.constant 6 : index
    %534 = memref.load %arg5[%c0_203, %c6_204] : memref<2x18xf32, #tpu.memory_space<smem>>
    %535 = vector.broadcast %534 : f32 to vector<2x256xf32>
    %536 = arith.mulf %535, %533 : vector<2x256xf32>
    %537 = arith.addf %528, %536 : vector<2x256xf32>
    %c1_205 = arith.constant 1 : index
    %c6_206 = arith.constant 6 : index
    %538 = memref.load %arg5[%c1_205, %c6_206] : memref<2x18xf32, #tpu.memory_space<smem>>
    %539 = vector.broadcast %538 : f32 to vector<2x256xf32>
    %540 = arith.mulf %539, %533 : vector<2x256xf32>
    %541 = arith.addf %532, %540 : vector<2x256xf32>
    %542 = vector.extract_strided_slice %474 {offsets = [0, 144], sizes = [2, 256], strides = [1, 1]} : vector<2x512xf32> to vector<2x256xf32>
    %c0_207 = arith.constant 0 : index
    %c7_208 = arith.constant 7 : index
    %543 = memref.load %arg5[%c0_207, %c7_208] : memref<2x18xf32, #tpu.memory_space<smem>>
    %544 = vector.broadcast %543 : f32 to vector<2x256xf32>
    %545 = arith.mulf %544, %542 : vector<2x256xf32>
    %546 = arith.addf %537, %545 : vector<2x256xf32>
    %c1_209 = arith.constant 1 : index
    %c7_210 = arith.constant 7 : index
    %547 = memref.load %arg5[%c1_209, %c7_210] : memref<2x18xf32, #tpu.memory_space<smem>>
    %548 = vector.broadcast %547 : f32 to vector<2x256xf32>
    %549 = arith.mulf %548, %542 : vector<2x256xf32>
    %550 = arith.addf %541, %549 : vector<2x256xf32>
    %551 = vector.extract_strided_slice %478 {offsets = [0, 145], sizes = [2, 256], strides = [1, 1]} : vector<2x512xf32> to vector<2x256xf32>
    %c0_211 = arith.constant 0 : index
    %c8_212 = arith.constant 8 : index
    %552 = memref.load %arg5[%c0_211, %c8_212] : memref<2x18xf32, #tpu.memory_space<smem>>
    %553 = vector.broadcast %552 : f32 to vector<2x256xf32>
    %554 = arith.mulf %553, %551 : vector<2x256xf32>
    %555 = arith.addf %546, %554 : vector<2x256xf32>
    %c1_213 = arith.constant 1 : index
    %c8_214 = arith.constant 8 : index
    %556 = memref.load %arg5[%c1_213, %c8_214] : memref<2x18xf32, #tpu.memory_space<smem>>
    %557 = vector.broadcast %556 : f32 to vector<2x256xf32>
    %558 = arith.mulf %557, %551 : vector<2x256xf32>
    %559 = arith.addf %550, %558 : vector<2x256xf32>
    %560 = tpu.concatenate %23, %471, %23 in 1 : vector<2x128xf32>, vector<2x256xf32>, vector<2x128xf32> -> vector<2x512xf32>
    %cst_215 = arith.constant 0.000000e+00 : f32
    %561 = vector.broadcast %cst_215 : f32 to vector<2x512xf32>
    %562 = arith.select %20, %560, %561 : vector<2x512xi1>, vector<2x512xf32>
    %cst_216 = arith.constant 0.000000e+00 : f32
    %563 = vector.broadcast %cst_216 : f32 to vector<2x512xf32>
    %564 = arith.select %22, %560, %563 : vector<2x512xi1>, vector<2x512xf32>
    %565 = vector.extract_strided_slice %562 {offsets = [0, 111], sizes = [2, 256], strides = [1, 1]} : vector<2x512xf32> to vector<2x256xf32>
    %c0_217 = arith.constant 0 : index
    %c9_218 = arith.constant 9 : index
    %566 = memref.load %arg5[%c0_217, %c9_218] : memref<2x18xf32, #tpu.memory_space<smem>>
    %567 = vector.broadcast %566 : f32 to vector<2x256xf32>
    %568 = arith.mulf %567, %565 : vector<2x256xf32>
    %569 = arith.addf %555, %568 : vector<2x256xf32>
    %c1_219 = arith.constant 1 : index
    %c9_220 = arith.constant 9 : index
    %570 = memref.load %arg5[%c1_219, %c9_220] : memref<2x18xf32, #tpu.memory_space<smem>>
    %571 = vector.broadcast %570 : f32 to vector<2x256xf32>
    %572 = arith.mulf %571, %565 : vector<2x256xf32>
    %573 = arith.addf %559, %572 : vector<2x256xf32>
    %574 = vector.extract_strided_slice %560 {offsets = [0, 112], sizes = [2, 256], strides = [1, 1]} : vector<2x512xf32> to vector<2x256xf32>
    %c0_221 = arith.constant 0 : index
    %c10_222 = arith.constant 10 : index
    %575 = memref.load %arg5[%c0_221, %c10_222] : memref<2x18xf32, #tpu.memory_space<smem>>
    %576 = vector.broadcast %575 : f32 to vector<2x256xf32>
    %577 = arith.mulf %576, %574 : vector<2x256xf32>
    %578 = arith.addf %569, %577 : vector<2x256xf32>
    %c1_223 = arith.constant 1 : index
    %c10_224 = arith.constant 10 : index
    %579 = memref.load %arg5[%c1_223, %c10_224] : memref<2x18xf32, #tpu.memory_space<smem>>
    %580 = vector.broadcast %579 : f32 to vector<2x256xf32>
    %581 = arith.mulf %580, %574 : vector<2x256xf32>
    %582 = arith.addf %573, %581 : vector<2x256xf32>
    %583 = vector.extract_strided_slice %564 {offsets = [0, 113], sizes = [2, 256], strides = [1, 1]} : vector<2x512xf32> to vector<2x256xf32>
    %c0_225 = arith.constant 0 : index
    %c11_226 = arith.constant 11 : index
    %584 = memref.load %arg5[%c0_225, %c11_226] : memref<2x18xf32, #tpu.memory_space<smem>>
    %585 = vector.broadcast %584 : f32 to vector<2x256xf32>
    %586 = arith.mulf %585, %583 : vector<2x256xf32>
    %587 = arith.addf %578, %586 : vector<2x256xf32>
    %c1_227 = arith.constant 1 : index
    %c11_228 = arith.constant 11 : index
    %588 = memref.load %arg5[%c1_227, %c11_228] : memref<2x18xf32, #tpu.memory_space<smem>>
    %589 = vector.broadcast %588 : f32 to vector<2x256xf32>
    %590 = arith.mulf %589, %583 : vector<2x256xf32>
    %591 = arith.addf %582, %590 : vector<2x256xf32>
    %592 = vector.extract_strided_slice %562 {offsets = [0, 127], sizes = [2, 256], strides = [1, 1]} : vector<2x512xf32> to vector<2x256xf32>
    %c0_229 = arith.constant 0 : index
    %c12_230 = arith.constant 12 : index
    %593 = memref.load %arg5[%c0_229, %c12_230] : memref<2x18xf32, #tpu.memory_space<smem>>
    %594 = vector.broadcast %593 : f32 to vector<2x256xf32>
    %595 = arith.mulf %594, %592 : vector<2x256xf32>
    %596 = arith.addf %587, %595 : vector<2x256xf32>
    %c1_231 = arith.constant 1 : index
    %c12_232 = arith.constant 12 : index
    %597 = memref.load %arg5[%c1_231, %c12_232] : memref<2x18xf32, #tpu.memory_space<smem>>
    %598 = vector.broadcast %597 : f32 to vector<2x256xf32>
    %599 = arith.mulf %598, %592 : vector<2x256xf32>
    %600 = arith.addf %591, %599 : vector<2x256xf32>
    %601 = vector.extract_strided_slice %560 {offsets = [0, 128], sizes = [2, 256], strides = [1, 1]} : vector<2x512xf32> to vector<2x256xf32>
    %c0_233 = arith.constant 0 : index
    %c13_234 = arith.constant 13 : index
    %602 = memref.load %arg5[%c0_233, %c13_234] : memref<2x18xf32, #tpu.memory_space<smem>>
    %603 = vector.broadcast %602 : f32 to vector<2x256xf32>
    %604 = arith.mulf %603, %601 : vector<2x256xf32>
    %605 = arith.addf %596, %604 : vector<2x256xf32>
    %c1_235 = arith.constant 1 : index
    %c13_236 = arith.constant 13 : index
    %606 = memref.load %arg5[%c1_235, %c13_236] : memref<2x18xf32, #tpu.memory_space<smem>>
    %607 = vector.broadcast %606 : f32 to vector<2x256xf32>
    %608 = arith.mulf %607, %601 : vector<2x256xf32>
    %609 = arith.addf %600, %608 : vector<2x256xf32>
    %610 = vector.extract_strided_slice %564 {offsets = [0, 129], sizes = [2, 256], strides = [1, 1]} : vector<2x512xf32> to vector<2x256xf32>
    %c0_237 = arith.constant 0 : index
    %c14_238 = arith.constant 14 : index
    %611 = memref.load %arg5[%c0_237, %c14_238] : memref<2x18xf32, #tpu.memory_space<smem>>
    %612 = vector.broadcast %611 : f32 to vector<2x256xf32>
    %613 = arith.mulf %612, %610 : vector<2x256xf32>
    %614 = arith.addf %605, %613 : vector<2x256xf32>
    %c1_239 = arith.constant 1 : index
    %c14_240 = arith.constant 14 : index
    %615 = memref.load %arg5[%c1_239, %c14_240] : memref<2x18xf32, #tpu.memory_space<smem>>
    %616 = vector.broadcast %615 : f32 to vector<2x256xf32>
    %617 = arith.mulf %616, %610 : vector<2x256xf32>
    %618 = arith.addf %609, %617 : vector<2x256xf32>
    %619 = vector.extract_strided_slice %562 {offsets = [0, 143], sizes = [2, 256], strides = [1, 1]} : vector<2x512xf32> to vector<2x256xf32>
    %c0_241 = arith.constant 0 : index
    %c15_242 = arith.constant 15 : index
    %620 = memref.load %arg5[%c0_241, %c15_242] : memref<2x18xf32, #tpu.memory_space<smem>>
    %621 = vector.broadcast %620 : f32 to vector<2x256xf32>
    %622 = arith.mulf %621, %619 : vector<2x256xf32>
    %623 = arith.addf %614, %622 : vector<2x256xf32>
    %c1_243 = arith.constant 1 : index
    %c15_244 = arith.constant 15 : index
    %624 = memref.load %arg5[%c1_243, %c15_244] : memref<2x18xf32, #tpu.memory_space<smem>>
    %625 = vector.broadcast %624 : f32 to vector<2x256xf32>
    %626 = arith.mulf %625, %619 : vector<2x256xf32>
    %627 = arith.addf %618, %626 : vector<2x256xf32>
    %628 = vector.extract_strided_slice %560 {offsets = [0, 144], sizes = [2, 256], strides = [1, 1]} : vector<2x512xf32> to vector<2x256xf32>
    %c0_245 = arith.constant 0 : index
    %c16_246 = arith.constant 16 : index
    %629 = memref.load %arg5[%c0_245, %c16_246] : memref<2x18xf32, #tpu.memory_space<smem>>
    %630 = vector.broadcast %629 : f32 to vector<2x256xf32>
    %631 = arith.mulf %630, %628 : vector<2x256xf32>
    %632 = arith.addf %623, %631 : vector<2x256xf32>
    %c1_247 = arith.constant 1 : index
    %c16_248 = arith.constant 16 : index
    %633 = memref.load %arg5[%c1_247, %c16_248] : memref<2x18xf32, #tpu.memory_space<smem>>
    %634 = vector.broadcast %633 : f32 to vector<2x256xf32>
    %635 = arith.mulf %634, %628 : vector<2x256xf32>
    %636 = arith.addf %627, %635 : vector<2x256xf32>
    %637 = vector.extract_strided_slice %564 {offsets = [0, 145], sizes = [2, 256], strides = [1, 1]} : vector<2x512xf32> to vector<2x256xf32>
    %c0_249 = arith.constant 0 : index
    %c17_250 = arith.constant 17 : index
    %638 = memref.load %arg5[%c0_249, %c17_250] : memref<2x18xf32, #tpu.memory_space<smem>>
    %639 = vector.broadcast %638 : f32 to vector<2x256xf32>
    %640 = arith.mulf %639, %637 : vector<2x256xf32>
    %641 = arith.addf %632, %640 : vector<2x256xf32>
    %c1_251 = arith.constant 1 : index
    %c17_252 = arith.constant 17 : index
    %642 = memref.load %arg5[%c1_251, %c17_252] : memref<2x18xf32, #tpu.memory_space<smem>>
    %643 = vector.broadcast %642 : f32 to vector<2x256xf32>
    %644 = arith.mulf %643, %637 : vector<2x256xf32>
    %645 = arith.addf %636, %644 : vector<2x256xf32>
    %c0_253 = arith.constant 0 : index
    %646 = memref.load %arg6[%c0_253] : memref<2xf32, #tpu.memory_space<smem>>
    %647 = vector.broadcast %646 : f32 to vector<2x256xf32>
    %648 = arith.addf %641, %647 : vector<2x256xf32>
    %cst_254 = arith.constant 0.000000e+00 : f32
    %649 = vector.broadcast %cst_254 : f32 to vector<2x256xf32>
    %650 = arith.maximumf %648, %649 : vector<2x256xf32>
    %c1_255 = arith.constant 1 : index
    %651 = memref.load %arg6[%c1_255] : memref<2xf32, #tpu.memory_space<smem>>
    %652 = vector.broadcast %651 : f32 to vector<2x256xf32>
    %653 = arith.addf %645, %652 : vector<2x256xf32>
    %cst_256 = arith.constant 0.000000e+00 : f32
    %654 = vector.broadcast %cst_256 : f32 to vector<2x256xf32>
    %655 = arith.maximumf %653, %654 : vector<2x256xf32>
    %c0_257 = arith.constant 0 : index
    %c0_258 = arith.constant 0 : index
    %656 = vector.load %arg7[%c0_257, %c0_258] : memref<2x2048xf32, #tpu.memory_space<vmem>>, vector<2x256xf32>
    tpu.vector_store %arg7[%c0_257, %c0_258], %100 {strides = array<i32>} : memref<2x2048xf32, #tpu.memory_space<vmem>>, vector<2x256xf32>,
    %c0_259 = arith.constant 0 : index
    %c256_260 = arith.constant 256 : index
    %657 = vector.load %arg7[%c0_259, %c256_260] : memref<2x2048xf32, #tpu.memory_space<vmem>>, vector<2x256xf32>
    tpu.vector_store %arg7[%c0_259, %c256_260], %105 {strides = array<i32>} : memref<2x2048xf32, #tpu.memory_space<vmem>>, vector<2x256xf32>,
    %c0_261 = arith.constant 0 : index
    %c512_262 = arith.constant 512 : index
    %658 = vector.load %arg7[%c0_261, %c512_262] : memref<2x2048xf32, #tpu.memory_space<vmem>>, vector<2x256xf32>
    tpu.vector_store %arg7[%c0_261, %c512_262], %110 {strides = array<i32>} : memref<2x2048xf32, #tpu.memory_space<vmem>>, vector<2x256xf32>,
    %c0_263 = arith.constant 0 : index
    %c768_264 = arith.constant 768 : index
    %659 = vector.load %arg7[%c0_263, %c768_264] : memref<2x2048xf32, #tpu.memory_space<vmem>>, vector<2x256xf32>
    tpu.vector_store %arg7[%c0_263, %c768_264], %115 {strides = array<i32>} : memref<2x2048xf32, #tpu.memory_space<vmem>>, vector<2x256xf32>,
    %c0_265 = arith.constant 0 : index
    %c1024 = arith.constant 1024 : index
    %660 = vector.load %arg7[%c0_265, %c1024] : memref<2x2048xf32, #tpu.memory_space<vmem>>, vector<2x256xf32>
    tpu.vector_store %arg7[%c0_265, %c1024], %466 {strides = array<i32>} : memref<2x2048xf32, #tpu.memory_space<vmem>>, vector<2x256xf32>,
    %c0_266 = arith.constant 0 : index
    %c1280 = arith.constant 1280 : index
    %661 = vector.load %arg7[%c0_266, %c1280] : memref<2x2048xf32, #tpu.memory_space<vmem>>, vector<2x256xf32>
    tpu.vector_store %arg7[%c0_266, %c1280], %471 {strides = array<i32>} : memref<2x2048xf32, #tpu.memory_space<vmem>>, vector<2x256xf32>,
    %c0_267 = arith.constant 0 : index
    %c1536 = arith.constant 1536 : index
    %662 = vector.load %arg7[%c0_267, %c1536] : memref<2x2048xf32, #tpu.memory_space<vmem>>, vector<2x256xf32>
    tpu.vector_store %arg7[%c0_267, %c1536], %650 {strides = array<i32>} : memref<2x2048xf32, #tpu.memory_space<vmem>>, vector<2x256xf32>,
    %c0_268 = arith.constant 0 : index
    %c1792 = arith.constant 1792 : index
    %663 = vector.load %arg7[%c0_268, %c1792] : memref<2x2048xf32, #tpu.memory_space<vmem>>, vector<2x256xf32>
    tpu.vector_store %arg7[%c0_268, %c1792], %655 {strides = array<i32>} : memref<2x2048xf32, #tpu.memory_space<vmem>>, vector<2x256xf32>,
    return
  }
}

</mosaic_0001>

<llo_original>
// kernel: cat_bottleneck_forward.1
$region0: #{cat_bottleneck_forward.1}
  #allocation0 [shape = 'u32[]', space=smem, size = 0x4, offset = 0x4, fixed_abs, tag = 'smem constant byte address 0x4 - core index']
  #allocation1 [shape = 'u32[72,128]{1,0:T(1,128)}', space=vmem, size = 0x9000, scoped, tag = 'internal scratch']
  %s0 = inlined_call_operand.vmem [shape: f32[2,1024], index: 0, kind: input, shape index: {}]
  %s1 = inlined_call_operand.vmem [shape: f32[4,4], index: 1, kind: input, shape index: {}]
  %s2 = inlined_call_operand.vmem [shape: f32[4], index: 2, kind: input, shape index: {}]
  %s3 = inlined_call_operand.vmem [shape: f32[2,36], index: 3, kind: input, shape index: {}]
  %s4 = inlined_call_operand.vmem [shape: f32[2], index: 4, kind: input, shape index: {}]
  %s5 = inlined_call_operand.vmem [shape: f32[2,18], index: 5, kind: input, shape index: {}]
  %s6 = inlined_call_operand.vmem [shape: f32[2], index: 6, kind: input, shape index: {}]
  %s7 = inlined_call_operand.vmem [shape: f32[2,2048], index: 7, kind: output, shape index: {}]
  %s8 = sld [smem:[#allocation0]]
  $region62: #{cat_bottleneck_forward.1} parent=0
    _
  %s10 = ssub.s32 1, %s8
  %s11 = scalar_select 0, %s10, %s8
  $region1: #{cat_bottleneck_forward.1} parent=0
    #allocation2 [shape = 'u8[2048]{0}', space=smem, size = 0x800, scoped, tag = 'input window, operand 1, single buffered']
    #allocation3 [shape = 's32[1]{0}', space=sflag, size = 0x4, scoped, tag = 'scoped memory for cat_bottleneck_forward.1']
    #allocation4 [shape = 'u8[512]{0}', space=smem, size = 0x200, scoped, tag = 'input window, operand 2, single buffered']
    #allocation5 [shape = 's32[1]{0}', space=sflag, size = 0x4, scoped, tag = 'scoped memory for cat_bottleneck_forward.1']
    #allocation6 [shape = 'u8[1024]{0}', space=smem, size = 0x400, scoped, tag = 'input window, operand 3, single buffered']
    #allocation7 [shape = 'u8[512]{0}', space=smem, size = 0x200, scoped, tag = 'input window, operand 4, single buffered']
    #allocation8 [shape = 's32[1]{0}', space=sflag, size = 0x4, scoped, tag = 'scoped memory for cat_bottleneck_forward.1']
    #allocation9 [shape = 'u8[1024]{0}', space=smem, size = 0x400, scoped, tag = 'input window, operand 5, single buffered']
    #allocation10 [shape = 'u8[512]{0}', space=smem, size = 0x200, scoped, tag = 'input window, operand 6, single buffered']
    #allocation11 [shape = 's32[1]{0}', space=sflag, size = 0x4, scoped, tag = 'scoped memory for cat_bottleneck_forward.1']
    %12 = vsyncpa [#allocation3], 0
    %13 = vsyncpa [#allocation5], 0
    %14 = vsyncpa [#allocation8], 0
    %15 = vsyncpa [#allocation11], 0
    // Predicated region
    $region2: #{cat_bottleneck_forward.1} parent=1 // pred_check
      _
    $region3: #{cat_bottleneck_forward.1} parent=1 // pred_check_branch
      %17 = sbr.rel (0) target = $region5
    $region4: #{cat_bottleneck_forward.1} parent=1 // pred_region
      _
    $region5: #{cat_bottleneck_forward.1} parent=1 // pred_fallthru
      _
    // Predicated region
    $region6: #{cat_bottleneck_forward.1} parent=1 // pred_check
      _
    $region7: #{cat_bottleneck_forward.1} parent=1 // pred_check_branch
      %19 = sbr.rel (0) target = $region9
    $region8: #{cat_bottleneck_forward.1} parent=1 // pred_region
      %21 = vsyncadd [#allocation3], 0
      %s23 = sshll.u32 %s1, 4
      %s24 = int_to_ptr.vmem [resolvable:$true] %s23
      %26 = dma.vmem_to_smem %s24, 64, [#allocation2], [#allocation3]
    $region9: #{cat_bottleneck_forward.1} parent=1 // pred_fallthru
      _
    // Predicated region
    $region10: #{cat_bottleneck_forward.1} parent=1 // pred_check
      _
    $region11: #{cat_bottleneck_forward.1} parent=1 // pred_check_branch
      %28 = sbr.rel (0) target = $region13
    $region12: #{cat_bottleneck_forward.1} parent=1 // pred_region
      %30 = vsyncadd [#allocation5], 0
      %s32 = sshll.u32 %s2, 4
      %s33 = int_to_ptr.vmem [resolvable:$true] %s32
      %35 = dma.vmem_to_smem %s33, 16, [#allocation4], [#allocation5]
    $region13: #{cat_bottleneck_forward.1} parent=1 // pred_fallthru
      _
    // Predicated region
    $region14: #{cat_bottleneck_forward.1} parent=1 // pred_check
      _
    $region15: #{cat_bottleneck_forward.1} parent=1 // pred_check_branch
      %37 = sbr.rel (0) target = $region17
    $region16: #{cat_bottleneck_forward.1} parent=1 // pred_region
      %39 = vsyncadd [#allocation5], 0
      %s41 = sshll.u32 %s3, 4
      %s42 = int_to_ptr.vmem [resolvable:$true] %s41
      %44 = dma.vmem_to_smem %s42, 32, [#allocation6], [#allocation5]
    $region17: #{cat_bottleneck_forward.1} parent=1 // pred_fallthru
      _
    // Predicated region
    $region18: #{cat_bottleneck_forward.1} parent=1 // pred_check
      _
    $region19: #{cat_bottleneck_forward.1} parent=1 // pred_check_branch
      %46 = sbr.rel (0) target = $region21
    $region20: #{cat_bottleneck_forward.1} parent=1 // pred_region
      %48 = vsyncadd [#allocation8], 0
      %s50 = sshll.u32 %s4, 4
      %s51 = int_to_ptr.vmem [resolvable:$true] %s50
      %53 = dma.vmem_to_smem %s51, 16, [#allocation7], [#allocation8]
    $region21: #{cat_bottleneck_forward.1} parent=1 // pred_fallthru
      _
    // Predicated region
    $region22: #{cat_bottleneck_forward.1} parent=1 // pred_check
      _
    $region23: #{cat_bottleneck_forward.1} parent=1 // pred_check_branch
      %55 = sbr.rel (0) target = $region25
    $region24: #{cat_bottleneck_forward.1} parent=1 // pred_region
      %57 = vsyncadd [#allocation8], 0
      %s59 = sshll.u32 %s5, 4
      %s60 = int_to_ptr.vmem [resolvable:$true] %s59
      %62 = dma.vmem_to_smem %s60, 32, [#allocation9], [#allocation8]
    $region25: #{cat_bottleneck_forward.1} parent=1 // pred_fallthru
      _
    // Predicated region
    $region26: #{cat_bottleneck_forward.1} parent=1 // pred_check
      _
    $region27: #{cat_bottleneck_forward.1} parent=1 // pred_check_branch
      %64 = sbr.rel (0) target = $region29
    $region28: #{cat_bottleneck_forward.1} parent=1 // pred_region
      %66 = vsyncadd [#allocation11], 0
      %s68 = sshll.u32 %s6, 4
      %s69 = int_to_ptr.vmem [resolvable:$true] %s68
      %71 = dma.vmem_to_smem %s69, 16, [#allocation10], [#allocation11]
    $region29: #{cat_bottleneck_forward.1} parent=1 // pred_fallthru
      _
    // Predicated region
    $region30: #{cat_bottleneck_forward.1} parent=1 // pred_check
      _
    $region31: #{cat_bottleneck_forward.1} parent=1 // pred_check_branch
      %73 = sbr.rel (0) target = $region33
    $region32: #{cat_bottleneck_forward.1} parent=1 // pred_region
      %75 = dma.done [#allocation3], 64
    $region33: #{cat_bottleneck_forward.1} parent=1 // pred_fallthru
      _
    // Predicated region
    $region34: #{cat_bottleneck_forward.1} parent=1 // pred_check
      _
    $region35: #{cat_bottleneck_forward.1} parent=1 // pred_check_branch
      %77 = sbr.rel (0) target = $region37
    $region36: #{cat_bottleneck_forward.1} parent=1 // pred_region
      %79 = dma.done [#allocation5], 16
    $region37: #{cat_bottleneck_forward.1} parent=1 // pred_fallthru
      _
    // Predicated region
    $region38: #{cat_bottleneck_forward.1} parent=1 // pred_check
      _
    $region39: #{cat_bottleneck_forward.1} parent=1 // pred_check_branch
      %81 = sbr.rel (0) target = $region41
    $region40: #{cat_bottleneck_forward.1} parent=1 // pred_region
      %83 = dma.done [#allocation5], 32
    $region41: #{cat_bottleneck_forward.1} parent=1 // pred_fallthru
      _
    // Predicated region
    $region42: #{cat_bottleneck_forward.1} parent=1 // pred_check
      _
    $region43: #{cat_bottleneck_forward.1} parent=1 // pred_check_branch
      %85 = sbr.rel (0) target = $region45
    $region44: #{cat_bottleneck_forward.1} parent=1 // pred_region
      %87 = dma.done [#allocation8], 16
    $region45: #{cat_bottleneck_forward.1} parent=1 // pred_fallthru
      _
    // Predicated region
    $region46: #{cat_bottleneck_forward.1} parent=1 // pred_check
      _
    $region47: #{cat_bottleneck_forward.1} parent=1 // pred_check_branch
      %89 = sbr.rel (0) target = $region49
    $region48: #{cat_bottleneck_forward.1} parent=1 // pred_region
      %91 = dma.done [#allocation8], 32
    $region49: #{cat_bottleneck_forward.1} parent=1 // pred_fallthru
      _
    // Predicated region
    $region50: #{cat_bottleneck_forward.1} parent=1 // pred_check
      _
    $region51: #{cat_bottleneck_forward.1} parent=1 // pred_check_branch
      %93 = sbr.rel (0) target = $region53
    $region52: #{cat_bottleneck_forward.1} parent=1 // pred_region
      %95 = dma.done [#allocation11], 16
    $region53: #{cat_bottleneck_forward.1} parent=1 // pred_fallthru
      _
    %96 = sfence
    %v97 = vlaneseq
    %v98 = vand.u32 %v97, 127
    %v99 = vadd.s32 %v98, 256
    %v100 = vsub.s32 %v99, 128
    %vm101 = vcmp.lt.s32.totalorder %v98, 0
    %v102 = vsub.s32 0, %v98
    %v103 = vsel %vm101, %v102, %v98
    %v104 = vshrl.u32 %v103, 4
    %v105 = vand.u32 %v103, 15
    %v106 = vsub.s32 0, %v105
    %v107 = vsel %vm101, %v106, %v105
    %vm108 = vcmp.lt.s32.totalorder %v100, 0
    %v109 = vsub.s32 0, %v100
    %v110 = vsel %vm108, %v109, %v100
    %v111 = vshrl.u32 %v110, 4
    %v112 = vand.u32 %v110, 15
    %v113 = vsub.s32 0, %v112
    %v114 = vsel %vm108, %v113, %v112
    %vm115 = vcmp.ne.s32.totalorder %v107, 0
    %vm116 = vcmp.ne.s32.totalorder %v114, 0
    %vm117 = vcmp.lt.s32.totalorder %v107, 0
    %vm118 = vcmp.lt.s32.totalorder %v114, 0
    %vm119 = vmand %vm117, %vm115
    %vm120 = vmand %vm118, %vm116
    %v121 = vadd.s32 %v107, 16
    %v122 = vadd.s32 %v114, 16
    %v123 = vsel %vm119, %v121, %v107
    %v124 = vsel %vm120, %v122, %v114
    %vm125 = vcmp.ne.s32.totalorder %v123, 15
    %vm126 = vcmp.ne.s32.totalorder %v124, 15
    %vm127 = vcmp.ne.s32.totalorder %v123, 0
    %vm128 = vcmp.ne.s32.totalorder %v124, 0
    %v129 = vld [vmem:[%s0] sm:$0xf]
    %s130 = sld [smem:[#allocation2]]
    %v131 = vstv %s130
    %v132 = vmul.f32 %v131, %v129
    %v133 = vadd.f32 %v132, 0.0
    %s134 = sld [smem:[#allocation2 + $0x80]]
    %v135 = vstv %s134
    %v136 = vmul.f32 %v135, %v129
    %v137 = vadd.f32 %v136, 0.0
    %s138 = sld [smem:[#allocation2 + $0x100]]
    %v139 = vstv %s138
    %v140 = vmul.f32 %v139, %v129
    %v141 = vadd.f32 %v140, 0.0
    %s142 = sld [smem:[#allocation2 + $0x180]]
    %v143 = vstv %s142
    %v144 = vmul.f32 %v143, %v129
    %v145 = vadd.f32 %v144, 0.0
    %v146 = vld [vmem:[%s0 + $0x4] sm:$0xf]
    %s147 = sld [smem:[#allocation2 + $0x1]]
    %v148 = vstv %s147
    %v149 = vmul.f32 %v148, %v146
    %v150 = vadd.f32 %v133, %v149
    %s151 = sld [smem:[#allocation2 + $0x81]]
    %v152 = vstv %s151
    %v153 = vmul.f32 %v152, %v146
    %v154 = vadd.f32 %v137, %v153
    %s155 = sld [smem:[#allocation2 + $0x101]]
    %v156 = vstv %s155
    %v157 = vmul.f32 %v156, %v146
    %v158 = vadd.f32 %v141, %v157
    %s159 = sld [smem:[#allocation2 + $0x181]]
    %v160 = vstv %s159
    %v161 = vmul.f32 %v160, %v146
    %v162 = vadd.f32 %v145, %v161
    %v163 = vld [vmem:[%s0 + $0x8] sm:$0xf]
    %s164 = sld [smem:[#allocation2 + $0x2]]
    %v165 = vstv %s164
    %v166 = vmul.f32 %v165, %v163
    %v167 = vadd.f32 %v150, %v166
    %s168 = sld [smem:[#allocation2 + $0x82]]
    %v169 = vstv %s168
    %v170 = vmul.f32 %v169, %v163
    %v171 = vadd.f32 %v154, %v170
    %s172 = sld [smem:[#allocation2 + $0x102]]
    %v173 = vstv %s172
    %v174 = vmul.f32 %v173, %v163
    %v175 = vadd.f32 %v158, %v174
    %s176 = sld [smem:[#allocation2 + $0x182]]
    %v177 = vstv %s176
    %v178 = vmul.f32 %v177, %v163
    %v179 = vadd.f32 %v162, %v178
    %v180 = vld [vmem:[%s0 + $0xc] sm:$0xf]
    %s181 = sld [smem:[#allocation2 + $0x3]]
    %v182 = vstv %s181
    %v183 = vmul.f32 %v182, %v180
    %v184 = vadd.f32 %v167, %v183
    %s185 = sld [smem:[#allocation2 + $0x83]]
    %v186 = vstv %s185
    %v187 = vmul.f32 %v186, %v180
    %v188 = vadd.f32 %v171, %v187
    %s189 = sld [smem:[#allocation2 + $0x103]]
    %v190 = vstv %s189
    %v191 = vmul.f32 %v190, %v180
    %v192 = vadd.f32 %v175, %v191
    %s193 = sld [smem:[#allocation2 + $0x183]]
    %v194 = vstv %s193
    %v195 = vmul.f32 %v194, %v180
    %v196 = vadd.f32 %v179, %v195
    %s197 = sld [smem:[#allocation4]]
    %v198 = vstv %s197
    %v199 = vadd.f32 %v184, %v198
    %v200 = vmax.f32 %v199, 0.0
    %s201 = sld [smem:[#allocation4 + $0x1]]
    %v202 = vstv %s201
    %v203 = vadd.f32 %v188, %v202
    %v204 = vmax.f32 %v203, 0.0
    %s205 = sld [smem:[#allocation4 + $0x2]]
    %v206 = vstv %s205
    %v207 = vadd.f32 %v192, %v206
    %v208 = vmax.f32 %v207, 0.0
    %s209 = sld [smem:[#allocation4 + $0x3]]
    %v210 = vstv %s209
    %v211 = vadd.f32 %v196, %v210
    %v212 = vmax.f32 %v211, 0.0
    %214 = vst [vmem:[#allocation1] ss:$4 sm:$0xff] %v200
    %v215 = vld.sshfl [vmem:[#allocation1] sm:$0xff pattern:$0x73625140]
    %v216 = vld.sshfl [vmem:[#allocation1 + $0x8] sm:$0xff pattern:$0x73625140]
    %v219 = vsel %vm125, %v215, 0.0
    %v220 = vsel %vm126, %v216, 0.0
    %v221 = vsel %vm127, %v215, 0.0
    %v222 = vsel %vm128, %v216, 0.0
    %s223 = sld [smem:[#allocation6]]
    %v224 = vstv %s223
    %v225 = vmul.f32 %v224, 0.0
    %v226 = vmul.f32 %v224, %v219
    %v227 = vmul.f32 %v224, %v220
    %v228 = vadd.f32 %v225, 0.0
    %v229 = vadd.f32 %v226, 0.0
    %v230 = vadd.f32 %v227, 0.0
    %s231 = sld [smem:[#allocation6 + $0x80]]
    %v232 = vstv %s231
    %v233 = vmul.f32 %v232, 0.0
    %v234 = vmul.f32 %v232, %v219
    %v235 = vmul.f32 %v232, %v220
    %v236 = vadd.f32 %v233, 0.0
    %v237 = vadd.f32 %v234, 0.0
    %v238 = vadd.f32 %v235, 0.0
    %s239 = sld [smem:[#allocation6 + $0x1]]
    %v240 = vstv %s239
    %v241 = vmul.f32 %v240, 0.0
    %v242 = vmul.f32 %v240, %v215
    %v243 = vmul.f32 %v240, %v216
    %247 = vrot.lane.b32.xlu0 %v241, 127
    %v248 = vpop.permute.xlu0 %247
    %249 = vrot.lane.b32.xlu0 %v242, 127
    %v250 = vpop.permute.xlu0 %249
    %251 = vrot.lane.b32.xlu0 %v243, 127
    %v252 = vpop.permute.xlu0 %251
    %vm253 = vcmask 1039360
    %v254 = vsel %vm253, %v248, %v250
    %v255 = vsel %vm253, %v250, %v252
    %v259 = vadd.f32 %v228, %v254
    %v260 = vadd.f32 %v229, %v255
    %v261 = vadd.f32 %v230, %v252
    %s262 = sld [smem:[#allocation6 + $0x81]]
    %v263 = vstv %s262
    %v264 = vmul.f32 %v263, 0.0
    %v265 = vmul.f32 %v263, %v215
    %v266 = vmul.f32 %v263, %v216
    %270 = vrot.lane.b32.xlu0 %v264, 127
    %v271 = vpop.permute.xlu0 %270
    %272 = vrot.lane.b32.xlu0 %v265, 127
    %v273 = vpop.permute.xlu0 %272
    %274 = vrot.lane.b32.xlu0 %v266, 127
    %v275 = vpop.permute.xlu0 %274
    %v276 = vsel %vm253, %v271, %v273
    %v277 = vsel %vm253, %v273, %v275
    %v281 = vadd.f32 %v236, %v276
    %v282 = vadd.f32 %v237, %v277
    %v283 = vadd.f32 %v238, %v275
    %s284 = sld [smem:[#allocation6 + $0x2]]
    %v285 = vstv %s284
    %v286 = vmul.f32 %v285, 0.0
    %v287 = vmul.f32 %v285, %v221
    %v288 = vmul.f32 %v285, %v222
    %292 = vrot.lane.b32.xlu0 %v286, 126
    %v293 = vpop.permute.xlu0 %292
    %294 = vrot.lane.b32.xlu0 %v287, 126
    %v295 = vpop.permute.xlu0 %294
    %296 = vrot.lane.b32.xlu0 %v288, 126
    %v297 = vpop.permute.xlu0 %296
    %vm298 = vcmask 1031168
    %v299 = vsel %vm298, %v293, %v295
    %v300 = vsel %vm298, %v295, %v297
    %v304 = vadd.f32 %v259, %v299
    %v305 = vadd.f32 %v260, %v300
    %v306 = vadd.f32 %v261, %v297
    %s307 = sld [smem:[#allocation6 + $0x82]]
    %v308 = vstv %s307
    %v309 = vmul.f32 %v308, 0.0
    %v310 = vmul.f32 %v308, %v221
    %v311 = vmul.f32 %v308, %v222
    %315 = vrot.lane.b32.xlu0 %v309, 126
    %v316 = vpop.permute.xlu0 %315
    %317 = vrot.lane.b32.xlu0 %v310, 126
    %v318 = vpop.permute.xlu0 %317
    %319 = vrot.lane.b32.xlu0 %v311, 126
    %v320 = vpop.permute.xlu0 %319
    %v321 = vsel %vm298, %v316, %v318
    %v322 = vsel %vm298, %v318, %v320
    %v326 = vadd.f32 %v281, %v321
    %v327 = vadd.f32 %v282, %v322
    %v328 = vadd.f32 %v283, %v320
    %s329 = sld [smem:[#allocation6 + $0x3]]
    %v330 = vstv %s329
    %v331 = vmul.f32 %v330, 0.0
    %v332 = vmul.f32 %v330, %v219
    %v333 = vmul.f32 %v330, %v220
    %337 = vrot.lane.b32.xlu0 %v331, 112
    %v338 = vpop.permute.xlu0 %337
    %339 = vrot.lane.b32.xlu0 %v332, 112
    %v340 = vpop.permute.xlu0 %339
    %341 = vrot.lane.b32.xlu0 %v333, 112
    %v342 = vpop.permute.xlu0 %341
    %vm343 = vcmask 916480
    %v344 = vsel %vm343, %v338, %v340
    %v345 = vsel %vm343, %v340, %v342
    %v349 = vadd.f32 %v304, %v344
    %v350 = vadd.f32 %v305, %v345
    %v351 = vadd.f32 %v306, %v342
    %s352 = sld [smem:[#allocation6 + $0x83]]
    %v353 = vstv %s352
    %v354 = vmul.f32 %v353, 0.0
    %v355 = vmul.f32 %v353, %v219
    %v356 = vmul.f32 %v353, %v220
    %360 = vrot.lane.b32.xlu0 %v354, 112
    %v361 = vpop.permute.xlu0 %360
    %362 = vrot.lane.b32.xlu0 %v355, 112
    %v363 = vpop.permute.xlu0 %362
    %364 = vrot.lane.b32.xlu0 %v356, 112
    %v365 = vpop.permute.xlu0 %364
    %v366 = vsel %vm343, %v361, %v363
    %v367 = vsel %vm343, %v363, %v365
    %v371 = vadd.f32 %v326, %v366
    %v372 = vadd.f32 %v327, %v367
    %v373 = vadd.f32 %v328, %v365
    %s374 = sld [smem:[#allocation6 + $0x4]]
    %v375 = vstv %s374
    %v376 = vmul.f32 %v375, %v215
    %v377 = vmul.f32 %v375, %v216
    %380 = vrot.lane.b32.xlu0 %v376, 111
    %v381 = vpop.permute.xlu0 %380
    %382 = vrot.lane.b32.xlu0 %v377, 111
    %v383 = vpop.permute.xlu0 %382
    %vm384 = vcmask 908288
    %v385 = vsel %vm384, %v381, %v383
    %v389 = vadd.f32 %v349, %v381
    %v390 = vadd.f32 %v350, %v385
    %v391 = vadd.f32 %v351, %v383
    %s392 = sld [smem:[#allocation6 + $0x84]]
    %v393 = vstv %s392
    %v394 = vmul.f32 %v393, %v215
    %v395 = vmul.f32 %v393, %v216
    %398 = vrot.lane.b32.xlu0 %v394, 111
    %v399 = vpop.permute.xlu0 %398
    %400 = vrot.lane.b32.xlu0 %v395, 111
    %v401 = vpop.permute.xlu0 %400
    %v402 = vsel %vm384, %v399, %v401
    %v406 = vadd.f32 %v371, %v399
    %v407 = vadd.f32 %v372, %v402
    %v408 = vadd.f32 %v373, %v401
    %s409 = sld [smem:[#allocation6 + $0x5]]
    %v410 = vstv %s409
    %v411 = vmul.f32 %v410, %v221
    %v412 = vmul.f32 %v410, %v222
    %v413 = vmul.f32 %v410, 0.0
    %417 = vrot.lane.b32.xlu0 %v411, 110
    %v418 = vpop.permute.xlu0 %417
    %419 = vrot.lane.b32.xlu0 %v412, 110
    %v420 = vpop.permute.xlu0 %419
    %421 = vrot.lane.b32.xlu0 %v413, 110
    %v422 = vpop.permute.xlu0 %421
    %vm423 = vcmask 900096
    %v424 = vsel %vm423, %v418, %v420
    %v425 = vsel %vm423, %v420, %v422
    %v429 = vadd.f32 %v389, %v418
    %v430 = vadd.f32 %v390, %v424
    %v431 = vadd.f32 %v391, %v425
    %s432 = sld [smem:[#allocation6 + $0x85]]
    %v433 = vstv %s432
    %v434 = vmul.f32 %v433, %v221
    %v435 = vmul.f32 %v433, %v222
    %v436 = vmul.f32 %v433, 0.0
    %440 = vrot.lane.b32.xlu0 %v434, 110
    %v441 = vpop.permute.xlu0 %440
    %442 = vrot.lane.b32.xlu0 %v435, 110
    %v443 = vpop.permute.xlu0 %442
    %444 = vrot.lane.b32.xlu0 %v436, 110
    %v445 = vpop.permute.xlu0 %444
    %v446 = vsel %vm423, %v441, %v443
    %v447 = vsel %vm423, %v443, %v445
    %v451 = vadd.f32 %v406, %v441
    %v452 = vadd.f32 %v407, %v446
    %v453 = vadd.f32 %v408, %v447
    %s454 = sld [smem:[#allocation6 + $0x6]]
    %v455 = vstv %s454
    %v456 = vmul.f32 %v455, %v219
    %v457 = vmul.f32 %v455, %v220
    %v458 = vmul.f32 %v455, 0.0
    %462 = vrot.lane.b32.xlu0 %v456, 96
    %v463 = vpop.permute.xlu0 %462
    %464 = vrot.lane.b32.xlu0 %v457, 96
    %v465 = vpop.permute.xlu0 %464
    %466 = vrot.lane.b32.xlu0 %v458, 96
    %v467 = vpop.permute.xlu0 %466
    %vm468 = vcmask 785408
    %v469 = vsel %vm468, %v463, %v465
    %v470 = vsel %vm468, %v465, %v467
    %v474 = vadd.f32 %v429, %v463
    %v475 = vadd.f32 %v430, %v469
    %v476 = vadd.f32 %v431, %v470
    %s477 = sld [smem:[#allocation6 + $0x86]]
    %v478 = vstv %s477
    %v479 = vmul.f32 %v478, %v219
    %v480 = vmul.f32 %v478, %v220
    %v481 = vmul.f32 %v478, 0.0
    %485 = vrot.lane.b32.xlu0 %v479, 96
    %v486 = vpop.permute.xlu0 %485
    %487 = vrot.lane.b32.xlu0 %v480, 96
    %v488 = vpop.permute.xlu0 %487
    %489 = vrot.lane.b32.xlu0 %v481, 96
    %v490 = vpop.permute.xlu0 %489
    %v491 = vsel %vm468, %v486, %v488
    %v492 = vsel %vm468, %v488, %v490
    %v496 = vadd.f32 %v451, %v486
    %v497 = vadd.f32 %v452, %v491
    %v498 = vadd.f32 %v453, %v492
    %s499 = sld [smem:[#allocation6 + $0x7]]
    %v500 = vstv %s499
    %v501 = vmul.f32 %v500, %v215
    %v502 = vmul.f32 %v500, %v216
    %v503 = vmul.f32 %v500, 0.0
    %507 = vrot.lane.b32.xlu0 %v501, 95
    %v508 = vpop.permute.xlu0 %507
    %509 = vrot.lane.b32.xlu0 %v502, 95
    %v510 = vpop.permute.xlu0 %509
    %511 = vrot.lane.b32.xlu0 %v503, 95
    %v512 = vpop.permute.xlu0 %511
    %vm513 = vcmask 777216
    %v514 = vsel %vm513, %v508, %v510
    %v515 = vsel %vm513, %v510, %v512
    %v519 = vadd.f32 %v474, %v508
    %v520 = vadd.f32 %v475, %v514
    %v521 = vadd.f32 %v476, %v515
    %s522 = sld [smem:[#allocation6 + $0x87]]
    %v523 = vstv %s522
    %v524 = vmul.f32 %v523, %v215
    %v525 = vmul.f32 %v523, %v216
    %v526 = vmul.f32 %v523, 0.0
    %530 = vrot.lane.b32.xlu0 %v524, 95
    %v531 = vpop.permute.xlu0 %530
    %532 = vrot.lane.b32.xlu0 %v525, 95
    %v533 = vpop.permute.xlu0 %532
    %534 = vrot.lane.b32.xlu0 %v526, 95
    %v535 = vpop.permute.xlu0 %534
    %v536 = vsel %vm513, %v531, %v533
    %v537 = vsel %vm513, %v533, %v535
    %v541 = vadd.f32 %v496, %v531
    %v542 = vadd.f32 %v497, %v536
    %v543 = vadd.f32 %v498, %v537
    %s544 = sld [smem:[#allocation6 + $0x8]]
    %v545 = vstv %s544
    %v546 = vmul.f32 %v545, %v221
    %v547 = vmul.f32 %v545, %v222
    %v548 = vmul.f32 %v545, 0.0
    %552 = vrot.lane.b32.xlu0 %v546, 94
    %v553 = vpop.permute.xlu0 %552
    %554 = vrot.lane.b32.xlu0 %v547, 94
    %v555 = vpop.permute.xlu0 %554
    %556 = vrot.lane.b32.xlu0 %v548, 94
    %v557 = vpop.permute.xlu0 %556
    %vm558 = vcmask 769024
    %v559 = vsel %vm558, %v553, %v555
    %v560 = vsel %vm558, %v555, %v557
    %v564 = vadd.f32 %v519, %v553
    %v565 = vadd.f32 %v520, %v559
    %v566 = vadd.f32 %v521, %v560
    %s567 = sld [smem:[#allocation6 + $0x88]]
    %v568 = vstv %s567
    %v569 = vmul.f32 %v568, %v221
    %v570 = vmul.f32 %v568, %v222
    %v571 = vmul.f32 %v568, 0.0
    %575 = vrot.lane.b32.xlu0 %v569, 94
    %v576 = vpop.permute.xlu0 %575
    %577 = vrot.lane.b32.xlu0 %v570, 94
    %v578 = vpop.permute.xlu0 %577
    %579 = vrot.lane.b32.xlu0 %v571, 94
    %v580 = vpop.permute.xlu0 %579
    %v581 = vsel %vm558, %v576, %v578
    %v582 = vsel %vm558, %v578, %v580
    %v586 = vadd.f32 %v541, %v576
    %v587 = vadd.f32 %v542, %v581
    %v588 = vadd.f32 %v543, %v582
    %590 = vst [vmem:[#allocation1] ss:$4 sm:$0xff] %v204
    %v591 = vld.sshfl [vmem:[#allocation1] sm:$0xff pattern:$0x73625140]
    %v592 = vld.sshfl [vmem:[#allocation1 + $0x8] sm:$0xff pattern:$0x73625140]
    %v595 = vsel %vm125, %v591, 0.0
    %v596 = vsel %vm126, %v592, 0.0
    %v597 = vsel %vm127, %v591, 0.0
    %v598 = vsel %vm128, %v592, 0.0
    %s599 = sld [smem:[#allocation6 + $0x9]]
    %v600 = vstv %s599
    %v601 = vmul.f32 %v600, 0.0
    %v602 = vmul.f32 %v600, %v595
    %v603 = vmul.f32 %v600, %v596
    %v604 = vadd.f32 %v564, %v601
    %v605 = vadd.f32 %v565, %v602
    %v606 = vadd.f32 %v566, %v603
    %s607 = sld [smem:[#allocation6 + $0x89]]
    %v608 = vstv %s607
    %v609 = vmul.f32 %v608, 0.0
    %v610 = vmul.f32 %v608, %v595
    %v611 = vmul.f32 %v608, %v596
    %v612 = vadd.f32 %v586, %v609
    %v613 = vadd.f32 %v587, %v610
    %v614 = vadd.f32 %v588, %v611
    %s615 = sld [smem:[#allocation6 + $0xa]]
    %v616 = vstv %s615
    %v617 = vmul.f32 %v616, 0.0
    %v618 = vmul.f32 %v616, %v591
    %v619 = vmul.f32 %v616, %v592
    %623 = vrot.lane.b32.xlu0 %v617, 127
    %v624 = vpop.permute.xlu0 %623
    %625 = vrot.lane.b32.xlu0 %v618, 127
    %v626 = vpop.permute.xlu0 %625
    %627 = vrot.lane.b32.xlu0 %v619, 127
    %v628 = vpop.permute.xlu0 %627
    %v629 = vsel %vm253, %v624, %v626
    %v630 = vsel %vm253, %v626, %v628
    %v634 = vadd.f32 %v604, %v629
    %v635 = vadd.f32 %v605, %v630
    %v636 = vadd.f32 %v606, %v628
    %s637 = sld [smem:[#allocation6 + $0x8a]]
    %v638 = vstv %s637
    %v639 = vmul.f32 %v638, 0.0
    %v640 = vmul.f32 %v638, %v591
    %v641 = vmul.f32 %v638, %v592
    %645 = vrot.lane.b32.xlu0 %v639, 127
    %v646 = vpop.permute.xlu0 %645
    %647 = vrot.lane.b32.xlu0 %v640, 127
    %v648 = vpop.permute.xlu0 %647
    %649 = vrot.lane.b32.xlu0 %v641, 127
    %v650 = vpop.permute.xlu0 %649
    %v651 = vsel %vm253, %v646, %v648
    %v652 = vsel %vm253, %v648, %v650
    %v656 = vadd.f32 %v612, %v651
    %v657 = vadd.f32 %v613, %v652
    %v658 = vadd.f32 %v614, %v650
    %s659 = sld [smem:[#allocation6 + $0xb]]
    %v660 = vstv %s659
    %v661 = vmul.f32 %v660, 0.0
    %v662 = vmul.f32 %v660, %v597
    %v663 = vmul.f32 %v660, %v598
    %667 = vrot.lane.b32.xlu0 %v661, 126
    %v668 = vpop.permute.xlu0 %667
    %669 = vrot.lane.b32.xlu0 %v662, 126
    %v670 = vpop.permute.xlu0 %669
    %671 = vrot.lane.b32.xlu0 %v663, 126
    %v672 = vpop.permute.xlu0 %671
    %v673 = vsel %vm298, %v668, %v670
    %v674 = vsel %vm298, %v670, %v672
    %v678 = vadd.f32 %v634, %v673
    %v679 = vadd.f32 %v635, %v674
    %v680 = vadd.f32 %v636, %v672
    %s681 = sld [smem:[#allocation6 + $0x8b]]
    %v682 = vstv %s681
    %v683 = vmul.f32 %v682, 0.0
    %v684 = vmul.f32 %v682, %v597
    %v685 = vmul.f32 %v682, %v598
    %689 = vrot.lane.b32.xlu0 %v683, 126
    %v690 = vpop.permute.xlu0 %689
    %691 = vrot.lane.b32.xlu0 %v684, 126
    %v692 = vpop.permute.xlu0 %691
    %693 = vrot.lane.b32.xlu0 %v685, 126
    %v694 = vpop.permute.xlu0 %693
    %v695 = vsel %vm298, %v690, %v692
    %v696 = vsel %vm298, %v692, %v694
    %v700 = vadd.f32 %v656, %v695
    %v701 = vadd.f32 %v657, %v696
    %v702 = vadd.f32 %v658, %v694
    %s703 = sld [smem:[#allocation6 + $0xc]]
    %v704 = vstv %s703
    %v705 = vmul.f32 %v704, 0.0
    %v706 = vmul.f32 %v704, %v595
    %v707 = vmul.f32 %v704, %v596
    %711 = vrot.lane.b32.xlu0 %v705, 112
    %v712 = vpop.permute.xlu0 %711
    %713 = vrot.lane.b32.xlu0 %v706, 112
    %v714 = vpop.permute.xlu0 %713
    %715 = vrot.lane.b32.xlu0 %v707, 112
    %v716 = vpop.permute.xlu0 %715
    %v717 = vsel %vm343, %v712, %v714
    %v718 = vsel %vm343, %v714, %v716
    %v722 = vadd.f32 %v678, %v717
    %v723 = vadd.f32 %v679, %v718
    %v724 = vadd.f32 %v680, %v716
    %s725 = sld [smem:[#allocation6 + $0x8c]]
    %v726 = vstv %s725
    %v727 = vmul.f32 %v726, 0.0
    %v728 = vmul.f32 %v726, %v595
    %v729 = vmul.f32 %v726, %v596
    %733 = vrot.lane.b32.xlu0 %v727, 112
    %v734 = vpop.permute.xlu0 %733
    %735 = vrot.lane.b32.xlu0 %v728, 112
    %v736 = vpop.permute.xlu0 %735
    %737 = vrot.lane.b32.xlu0 %v729, 112
    %v738 = vpop.permute.xlu0 %737
    %v739 = vsel %vm343, %v734, %v736
    %v740 = vsel %vm343, %v736, %v738
    %v744 = vadd.f32 %v700, %v739
    %v745 = vadd.f32 %v701, %v740
    %v746 = vadd.f32 %v702, %v738
    %s747 = sld [smem:[#allocation6 + $0xd]]
    %v748 = vstv %s747
    %v749 = vmul.f32 %v748, %v591
    %v750 = vmul.f32 %v748, %v592
    %753 = vrot.lane.b32.xlu0 %v749, 111
    %v754 = vpop.permute.xlu0 %753
    %755 = vrot.lane.b32.xlu0 %v750, 111
    %v756 = vpop.permute.xlu0 %755
    %v757 = vsel %vm384, %v754, %v756
    %v761 = vadd.f32 %v722, %v754
    %v762 = vadd.f32 %v723, %v757
    %v763 = vadd.f32 %v724, %v756
    %s764 = sld [smem:[#allocation6 + $0x8d]]
    %v765 = vstv %s764
    %v766 = vmul.f32 %v765, %v591
    %v767 = vmul.f32 %v765, %v592
    %770 = vrot.lane.b32.xlu0 %v766, 111
    %v771 = vpop.permute.xlu0 %770
    %772 = vrot.lane.b32.xlu0 %v767, 111
    %v773 = vpop.permute.xlu0 %772
    %v774 = vsel %vm384, %v771, %v773
    %v778 = vadd.f32 %v744, %v771
    %v779 = vadd.f32 %v745, %v774
    %v780 = vadd.f32 %v746, %v773
    %s781 = sld [smem:[#allocation6 + $0xe]]
    %v782 = vstv %s781
    %v783 = vmul.f32 %v782, %v597
    %v784 = vmul.f32 %v782, %v598
    %v785 = vmul.f32 %v782, 0.0
    %789 = vrot.lane.b32.xlu0 %v783, 110
    %v790 = vpop.permute.xlu0 %789
    %791 = vrot.lane.b32.xlu0 %v784, 110
    %v792 = vpop.permute.xlu0 %791
    %793 = vrot.lane.b32.xlu0 %v785, 110
    %v794 = vpop.permute.xlu0 %793
    %v795 = vsel %vm423, %v790, %v792
    %v796 = vsel %vm423, %v792, %v794
    %v800 = vadd.f32 %v761, %v790
    %v801 = vadd.f32 %v762, %v795
    %v802 = vadd.f32 %v763, %v796
    %s803 = sld [smem:[#allocation6 + $0x8e]]
    %v804 = vstv %s803
    %v805 = vmul.f32 %v804, %v597
    %v806 = vmul.f32 %v804, %v598
    %v807 = vmul.f32 %v804, 0.0
    %811 = vrot.lane.b32.xlu0 %v805, 110
    %v812 = vpop.permute.xlu0 %811
    %813 = vrot.lane.b32.xlu0 %v806, 110
    %v814 = vpop.permute.xlu0 %813
    %815 = vrot.lane.b32.xlu0 %v807, 110
    %v816 = vpop.permute.xlu0 %815
    %v817 = vsel %vm423, %v812, %v814
    %v818 = vsel %vm423, %v814, %v816
    %v822 = vadd.f32 %v778, %v812
    %v823 = vadd.f32 %v779, %v817
    %v824 = vadd.f32 %v780, %v818
    %s825 = sld [smem:[#allocation6 + $0xf]]
    %v826 = vstv %s825
    %v827 = vmul.f32 %v826, %v595
    %v828 = vmul.f32 %v826, %v596
    %v829 = vmul.f32 %v826, 0.0
    %833 = vrot.lane.b32.xlu0 %v827, 96
    %v834 = vpop.permute.xlu0 %833
    %835 = vrot.lane.b32.xlu0 %v828, 96
    %v836 = vpop.permute.xlu0 %835
    %837 = vrot.lane.b32.xlu0 %v829, 96
    %v838 = vpop.permute.xlu0 %837
    %v839 = vsel %vm468, %v834, %v836
    %v840 = vsel %vm468, %v836, %v838
    %v844 = vadd.f32 %v800, %v834
    %v845 = vadd.f32 %v801, %v839
    %v846 = vadd.f32 %v802, %v840
    %s847 = sld [smem:[#allocation6 + $0x8f]]
    %v848 = vstv %s847
    %v849 = vmul.f32 %v848, %v595
    %v850 = vmul.f32 %v848, %v596
    %v851 = vmul.f32 %v848, 0.0
    %855 = vrot.lane.b32.xlu0 %v849, 96
    %v856 = vpop.permute.xlu0 %855
    %857 = vrot.lane.b32.xlu0 %v850, 96
    %v858 = vpop.permute.xlu0 %857
    %859 = vrot.lane.b32.xlu0 %v851, 96
    %v860 = vpop.permute.xlu0 %859
    %v861 = vsel %vm468, %v856, %v858
    %v862 = vsel %vm468, %v858, %v860
    %v866 = vadd.f32 %v822, %v856
    %v867 = vadd.f32 %v823, %v861
    %v868 = vadd.f32 %v824, %v862
    %s869 = sld [smem:[#allocation6 + $0x10]]
    %v870 = vstv %s869
    %v871 = vmul.f32 %v870, %v591
    %v872 = vmul.f32 %v870, %v592
    %v873 = vmul.f32 %v870, 0.0
    %877 = vrot.lane.b32.xlu0 %v871, 95
    %v878 = vpop.permute.xlu0 %877
    %879 = vrot.lane.b32.xlu0 %v872, 95
    %v880 = vpop.permute.xlu0 %879
    %881 = vrot.lane.b32.xlu0 %v873, 95
    %v882 = vpop.permute.xlu0 %881
    %v883 = vsel %vm513, %v878, %v880
    %v884 = vsel %vm513, %v880, %v882
    %v888 = vadd.f32 %v844, %v878
    %v889 = vadd.f32 %v845, %v883
    %v890 = vadd.f32 %v846, %v884
    %s891 = sld [smem:[#allocation6 + $0x90]]
    %v892 = vstv %s891
    %v893 = vmul.f32 %v892, %v591
    %v894 = vmul.f32 %v892, %v592
    %v895 = vmul.f32 %v892, 0.0
    %899 = vrot.lane.b32.xlu0 %v893, 95
    %v900 = vpop.permute.xlu0 %899
    %901 = vrot.lane.b32.xlu0 %v894, 95
    %v902 = vpop.permute.xlu0 %901
    %903 = vrot.lane.b32.xlu0 %v895, 95
    %v904 = vpop.permute.xlu0 %903
    %v905 = vsel %vm513, %v900, %v902
    %v906 = vsel %vm513, %v902, %v904
    %v910 = vadd.f32 %v866, %v900
    %v911 = vadd.f32 %v867, %v905
    %v912 = vadd.f32 %v868, %v906
    %s913 = sld [smem:[#allocation6 + $0x11]]
    %v914 = vstv %s913
    %v915 = vmul.f32 %v914, %v597
    %v916 = vmul.f32 %v914, %v598
    %v917 = vmul.f32 %v914, 0.0
    %921 = vrot.lane.b32.xlu0 %v915, 94
    %v922 = vpop.permute.xlu0 %921
    %923 = vrot.lane.b32.xlu0 %v916, 94
    %v924 = vpop.permute.xlu0 %923
    %925 = vrot.lane.b32.xlu0 %v917, 94
    %v926 = vpop.permute.xlu0 %925
    %v927 = vsel %vm558, %v922, %v924
    %v928 = vsel %vm558, %v924, %v926
    %v932 = vadd.f32 %v888, %v922
    %v933 = vadd.f32 %v889, %v927
    %v934 = vadd.f32 %v890, %v928
    %s935 = sld [smem:[#allocation6 + $0x91]]
    %v936 = vstv %s935
    %v937 = vmul.f32 %v936, %v597
    %v938 = vmul.f32 %v936, %v598
    %v939 = vmul.f32 %v936, 0.0
    %943 = vrot.lane.b32.xlu0 %v937, 94
    %v944 = vpop.permute.xlu0 %943
    %945 = vrot.lane.b32.xlu0 %v938, 94
    %v946 = vpop.permute.xlu0 %945
    %947 = vrot.lane.b32.xlu0 %v939, 94
    %v948 = vpop.permute.xlu0 %947
    %v949 = vsel %vm558, %v944, %v946
    %v950 = vsel %vm558, %v946, %v948
    %v954 = vadd.f32 %v910, %v944
    %v955 = vadd.f32 %v911, %v949
    %v956 = vadd.f32 %v912, %v950
    %958 = vst [vmem:[#allocation1] ss:$4 sm:$0xff] %v208
    %v959 = vld.sshfl [vmem:[#allocation1] sm:$0xff pattern:$0x73625140]
    %v960 = vld.sshfl [vmem:[#allocation1 + $0x8] sm:$0xff pattern:$0x73625140]
    %v963 = vsel %vm125, %v959, 0.0
    %v964 = vsel %vm126, %v960, 0.0
    %v965 = vsel %vm127, %v959, 0.0
    %v966 = vsel %vm128, %v960, 0.0
    %s967 = sld [smem:[#allocation6 + $0x12]]
    %v968 = vstv %s967
    %v969 = vmul.f32 %v968, 0.0
    %v970 = vmul.f32 %v968, %v963
    %v971 = vmul.f32 %v968, %v964
    %v972 = vadd.f32 %v932, %v969
    %v973 = vadd.f32 %v933, %v970
    %v974 = vadd.f32 %v934, %v971
    %s975 = sld [smem:[#allocation6 + $0x92]]
    %v976 = vstv %s975
    %v977 = vmul.f32 %v976, 0.0
    %v978 = vmul.f32 %v976, %v963
    %v979 = vmul.f32 %v976, %v964
    %v980 = vadd.f32 %v954, %v977
    %v981 = vadd.f32 %v955, %v978
    %v982 = vadd.f32 %v956, %v979
    %s983 = sld [smem:[#allocation6 + $0x13]]
    %v984 = vstv %s983
    %v985 = vmul.f32 %v984, 0.0
    %v986 = vmul.f32 %v984, %v959
    %v987 = vmul.f32 %v984, %v960
    %991 = vrot.lane.b32.xlu0 %v985, 127
    %v992 = vpop.permute.xlu0 %991
    %993 = vrot.lane.b32.xlu0 %v986, 127
    %v994 = vpop.permute.xlu0 %993
    %995 = vrot.lane.b32.xlu0 %v987, 127
    %v996 = vpop.permute.xlu0 %995
    %v997 = vsel %vm253, %v992, %v994
    %v998 = vsel %vm253, %v994, %v996
    %v1002 = vadd.f32 %v972, %v997
    %v1003 = vadd.f32 %v973, %v998
    %v1004 = vadd.f32 %v974, %v996
    %s1005 = sld [smem:[#allocation6 + $0x93]]
    %v1006 = vstv %s1005
    %v1007 = vmul.f32 %v1006, 0.0
    %v1008 = vmul.f32 %v1006, %v959
    %v1009 = vmul.f32 %v1006, %v960
    %1013 = vrot.lane.b32.xlu0 %v1007, 127
    %v1014 = vpop.permute.xlu0 %1013
    %1015 = vrot.lane.b32.xlu0 %v1008, 127
    %v1016 = vpop.permute.xlu0 %1015
    %1017 = vrot.lane.b32.xlu0 %v1009, 127
    %v1018 = vpop.permute.xlu0 %1017
    %v1019 = vsel %vm253, %v1014, %v1016
    %v1020 = vsel %vm253, %v1016, %v1018
    %v1024 = vadd.f32 %v980, %v1019
    %v1025 = vadd.f32 %v981, %v1020
    %v1026 = vadd.f32 %v982, %v1018
    %s1027 = sld [smem:[#allocation6 + $0x14]]
    %v1028 = vstv %s1027
    %v1029 = vmul.f32 %v1028, 0.0
    %v1030 = vmul.f32 %v1028, %v965
    %v1031 = vmul.f32 %v1028, %v966
    %1035 = vrot.lane.b32.xlu0 %v1029, 126
    %v1036 = vpop.permute.xlu0 %1035
    %1037 = vrot.lane.b32.xlu0 %v1030, 126
    %v1038 = vpop.permute.xlu0 %1037
    %1039 = vrot.lane.b32.xlu0 %v1031, 126
    %v1040 = vpop.permute.xlu0 %1039
    %v1041 = vsel %vm298, %v1036, %v1038
    %v1042 = vsel %vm298, %v1038, %v1040
    %v1046 = vadd.f32 %v1002, %v1041
    %v1047 = vadd.f32 %v1003, %v1042
    %v1048 = vadd.f32 %v1004, %v1040
    %s1049 = sld [smem:[#allocation6 + $0x94]]
    %v1050 = vstv %s1049
    %v1051 = vmul.f32 %v1050, 0.0
    %v1052 = vmul.f32 %v1050, %v965
    %v1053 = vmul.f32 %v1050, %v966
    %1057 = vrot.lane.b32.xlu0 %v1051, 126
    %v1058 = vpop.permute.xlu0 %1057
    %1059 = vrot.lane.b32.xlu0 %v1052, 126
    %v1060 = vpop.permute.xlu0 %1059
    %1061 = vrot.lane.b32.xlu0 %v1053, 126
    %v1062 = vpop.permute.xlu0 %1061
    %v1063 = vsel %vm298, %v1058, %v1060
    %v1064 = vsel %vm298, %v1060, %v1062
    %v1068 = vadd.f32 %v1024, %v1063
    %v1069 = vadd.f32 %v1025, %v1064
    %v1070 = vadd.f32 %v1026, %v1062
    %s1071 = sld [smem:[#allocation6 + $0x15]]
    %v1072 = vstv %s1071
    %v1073 = vmul.f32 %v1072, 0.0
    %v1074 = vmul.f32 %v1072, %v963
    %v1075 = vmul.f32 %v1072, %v964
    %1079 = vrot.lane.b32.xlu0 %v1073, 112
    %v1080 = vpop.permute.xlu0 %1079
    %1081 = vrot.lane.b32.xlu0 %v1074, 112
    %v1082 = vpop.permute.xlu0 %1081
    %1083 = vrot.lane.b32.xlu0 %v1075, 112
    %v1084 = vpop.permute.xlu0 %1083
    %v1085 = vsel %vm343, %v1080, %v1082
    %v1086 = vsel %vm343, %v1082, %v1084
    %v1090 = vadd.f32 %v1046, %v1085
    %v1091 = vadd.f32 %v1047, %v1086
    %v1092 = vadd.f32 %v1048, %v1084
    %s1093 = sld [smem:[#allocation6 + $0x95]]
    %v1094 = vstv %s1093
    %v1095 = vmul.f32 %v1094, 0.0
    %v1096 = vmul.f32 %v1094, %v963
    %v1097 = vmul.f32 %v1094, %v964
    %1101 = vrot.lane.b32.xlu0 %v1095, 112
    %v1102 = vpop.permute.xlu0 %1101
    %1103 = vrot.lane.b32.xlu0 %v1096, 112
    %v1104 = vpop.permute.xlu0 %1103
    %1105 = vrot.lane.b32.xlu0 %v1097, 112
    %v1106 = vpop.permute.xlu0 %1105
    %v1107 = vsel %vm343, %v1102, %v1104
    %v1108 = vsel %vm343, %v1104, %v1106
    %v1112 = vadd.f32 %v1068, %v1107
    %v1113 = vadd.f32 %v1069, %v1108
    %v1114 = vadd.f32 %v1070, %v1106
    %s1115 = sld [smem:[#allocation6 + $0x16]]
    %v1116 = vstv %s1115
    %v1117 = vmul.f32 %v1116, %v959
    %v1118 = vmul.f32 %v1116, %v960
    %1121 = vrot.lane.b32.xlu0 %v1117, 111
    %v1122 = vpop.permute.xlu0 %1121
    %1123 = vrot.lane.b32.xlu0 %v1118, 111
    %v1124 = vpop.permute.xlu0 %1123
    %v1125 = vsel %vm384, %v1122, %v1124
    %v1129 = vadd.f32 %v1090, %v1122
    %v1130 = vadd.f32 %v1091, %v1125
    %v1131 = vadd.f32 %v1092, %v1124
    %s1132 = sld [smem:[#allocation6 + $0x96]]
    %v1133 = vstv %s1132
    %v1134 = vmul.f32 %v1133, %v959
    %v1135 = vmul.f32 %v1133, %v960
    %1138 = vrot.lane.b32.xlu0 %v1134, 111
    %v1139 = vpop.permute.xlu0 %1138
    %1140 = vrot.lane.b32.xlu0 %v1135, 111
    %v1141 = vpop.permute.xlu0 %1140
    %v1142 = vsel %vm384, %v1139, %v1141
    %v1146 = vadd.f32 %v1112, %v1139
    %v1147 = vadd.f32 %v1113, %v1142
    %v1148 = vadd.f32 %v1114, %v1141
    %s1149 = sld [smem:[#allocation6 + $0x17]]
    %v1150 = vstv %s1149
    %v1151 = vmul.f32 %v1150, %v965
    %v1152 = vmul.f32 %v1150, %v966
    %v1153 = vmul.f32 %v1150, 0.0
    %1157 = vrot.lane.b32.xlu0 %v1151, 110
    %v1158 = vpop.permute.xlu0 %1157
    %1159 = vrot.lane.b32.xlu0 %v1152, 110
    %v1160 = vpop.permute.xlu0 %1159
    %1161 = vrot.lane.b32.xlu0 %v1153, 110
    %v1162 = vpop.permute.xlu0 %1161
    %v1163 = vsel %vm423, %v1158, %v1160
    %v1164 = vsel %vm423, %v1160, %v1162
    %v1168 = vadd.f32 %v1129, %v1158
    %v1169 = vadd.f32 %v1130, %v1163
    %v1170 = vadd.f32 %v1131, %v1164
    %s1171 = sld [smem:[#allocation6 + $0x97]]
    %v1172 = vstv %s1171
    %v1173 = vmul.f32 %v1172, %v965
    %v1174 = vmul.f32 %v1172, %v966
    %v1175 = vmul.f32 %v1172, 0.0
    %1179 = vrot.lane.b32.xlu0 %v1173, 110
    %v1180 = vpop.permute.xlu0 %1179
    %1181 = vrot.lane.b32.xlu0 %v1174, 110
    %v1182 = vpop.permute.xlu0 %1181
    %1183 = vrot.lane.b32.xlu0 %v1175, 110
    %v1184 = vpop.permute.xlu0 %1183
    %v1185 = vsel %vm423, %v1180, %v1182
    %v1186 = vsel %vm423, %v1182, %v1184
    %v1190 = vadd.f32 %v1146, %v1180
    %v1191 = vadd.f32 %v1147, %v1185
    %v1192 = vadd.f32 %v1148, %v1186
    %s1193 = sld [smem:[#allocation6 + $0x18]]
    %v1194 = vstv %s1193
    %v1195 = vmul.f32 %v1194, %v963
    %v1196 = vmul.f32 %v1194, %v964
    %v1197 = vmul.f32 %v1194, 0.0
    %1201 = vrot.lane.b32.xlu0 %v1195, 96
    %v1202 = vpop.permute.xlu0 %1201
    %1203 = vrot.lane.b32.xlu0 %v1196, 96
    %v1204 = vpop.permute.xlu0 %1203
    %1205 = vrot.lane.b32.xlu0 %v1197, 96
    %v1206 = vpop.permute.xlu0 %1205
    %v1207 = vsel %vm468, %v1202, %v1204
    %v1208 = vsel %vm468, %v1204, %v1206
    %v1212 = vadd.f32 %v1168, %v1202
    %v1213 = vadd.f32 %v1169, %v1207
    %v1214 = vadd.f32 %v1170, %v1208
    %s1215 = sld [smem:[#allocation6 + $0x98]]
    %v1216 = vstv %s1215
    %v1217 = vmul.f32 %v1216, %v963
    %v1218 = vmul.f32 %v1216, %v964
    %v1219 = vmul.f32 %v1216, 0.0
    %1223 = vrot.lane.b32.xlu0 %v1217, 96
    %v1224 = vpop.permute.xlu0 %1223
    %1225 = vrot.lane.b32.xlu0 %v1218, 96
    %v1226 = vpop.permute.xlu0 %1225
    %1227 = vrot.lane.b32.xlu0 %v1219, 96
    %v1228 = vpop.permute.xlu0 %1227
    %v1229 = vsel %vm468, %v1224, %v1226
    %v1230 = vsel %vm468, %v1226, %v1228
    %v1234 = vadd.f32 %v1190, %v1224
    %v1235 = vadd.f32 %v1191, %v1229
    %v1236 = vadd.f32 %v1192, %v1230
    %s1237 = sld [smem:[#allocation6 + $0x19]]
    %v1238 = vstv %s1237
    %v1239 = vmul.f32 %v1238, %v959
    %v1240 = vmul.f32 %v1238, %v960
    %v1241 = vmul.f32 %v1238, 0.0
    %1245 = vrot.lane.b32.xlu0 %v1239, 95
    %v1246 = vpop.permute.xlu0 %1245
    %1247 = vrot.lane.b32.xlu0 %v1240, 95
    %v1248 = vpop.permute.xlu0 %1247
    %1249 = vrot.lane.b32.xlu0 %v1241, 95
    %v1250 = vpop.permute.xlu0 %1249
    %v1251 = vsel %vm513, %v1246, %v1248
    %v1252 = vsel %vm513, %v1248, %v1250
    %v1256 = vadd.f32 %v1212, %v1246
    %v1257 = vadd.f32 %v1213, %v1251
    %v1258 = vadd.f32 %v1214, %v1252
    %s1259 = sld [smem:[#allocation6 + $0x99]]
    %v1260 = vstv %s1259
    %v1261 = vmul.f32 %v1260, %v959
    %v1262 = vmul.f32 %v1260, %v960
    %v1263 = vmul.f32 %v1260, 0.0
    %1267 = vrot.lane.b32.xlu0 %v1261, 95
    %v1268 = vpop.permute.xlu0 %1267
    %1269 = vrot.lane.b32.xlu0 %v1262, 95
    %v1270 = vpop.permute.xlu0 %1269
    %1271 = vrot.lane.b32.xlu0 %v1263, 95
    %v1272 = vpop.permute.xlu0 %1271
    %v1273 = vsel %vm513, %v1268, %v1270
    %v1274 = vsel %vm513, %v1270, %v1272
    %v1278 = vadd.f32 %v1234, %v1268
    %v1279 = vadd.f32 %v1235, %v1273
    %v1280 = vadd.f32 %v1236, %v1274
    %s1281 = sld [smem:[#allocation6 + $0x1a]]
    %v1282 = vstv %s1281
    %v1283 = vmul.f32 %v1282, %v965
    %v1284 = vmul.f32 %v1282, %v966
    %v1285 = vmul.f32 %v1282, 0.0
    %1289 = vrot.lane.b32.xlu0 %v1283, 94
    %v1290 = vpop.permute.xlu0 %1289
    %1291 = vrot.lane.b32.xlu0 %v1284, 94
    %v1292 = vpop.permute.xlu0 %1291
    %1293 = vrot.lane.b32.xlu0 %v1285, 94
    %v1294 = vpop.permute.xlu0 %1293
    %v1295 = vsel %vm558, %v1290, %v1292
    %v1296 = vsel %vm558, %v1292, %v1294
    %v1300 = vadd.f32 %v1256, %v1290
    %v1301 = vadd.f32 %v1257, %v1295
    %v1302 = vadd.f32 %v1258, %v1296
    %s1303 = sld [smem:[#allocation6 + $0x9a]]
    %v1304 = vstv %s1303
    %v1305 = vmul.f32 %v1304, %v965
    %v1306 = vmul.f32 %v1304, %v966
    %v1307 = vmul.f32 %v1304, 0.0
    %1311 = vrot.lane.b32.xlu0 %v1305, 94
    %v1312 = vpop.permute.xlu0 %1311
    %1313 = vrot.lane.b32.xlu0 %v1306, 94
    %v1314 = vpop.permute.xlu0 %1313
    %1315 = vrot.lane.b32.xlu0 %v1307, 94
    %v1316 = vpop.permute.xlu0 %1315
    %v1317 = vsel %vm558, %v1312, %v1314
    %v1318 = vsel %vm558, %v1314, %v1316
    %v1322 = vadd.f32 %v1278, %v1312
    %v1323 = vadd.f32 %v1279, %v1317
    %v1324 = vadd.f32 %v1280, %v1318
    %1326 = vst [vmem:[#allocation1] ss:$4 sm:$0xff] %v212
    %v1327 = vld.sshfl [vmem:[#allocation1] sm:$0xff pattern:$0x73625140]
    %v1328 = vld.sshfl [vmem:[#allocation1 + $0x8] sm:$0xff pattern:$0x73625140]
    %v1331 = vsel %vm125, %v1327, 0.0
    %v1332 = vsel %vm126, %v1328, 0.0
    %v1333 = vsel %vm127, %v1327, 0.0
    %v1334 = vsel %vm128, %v1328, 0.0
    %s1335 = sld [smem:[#allocation6 + $0x1b]]
    %v1336 = vstv %s1335
    %v1337 = vmul.f32 %v1336, 0.0
    %v1338 = vmul.f32 %v1336, %v1331
    %v1339 = vmul.f32 %v1336, %v1332
    %v1340 = vadd.f32 %v1300, %v1337
    %v1341 = vadd.f32 %v1301, %v1338
    %v1342 = vadd.f32 %v1302, %v1339
    %s1343 = sld [smem:[#allocation6 + $0x9b]]
    %v1344 = vstv %s1343
    %v1345 = vmul.f32 %v1344, 0.0
    %v1346 = vmul.f32 %v1344, %v1331
    %v1347 = vmul.f32 %v1344, %v1332
    %v1348 = vadd.f32 %v1322, %v1345
    %v1349 = vadd.f32 %v1323, %v1346
    %v1350 = vadd.f32 %v1324, %v1347
    %s1351 = sld [smem:[#allocation6 + $0x1c]]
    %v1352 = vstv %s1351
    %v1353 = vmul.f32 %v1352, 0.0
    %v1354 = vmul.f32 %v1352, %v1327
    %v1355 = vmul.f32 %v1352, %v1328
    %1359 = vrot.lane.b32.xlu0 %v1353, 127
    %v1360 = vpop.permute.xlu0 %1359
    %1361 = vrot.lane.b32.xlu0 %v1354, 127
    %v1362 = vpop.permute.xlu0 %1361
    %1363 = vrot.lane.b32.xlu0 %v1355, 127
    %v1364 = vpop.permute.xlu0 %1363
    %v1365 = vsel %vm253, %v1360, %v1362
    %v1366 = vsel %vm253, %v1362, %v1364
    %v1370 = vadd.f32 %v1340, %v1365
    %v1371 = vadd.f32 %v1341, %v1366
    %v1372 = vadd.f32 %v1342, %v1364
    %s1373 = sld [smem:[#allocation6 + $0x9c]]
    %v1374 = vstv %s1373
    %v1375 = vmul.f32 %v1374, 0.0
    %v1376 = vmul.f32 %v1374, %v1327
    %v1377 = vmul.f32 %v1374, %v1328
    %1381 = vrot.lane.b32.xlu0 %v1375, 127
    %v1382 = vpop.permute.xlu0 %1381
    %1383 = vrot.lane.b32.xlu0 %v1376, 127
    %v1384 = vpop.permute.xlu0 %1383
    %1385 = vrot.lane.b32.xlu0 %v1377, 127
    %v1386 = vpop.permute.xlu0 %1385
    %v1387 = vsel %vm253, %v1382, %v1384
    %v1388 = vsel %vm253, %v1384, %v1386
    %v1392 = vadd.f32 %v1348, %v1387
    %v1393 = vadd.f32 %v1349, %v1388
    %v1394 = vadd.f32 %v1350, %v1386
    %s1395 = sld [smem:[#allocation6 + $0x1d]]
    %v1396 = vstv %s1395
    %v1397 = vmul.f32 %v1396, 0.0
    %v1398 = vmul.f32 %v1396, %v1333
    %v1399 = vmul.f32 %v1396, %v1334
    %1403 = vrot.lane.b32.xlu0 %v1397, 126
    %v1404 = vpop.permute.xlu0 %1403
    %1405 = vrot.lane.b32.xlu0 %v1398, 126
    %v1406 = vpop.permute.xlu0 %1405
    %1407 = vrot.lane.b32.xlu0 %v1399, 126
    %v1408 = vpop.permute.xlu0 %1407
    %v1409 = vsel %vm298, %v1404, %v1406
    %v1410 = vsel %vm298, %v1406, %v1408
    %v1414 = vadd.f32 %v1370, %v1409
    %v1415 = vadd.f32 %v1371, %v1410
    %v1416 = vadd.f32 %v1372, %v1408
    %s1417 = sld [smem:[#allocation6 + $0x9d]]
    %v1418 = vstv %s1417
    %v1419 = vmul.f32 %v1418, 0.0
    %v1420 = vmul.f32 %v1418, %v1333
    %v1421 = vmul.f32 %v1418, %v1334
    %1425 = vrot.lane.b32.xlu0 %v1419, 126
    %v1426 = vpop.permute.xlu0 %1425
    %1427 = vrot.lane.b32.xlu0 %v1420, 126
    %v1428 = vpop.permute.xlu0 %1427
    %1429 = vrot.lane.b32.xlu0 %v1421, 126
    %v1430 = vpop.permute.xlu0 %1429
    %v1431 = vsel %vm298, %v1426, %v1428
    %v1432 = vsel %vm298, %v1428, %v1430
    %v1436 = vadd.f32 %v1392, %v1431
    %v1437 = vadd.f32 %v1393, %v1432
    %v1438 = vadd.f32 %v1394, %v1430
    %s1439 = sld [smem:[#allocation6 + $0x1e]]
    %v1440 = vstv %s1439
    %v1441 = vmul.f32 %v1440, 0.0
    %v1442 = vmul.f32 %v1440, %v1331
    %v1443 = vmul.f32 %v1440, %v1332
    %1447 = vrot.lane.b32.xlu0 %v1441, 112
    %v1448 = vpop.permute.xlu0 %1447
    %1449 = vrot.lane.b32.xlu0 %v1442, 112
    %v1450 = vpop.permute.xlu0 %1449
    %1451 = vrot.lane.b32.xlu0 %v1443, 112
    %v1452 = vpop.permute.xlu0 %1451
    %v1453 = vsel %vm343, %v1448, %v1450
    %v1454 = vsel %vm343, %v1450, %v1452
    %v1458 = vadd.f32 %v1414, %v1453
    %v1459 = vadd.f32 %v1415, %v1454
    %v1460 = vadd.f32 %v1416, %v1452
    %s1461 = sld [smem:[#allocation6 + $0x9e]]
    %v1462 = vstv %s1461
    %v1463 = vmul.f32 %v1462, 0.0
    %v1464 = vmul.f32 %v1462, %v1331
    %v1465 = vmul.f32 %v1462, %v1332
    %1469 = vrot.lane.b32.xlu0 %v1463, 112
    %v1470 = vpop.permute.xlu0 %1469
    %1471 = vrot.lane.b32.xlu0 %v1464, 112
    %v1472 = vpop.permute.xlu0 %1471
    %1473 = vrot.lane.b32.xlu0 %v1465, 112
    %v1474 = vpop.permute.xlu0 %1473
    %v1475 = vsel %vm343, %v1470, %v1472
    %v1476 = vsel %vm343, %v1472, %v1474
    %v1480 = vadd.f32 %v1436, %v1475
    %v1481 = vadd.f32 %v1437, %v1476
    %v1482 = vadd.f32 %v1438, %v1474
    %s1483 = sld [smem:[#allocation6 + $0x1f]]
    %v1484 = vstv %s1483
    %v1485 = vmul.f32 %v1484, %v1327
    %v1486 = vmul.f32 %v1484, %v1328
    %1489 = vrot.lane.b32.xlu0 %v1485, 111
    %v1490 = vpop.permute.xlu0 %1489
    %1491 = vrot.lane.b32.xlu0 %v1486, 111
    %v1492 = vpop.permute.xlu0 %1491
    %v1493 = vsel %vm384, %v1490, %v1492
    %v1497 = vadd.f32 %v1458, %v1490
    %v1498 = vadd.f32 %v1459, %v1493
    %v1499 = vadd.f32 %v1460, %v1492
    %s1500 = sld [smem:[#allocation6 + $0x9f]]
    %v1501 = vstv %s1500
    %v1502 = vmul.f32 %v1501, %v1327
    %v1503 = vmul.f32 %v1501, %v1328
    %1506 = vrot.lane.b32.xlu0 %v1502, 111
    %v1507 = vpop.permute.xlu0 %1506
    %1508 = vrot.lane.b32.xlu0 %v1503, 111
    %v1509 = vpop.permute.xlu0 %1508
    %v1510 = vsel %vm384, %v1507, %v1509
    %v1514 = vadd.f32 %v1480, %v1507
    %v1515 = vadd.f32 %v1481, %v1510
    %v1516 = vadd.f32 %v1482, %v1509
    %s1517 = sld [smem:[#allocation6 + $0x20]]
    %v1518 = vstv %s1517
    %v1519 = vmul.f32 %v1518, %v1333
    %v1520 = vmul.f32 %v1518, %v1334
    %v1521 = vmul.f32 %v1518, 0.0
    %1525 = vrot.lane.b32.xlu0 %v1519, 110
    %v1526 = vpop.permute.xlu0 %1525
    %1527 = vrot.lane.b32.xlu0 %v1520, 110
    %v1528 = vpop.permute.xlu0 %1527
    %1529 = vrot.lane.b32.xlu0 %v1521, 110
    %v1530 = vpop.permute.xlu0 %1529
    %v1531 = vsel %vm423, %v1526, %v1528
    %v1532 = vsel %vm423, %v1528, %v1530
    %v1536 = vadd.f32 %v1497, %v1526
    %v1537 = vadd.f32 %v1498, %v1531
    %v1538 = vadd.f32 %v1499, %v1532
    %s1539 = sld [smem:[#allocation6 + $0xa0]]
    %v1540 = vstv %s1539
    %v1541 = vmul.f32 %v1540, %v1333
    %v1542 = vmul.f32 %v1540, %v1334
    %v1543 = vmul.f32 %v1540, 0.0
    %1547 = vrot.lane.b32.xlu0 %v1541, 110
    %v1548 = vpop.permute.xlu0 %1547
    %1549 = vrot.lane.b32.xlu0 %v1542, 110
    %v1550 = vpop.permute.xlu0 %1549
    %1551 = vrot.lane.b32.xlu0 %v1543, 110
    %v1552 = vpop.permute.xlu0 %1551
    %v1553 = vsel %vm423, %v1548, %v1550
    %v1554 = vsel %vm423, %v1550, %v1552
    %v1558 = vadd.f32 %v1514, %v1548
    %v1559 = vadd.f32 %v1515, %v1553
    %v1560 = vadd.f32 %v1516, %v1554
    %s1561 = sld [smem:[#allocation6 + $0x21]]
    %v1562 = vstv %s1561
    %v1563 = vmul.f32 %v1562, %v1331
    %v1564 = vmul.f32 %v1562, %v1332
    %v1565 = vmul.f32 %v1562, 0.0
    %1569 = vrot.lane.b32.xlu0 %v1563, 96
    %v1570 = vpop.permute.xlu0 %1569
    %1571 = vrot.lane.b32.xlu0 %v1564, 96
    %v1572 = vpop.permute.xlu0 %1571
    %1573 = vrot.lane.b32.xlu0 %v1565, 96
    %v1574 = vpop.permute.xlu0 %1573
    %v1575 = vsel %vm468, %v1570, %v1572
    %v1576 = vsel %vm468, %v1572, %v1574
    %v1580 = vadd.f32 %v1536, %v1570
    %v1581 = vadd.f32 %v1537, %v1575
    %v1582 = vadd.f32 %v1538, %v1576
    %s1583 = sld [smem:[#allocation6 + $0xa1]]
    %v1584 = vstv %s1583
    %v1585 = vmul.f32 %v1584, %v1331
    %v1586 = vmul.f32 %v1584, %v1332
    %v1587 = vmul.f32 %v1584, 0.0
    %1591 = vrot.lane.b32.xlu0 %v1585, 96
    %v1592 = vpop.permute.xlu0 %1591
    %1593 = vrot.lane.b32.xlu0 %v1586, 96
    %v1594 = vpop.permute.xlu0 %1593
    %1595 = vrot.lane.b32.xlu0 %v1587, 96
    %v1596 = vpop.permute.xlu0 %1595
    %v1597 = vsel %vm468, %v1592, %v1594
    %v1598 = vsel %vm468, %v1594, %v1596
    %v1602 = vadd.f32 %v1558, %v1592
    %v1603 = vadd.f32 %v1559, %v1597
    %v1604 = vadd.f32 %v1560, %v1598
    %s1605 = sld [smem:[#allocation6 + $0x22]]
    %v1606 = vstv %s1605
    %v1607 = vmul.f32 %v1606, %v1327
    %v1608 = vmul.f32 %v1606, %v1328
    %v1609 = vmul.f32 %v1606, 0.0
    %1613 = vrot.lane.b32.xlu0 %v1607, 95
    %v1614 = vpop.permute.xlu0 %1613
    %1615 = vrot.lane.b32.xlu0 %v1608, 95
    %v1616 = vpop.permute.xlu0 %1615
    %1617 = vrot.lane.b32.xlu0 %v1609, 95
    %v1618 = vpop.permute.xlu0 %1617
    %v1619 = vsel %vm513, %v1614, %v1616
    %v1620 = vsel %vm513, %v1616, %v1618
    %v1624 = vadd.f32 %v1580, %v1614
    %v1625 = vadd.f32 %v1581, %v1619
    %v1626 = vadd.f32 %v1582, %v1620
    %s1627 = sld [smem:[#allocation6 + $0xa2]]
    %v1628 = vstv %s1627
    %v1629 = vmul.f32 %v1628, %v1327
    %v1630 = vmul.f32 %v1628, %v1328
    %v1631 = vmul.f32 %v1628, 0.0
    %1635 = vrot.lane.b32.xlu0 %v1629, 95
    %v1636 = vpop.permute.xlu0 %1635
    %1637 = vrot.lane.b32.xlu0 %v1630, 95
    %v1638 = vpop.permute.xlu0 %1637
    %1639 = vrot.lane.b32.xlu0 %v1631, 95
    %v1640 = vpop.permute.xlu0 %1639
    %v1641 = vsel %vm513, %v1636, %v1638
    %v1642 = vsel %vm513, %v1638, %v1640
    %v1646 = vadd.f32 %v1602, %v1636
    %v1647 = vadd.f32 %v1603, %v1641
    %v1648 = vadd.f32 %v1604, %v1642
    %s1649 = sld [smem:[#allocation6 + $0x23]]
    %v1650 = vstv %s1649
    %v1651 = vmul.f32 %v1650, %v1333
    %v1652 = vmul.f32 %v1650, %v1334
    %v1653 = vmul.f32 %v1650, 0.0
    %1657 = vrot.lane.b32.xlu0 %v1651, 94
    %v1658 = vpop.permute.xlu0 %1657
    %1659 = vrot.lane.b32.xlu0 %v1652, 94
    %v1660 = vpop.permute.xlu0 %1659
    %1661 = vrot.lane.b32.xlu0 %v1653, 94
    %v1662 = vpop.permute.xlu0 %1661
    %v1663 = vsel %vm558, %v1658, %v1660
    %v1664 = vsel %vm558, %v1660, %v1662
    %v1668 = vadd.f32 %v1624, %v1658
    %v1669 = vadd.f32 %v1625, %v1663
    %v1670 = vadd.f32 %v1626, %v1664
    %s1671 = sld [smem:[#allocation6 + $0xa3]]
    %v1672 = vstv %s1671
    %v1673 = vmul.f32 %v1672, %v1333
    %v1674 = vmul.f32 %v1672, %v1334
    %v1675 = vmul.f32 %v1672, 0.0
    %1679 = vrot.lane.b32.xlu0 %v1673, 94
    %v1680 = vpop.permute.xlu0 %1679
    %1681 = vrot.lane.b32.xlu0 %v1674, 94
    %v1682 = vpop.permute.xlu0 %1681
    %1683 = vrot.lane.b32.xlu0 %v1675, 94
    %v1684 = vpop.permute.xlu0 %1683
    %v1685 = vsel %vm558, %v1680, %v1682
    %v1686 = vsel %vm558, %v1682, %v1684
    %v1690 = vadd.f32 %v1646, %v1680
    %v1691 = vadd.f32 %v1647, %v1685
    %v1692 = vadd.f32 %v1648, %v1686
    %s1693 = sld [smem:[#allocation7]]
    %v1694 = vstv %s1693
    %v1695 = vadd.f32 %v1668, %v1694
    %v1696 = vadd.f32 %v1669, %v1694
    %v1697 = vadd.f32 %v1670, %v1694
    %v1698 = vmax.f32 %v1695, 0.0
    %v1699 = vmax.f32 %v1696, 0.0
    %v1700 = vmax.f32 %v1697, 0.0
    %s1701 = sld [smem:[#allocation7 + $0x1]]
    %v1702 = vstv %s1701
    %v1703 = vadd.f32 %v1690, %v1702
    %v1704 = vadd.f32 %v1691, %v1702
    %v1705 = vadd.f32 %v1692, %v1702
    %v1706 = vmax.f32 %v1703, 0.0
    %v1707 = vmax.f32 %v1704, 0.0
    %v1708 = vmax.f32 %v1705, 0.0
    %1712 = vrot.lane.b32.xlu0 %v1698, 17
    %v1713 = vpop.permute.xlu0 %1712
    %1714 = vrot.lane.b32.xlu0 %v1699, 17
    %v1715 = vpop.permute.xlu0 %1714
    %1716 = vrot.lane.b32.xlu0 %v1700, 17
    %v1717 = vpop.permute.xlu0 %1716
    %vm1718 = vcmask 138240
    %v1719 = vsel %vm1718, %v1713, %v1715
    %v1720 = vsel %vm1718, %v1715, %v1717
    %v1723 = vsel %vm125, %v1719, 0.0
    %v1724 = vsel %vm126, %v1720, 0.0
    %v1725 = vsel %vm127, %v1719, 0.0
    %v1726 = vsel %vm128, %v1720, 0.0
    %s1727 = sld [smem:[#allocation9]]
    %v1728 = vstv %s1727
    %v1729 = vmul.f32 %v1728, 0.0
    %v1730 = vmul.f32 %v1728, %v1723
    %v1731 = vmul.f32 %v1728, %v1724
    %v1732 = vadd.f32 %v1729, 0.0
    %v1733 = vadd.f32 %v1730, 0.0
    %v1734 = vadd.f32 %v1731, 0.0
    %s1735 = sld [smem:[#allocation9 + $0x80]]
    %v1736 = vstv %s1735
    %v1737 = vmul.f32 %v1736, 0.0
    %v1738 = vmul.f32 %v1736, %v1723
    %v1739 = vmul.f32 %v1736, %v1724
    %v1740 = vadd.f32 %v1737, 0.0
    %v1741 = vadd.f32 %v1738, 0.0
    %v1742 = vadd.f32 %v1739, 0.0
    %s1743 = sld [smem:[#allocation9 + $0x1]]
    %v1744 = vstv %s1743
    %v1745 = vmul.f32 %v1744, 0.0
    %v1746 = vmul.f32 %v1744, %v1719
    %v1747 = vmul.f32 %v1744, %v1720
    %1751 = vrot.lane.b32.xlu0 %v1745, 127
    %v1752 = vpop.permute.xlu0 %1751
    %1753 = vrot.lane.b32.xlu0 %v1746, 127
    %v1754 = vpop.permute.xlu0 %1753
    %1755 = vrot.lane.b32.xlu0 %v1747, 127
    %v1756 = vpop.permute.xlu0 %1755
    %v1757 = vsel %vm253, %v1752, %v1754
    %v1758 = vsel %vm253, %v1754, %v1756
    %v1762 = vadd.f32 %v1732, %v1757
    %v1763 = vadd.f32 %v1733, %v1758
    %v1764 = vadd.f32 %v1734, %v1756
    %s1765 = sld [smem:[#allocation9 + $0x81]]
    %v1766 = vstv %s1765
    %v1767 = vmul.f32 %v1766, 0.0
    %v1768 = vmul.f32 %v1766, %v1719
    %v1769 = vmul.f32 %v1766, %v1720
    %1773 = vrot.lane.b32.xlu0 %v1767, 127
    %v1774 = vpop.permute.xlu0 %1773
    %1775 = vrot.lane.b32.xlu0 %v1768, 127
    %v1776 = vpop.permute.xlu0 %1775
    %1777 = vrot.lane.b32.xlu0 %v1769, 127
    %v1778 = vpop.permute.xlu0 %1777
    %v1779 = vsel %vm253, %v1774, %v1776
    %v1780 = vsel %vm253, %v1776, %v1778
    %v1784 = vadd.f32 %v1740, %v1779
    %v1785 = vadd.f32 %v1741, %v1780
    %v1786 = vadd.f32 %v1742, %v1778
    %s1787 = sld [smem:[#allocation9 + $0x2]]
    %v1788 = vstv %s1787
    %v1789 = vmul.f32 %v1788, 0.0
    %v1790 = vmul.f32 %v1788, %v1725
    %v1791 = vmul.f32 %v1788, %v1726
    %1795 = vrot.lane.b32.xlu0 %v1789, 126
    %v1796 = vpop.permute.xlu0 %1795
    %1797 = vrot.lane.b32.xlu0 %v1790, 126
    %v1798 = vpop.permute.xlu0 %1797
    %1799 = vrot.lane.b32.xlu0 %v1791, 126
    %v1800 = vpop.permute.xlu0 %1799
    %v1801 = vsel %vm298, %v1796, %v1798
    %v1802 = vsel %vm298, %v1798, %v1800
    %v1806 = vadd.f32 %v1762, %v1801
    %v1807 = vadd.f32 %v1763, %v1802
    %v1808 = vadd.f32 %v1764, %v1800
    %s1809 = sld [smem:[#allocation9 + $0x82]]
    %v1810 = vstv %s1809
    %v1811 = vmul.f32 %v1810, 0.0
    %v1812 = vmul.f32 %v1810, %v1725
    %v1813 = vmul.f32 %v1810, %v1726
    %1817 = vrot.lane.b32.xlu0 %v1811, 126
    %v1818 = vpop.permute.xlu0 %1817
    %1819 = vrot.lane.b32.xlu0 %v1812, 126
    %v1820 = vpop.permute.xlu0 %1819
    %1821 = vrot.lane.b32.xlu0 %v1813, 126
    %v1822 = vpop.permute.xlu0 %1821
    %v1823 = vsel %vm298, %v1818, %v1820
    %v1824 = vsel %vm298, %v1820, %v1822
    %v1828 = vadd.f32 %v1784, %v1823
    %v1829 = vadd.f32 %v1785, %v1824
    %v1830 = vadd.f32 %v1786, %v1822
    %s1831 = sld [smem:[#allocation9 + $0x3]]
    %v1832 = vstv %s1831
    %v1833 = vmul.f32 %v1832, 0.0
    %v1834 = vmul.f32 %v1832, %v1723
    %v1835 = vmul.f32 %v1832, %v1724
    %1839 = vrot.lane.b32.xlu0 %v1833, 112
    %v1840 = vpop.permute.xlu0 %1839
    %1841 = vrot.lane.b32.xlu0 %v1834, 112
    %v1842 = vpop.permute.xlu0 %1841
    %1843 = vrot.lane.b32.xlu0 %v1835, 112
    %v1844 = vpop.permute.xlu0 %1843
    %v1845 = vsel %vm343, %v1840, %v1842
    %v1846 = vsel %vm343, %v1842, %v1844
    %v1850 = vadd.f32 %v1806, %v1845
    %v1851 = vadd.f32 %v1807, %v1846
    %v1852 = vadd.f32 %v1808, %v1844
    %s1853 = sld [smem:[#allocation9 + $0x83]]
    %v1854 = vstv %s1853
    %v1855 = vmul.f32 %v1854, 0.0
    %v1856 = vmul.f32 %v1854, %v1723
    %v1857 = vmul.f32 %v1854, %v1724
    %1861 = vrot.lane.b32.xlu0 %v1855, 112
    %v1862 = vpop.permute.xlu0 %1861
    %1863 = vrot.lane.b32.xlu0 %v1856, 112
    %v1864 = vpop.permute.xlu0 %1863
    %1865 = vrot.lane.b32.xlu0 %v1857, 112
    %v1866 = vpop.permute.xlu0 %1865
    %v1867 = vsel %vm343, %v1862, %v1864
    %v1868 = vsel %vm343, %v1864, %v1866
    %v1872 = vadd.f32 %v1828, %v1867
    %v1873 = vadd.f32 %v1829, %v1868
    %v1874 = vadd.f32 %v1830, %v1866
    %s1875 = sld [smem:[#allocation9 + $0x4]]
    %v1876 = vstv %s1875
    %v1877 = vmul.f32 %v1876, %v1719
    %v1878 = vmul.f32 %v1876, %v1720
    %1881 = vrot.lane.b32.xlu0 %v1877, 111
    %v1882 = vpop.permute.xlu0 %1881
    %1883 = vrot.lane.b32.xlu0 %v1878, 111
    %v1884 = vpop.permute.xlu0 %1883
    %v1885 = vsel %vm384, %v1882, %v1884
    %v1889 = vadd.f32 %v1850, %v1882
    %v1890 = vadd.f32 %v1851, %v1885
    %v1891 = vadd.f32 %v1852, %v1884
    %s1892 = sld [smem:[#allocation9 + $0x84]]
    %v1893 = vstv %s1892
    %v1894 = vmul.f32 %v1893, %v1719
    %v1895 = vmul.f32 %v1893, %v1720
    %1898 = vrot.lane.b32.xlu0 %v1894, 111
    %v1899 = vpop.permute.xlu0 %1898
    %1900 = vrot.lane.b32.xlu0 %v1895, 111
    %v1901 = vpop.permute.xlu0 %1900
    %v1902 = vsel %vm384, %v1899, %v1901
    %v1906 = vadd.f32 %v1872, %v1899
    %v1907 = vadd.f32 %v1873, %v1902
    %v1908 = vadd.f32 %v1874, %v1901
    %s1909 = sld [smem:[#allocation9 + $0x5]]
    %v1910 = vstv %s1909
    %v1911 = vmul.f32 %v1910, %v1725
    %v1912 = vmul.f32 %v1910, %v1726
    %v1913 = vmul.f32 %v1910, 0.0
    %1917 = vrot.lane.b32.xlu0 %v1911, 110
    %v1918 = vpop.permute.xlu0 %1917
    %1919 = vrot.lane.b32.xlu0 %v1912, 110
    %v1920 = vpop.permute.xlu0 %1919
    %1921 = vrot.lane.b32.xlu0 %v1913, 110
    %v1922 = vpop.permute.xlu0 %1921
    %v1923 = vsel %vm423, %v1918, %v1920
    %v1924 = vsel %vm423, %v1920, %v1922
    %v1928 = vadd.f32 %v1889, %v1918
    %v1929 = vadd.f32 %v1890, %v1923
    %v1930 = vadd.f32 %v1891, %v1924
    %s1931 = sld [smem:[#allocation9 + $0x85]]
    %v1932 = vstv %s1931
    %v1933 = vmul.f32 %v1932, %v1725
    %v1934 = vmul.f32 %v1932, %v1726
    %v1935 = vmul.f32 %v1932, 0.0
    %1939 = vrot.lane.b32.xlu0 %v1933, 110
    %v1940 = vpop.permute.xlu0 %1939
    %1941 = vrot.lane.b32.xlu0 %v1934, 110
    %v1942 = vpop.permute.xlu0 %1941
    %1943 = vrot.lane.b32.xlu0 %v1935, 110
    %v1944 = vpop.permute.xlu0 %1943
    %v1945 = vsel %vm423, %v1940, %v1942
    %v1946 = vsel %vm423, %v1942, %v1944
    %v1950 = vadd.f32 %v1906, %v1940
    %v1951 = vadd.f32 %v1907, %v1945
    %v1952 = vadd.f32 %v1908, %v1946
    %s1953 = sld [smem:[#allocation9 + $0x6]]
    %v1954 = vstv %s1953
    %v1955 = vmul.f32 %v1954, %v1723
    %v1956 = vmul.f32 %v1954, %v1724
    %v1957 = vmul.f32 %v1954, 0.0
    %1961 = vrot.lane.b32.xlu0 %v1955, 96
    %v1962 = vpop.permute.xlu0 %1961
    %1963 = vrot.lane.b32.xlu0 %v1956, 96
    %v1964 = vpop.permute.xlu0 %1963
    %1965 = vrot.lane.b32.xlu0 %v1957, 96
    %v1966 = vpop.permute.xlu0 %1965
    %v1967 = vsel %vm468, %v1962, %v1964
    %v1968 = vsel %vm468, %v1964, %v1966
    %v1972 = vadd.f32 %v1928, %v1962
    %v1973 = vadd.f32 %v1929, %v1967
    %v1974 = vadd.f32 %v1930, %v1968
    %s1975 = sld [smem:[#allocation9 + $0x86]]
    %v1976 = vstv %s1975
    %v1977 = vmul.f32 %v1976, %v1723
    %v1978 = vmul.f32 %v1976, %v1724
    %v1979 = vmul.f32 %v1976, 0.0
    %1983 = vrot.lane.b32.xlu0 %v1977, 96
    %v1984 = vpop.permute.xlu0 %1983
    %1985 = vrot.lane.b32.xlu0 %v1978, 96
    %v1986 = vpop.permute.xlu0 %1985
    %1987 = vrot.lane.b32.xlu0 %v1979, 96
    %v1988 = vpop.permute.xlu0 %1987
    %v1989 = vsel %vm468, %v1984, %v1986
    %v1990 = vsel %vm468, %v1986, %v1988
    %v1994 = vadd.f32 %v1950, %v1984
    %v1995 = vadd.f32 %v1951, %v1989
    %v1996 = vadd.f32 %v1952, %v1990
    %s1997 = sld [smem:[#allocation9 + $0x7]]
    %v1998 = vstv %s1997
    %v1999 = vmul.f32 %v1998, %v1719
    %v2000 = vmul.f32 %v1998, %v1720
    %v2001 = vmul.f32 %v1998, 0.0
    %2005 = vrot.lane.b32.xlu0 %v1999, 95
    %v2006 = vpop.permute.xlu0 %2005
    %2007 = vrot.lane.b32.xlu0 %v2000, 95
    %v2008 = vpop.permute.xlu0 %2007
    %2009 = vrot.lane.b32.xlu0 %v2001, 95
    %v2010 = vpop.permute.xlu0 %2009
    %v2011 = vsel %vm513, %v2006, %v2008
    %v2012 = vsel %vm513, %v2008, %v2010
    %v2016 = vadd.f32 %v1972, %v2006
    %v2017 = vadd.f32 %v1973, %v2011
    %v2018 = vadd.f32 %v1974, %v2012
    %s2019 = sld [smem:[#allocation9 + $0x87]]
    %v2020 = vstv %s2019
    %v2021 = vmul.f32 %v2020, %v1719
    %v2022 = vmul.f32 %v2020, %v1720
    %v2023 = vmul.f32 %v2020, 0.0
    %2027 = vrot.lane.b32.xlu0 %v2021, 95
    %v2028 = vpop.permute.xlu0 %2027
    %2029 = vrot.lane.b32.xlu0 %v2022, 95
    %v2030 = vpop.permute.xlu0 %2029
    %2031 = vrot.lane.b32.xlu0 %v2023, 95
    %v2032 = vpop.permute.xlu0 %2031
    %v2033 = vsel %vm513, %v2028, %v2030
    %v2034 = vsel %vm513, %v2030, %v2032
    %v2038 = vadd.f32 %v1994, %v2028
    %v2039 = vadd.f32 %v1995, %v2033
    %v2040 = vadd.f32 %v1996, %v2034
    %s2041 = sld [smem:[#allocation9 + $0x8]]
    %v2042 = vstv %s2041
    %v2043 = vmul.f32 %v2042, %v1725
    %v2044 = vmul.f32 %v2042, %v1726
    %v2045 = vmul.f32 %v2042, 0.0
    %2049 = vrot.lane.b32.xlu0 %v2043, 94
    %v2050 = vpop.permute.xlu0 %2049
    %2051 = vrot.lane.b32.xlu0 %v2044, 94
    %v2052 = vpop.permute.xlu0 %2051
    %2053 = vrot.lane.b32.xlu0 %v2045, 94
    %v2054 = vpop.permute.xlu0 %2053
    %v2055 = vsel %vm558, %v2050, %v2052
    %v2056 = vsel %vm558, %v2052, %v2054
    %v2060 = vadd.f32 %v2016, %v2050
    %v2061 = vadd.f32 %v2017, %v2055
    %v2062 = vadd.f32 %v2018, %v2056
    %s2063 = sld [smem:[#allocation9 + $0x88]]
    %v2064 = vstv %s2063
    %v2065 = vmul.f32 %v2064, %v1725
    %v2066 = vmul.f32 %v2064, %v1726
    %v2067 = vmul.f32 %v2064, 0.0
    %2071 = vrot.lane.b32.xlu0 %v2065, 94
    %v2072 = vpop.permute.xlu0 %2071
    %2073 = vrot.lane.b32.xlu0 %v2066, 94
    %v2074 = vpop.permute.xlu0 %2073
    %2075 = vrot.lane.b32.xlu0 %v2067, 94
    %v2076 = vpop.permute.xlu0 %2075
    %v2077 = vsel %vm558, %v2072, %v2074
    %v2078 = vsel %vm558, %v2074, %v2076
    %v2082 = vadd.f32 %v2038, %v2072
    %v2083 = vadd.f32 %v2039, %v2077
    %v2084 = vadd.f32 %v2040, %v2078
    %2088 = vrot.lane.b32.xlu0 %v1706, 17
    %v2089 = vpop.permute.xlu0 %2088
    %2090 = vrot.lane.b32.xlu0 %v1707, 17
    %v2091 = vpop.permute.xlu0 %2090
    %2092 = vrot.lane.b32.xlu0 %v1708, 17
    %v2093 = vpop.permute.xlu0 %2092
    %v2094 = vsel %vm1718, %v2089, %v2091
    %v2095 = vsel %vm1718, %v2091, %v2093
    %v2098 = vsel %vm125, %v2094, 0.0
    %v2099 = vsel %vm126, %v2095, 0.0
    %v2100 = vsel %vm127, %v2094, 0.0
    %v2101 = vsel %vm128, %v2095, 0.0
    %s2102 = sld [smem:[#allocation9 + $0x9]]
    %v2103 = vstv %s2102
    %v2104 = vmul.f32 %v2103, 0.0
    %v2105 = vmul.f32 %v2103, %v2098
    %v2106 = vmul.f32 %v2103, %v2099
    %v2107 = vadd.f32 %v2060, %v2104
    %v2108 = vadd.f32 %v2061, %v2105
    %v2109 = vadd.f32 %v2062, %v2106
    %s2110 = sld [smem:[#allocation9 + $0x89]]
    %v2111 = vstv %s2110
    %v2112 = vmul.f32 %v2111, 0.0
    %v2113 = vmul.f32 %v2111, %v2098
    %v2114 = vmul.f32 %v2111, %v2099
    %v2115 = vadd.f32 %v2082, %v2112
    %v2116 = vadd.f32 %v2083, %v2113
    %v2117 = vadd.f32 %v2084, %v2114
    %s2118 = sld [smem:[#allocation9 + $0xa]]
    %v2119 = vstv %s2118
    %v2120 = vmul.f32 %v2119, 0.0
    %v2121 = vmul.f32 %v2119, %v2094
    %v2122 = vmul.f32 %v2119, %v2095
    %2126 = vrot.lane.b32.xlu0 %v2120, 127
    %v2127 = vpop.permute.xlu0 %2126
    %2128 = vrot.lane.b32.xlu0 %v2121, 127
    %v2129 = vpop.permute.xlu0 %2128
    %2130 = vrot.lane.b32.xlu0 %v2122, 127
    %v2131 = vpop.permute.xlu0 %2130
    %v2132 = vsel %vm253, %v2127, %v2129
    %v2133 = vsel %vm253, %v2129, %v2131
    %v2137 = vadd.f32 %v2107, %v2132
    %v2138 = vadd.f32 %v2108, %v2133
    %v2139 = vadd.f32 %v2109, %v2131
    %s2140 = sld [smem:[#allocation9 + $0x8a]]
    %v2141 = vstv %s2140
    %v2142 = vmul.f32 %v2141, 0.0
    %v2143 = vmul.f32 %v2141, %v2094
    %v2144 = vmul.f32 %v2141, %v2095
    %2148 = vrot.lane.b32.xlu0 %v2142, 127
    %v2149 = vpop.permute.xlu0 %2148
    %2150 = vrot.lane.b32.xlu0 %v2143, 127
    %v2151 = vpop.permute.xlu0 %2150
    %2152 = vrot.lane.b32.xlu0 %v2144, 127
    %v2153 = vpop.permute.xlu0 %2152
    %v2154 = vsel %vm253, %v2149, %v2151
    %v2155 = vsel %vm253, %v2151, %v2153
    %v2159 = vadd.f32 %v2115, %v2154
    %v2160 = vadd.f32 %v2116, %v2155
    %v2161 = vadd.f32 %v2117, %v2153
    %s2162 = sld [smem:[#allocation9 + $0xb]]
    %v2163 = vstv %s2162
    %v2164 = vmul.f32 %v2163, 0.0
    %v2165 = vmul.f32 %v2163, %v2100
    %v2166 = vmul.f32 %v2163, %v2101
    %2170 = vrot.lane.b32.xlu0 %v2164, 126
    %v2171 = vpop.permute.xlu0 %2170
    %2172 = vrot.lane.b32.xlu0 %v2165, 126
    %v2173 = vpop.permute.xlu0 %2172
    %2174 = vrot.lane.b32.xlu0 %v2166, 126
    %v2175 = vpop.permute.xlu0 %2174
    %v2176 = vsel %vm298, %v2171, %v2173
    %v2177 = vsel %vm298, %v2173, %v2175
    %v2181 = vadd.f32 %v2137, %v2176
    %v2182 = vadd.f32 %v2138, %v2177
    %v2183 = vadd.f32 %v2139, %v2175
    %s2184 = sld [smem:[#allocation9 + $0x8b]]
    %v2185 = vstv %s2184
    %v2186 = vmul.f32 %v2185, 0.0
    %v2187 = vmul.f32 %v2185, %v2100
    %v2188 = vmul.f32 %v2185, %v2101
    %2192 = vrot.lane.b32.xlu0 %v2186, 126
    %v2193 = vpop.permute.xlu0 %2192
    %2194 = vrot.lane.b32.xlu0 %v2187, 126
    %v2195 = vpop.permute.xlu0 %2194
    %2196 = vrot.lane.b32.xlu0 %v2188, 126
    %v2197 = vpop.permute.xlu0 %2196
    %v2198 = vsel %vm298, %v2193, %v2195
    %v2199 = vsel %vm298, %v2195, %v2197
    %v2203 = vadd.f32 %v2159, %v2198
    %v2204 = vadd.f32 %v2160, %v2199
    %v2205 = vadd.f32 %v2161, %v2197
    %s2206 = sld [smem:[#allocation9 + $0xc]]
    %v2207 = vstv %s2206
    %v2208 = vmul.f32 %v2207, 0.0
    %v2209 = vmul.f32 %v2207, %v2098
    %v2210 = vmul.f32 %v2207, %v2099
    %2214 = vrot.lane.b32.xlu0 %v2208, 112
    %v2215 = vpop.permute.xlu0 %2214
    %2216 = vrot.lane.b32.xlu0 %v2209, 112
    %v2217 = vpop.permute.xlu0 %2216
    %2218 = vrot.lane.b32.xlu0 %v2210, 112
    %v2219 = vpop.permute.xlu0 %2218
    %v2220 = vsel %vm343, %v2215, %v2217
    %v2221 = vsel %vm343, %v2217, %v2219
    %v2225 = vadd.f32 %v2181, %v2220
    %v2226 = vadd.f32 %v2182, %v2221
    %v2227 = vadd.f32 %v2183, %v2219
    %s2228 = sld [smem:[#allocation9 + $0x8c]]
    %v2229 = vstv %s2228
    %v2230 = vmul.f32 %v2229, 0.0
    %v2231 = vmul.f32 %v2229, %v2098
    %v2232 = vmul.f32 %v2229, %v2099
    %2236 = vrot.lane.b32.xlu0 %v2230, 112
    %v2237 = vpop.permute.xlu0 %2236
    %2238 = vrot.lane.b32.xlu0 %v2231, 112
    %v2239 = vpop.permute.xlu0 %2238
    %2240 = vrot.lane.b32.xlu0 %v2232, 112
    %v2241 = vpop.permute.xlu0 %2240
    %v2242 = vsel %vm343, %v2237, %v2239
    %v2243 = vsel %vm343, %v2239, %v2241
    %v2247 = vadd.f32 %v2203, %v2242
    %v2248 = vadd.f32 %v2204, %v2243
    %v2249 = vadd.f32 %v2205, %v2241
    %s2250 = sld [smem:[#allocation9 + $0xd]]
    %v2251 = vstv %s2250
    %v2252 = vmul.f32 %v2251, %v2094
    %v2253 = vmul.f32 %v2251, %v2095
    %2256 = vrot.lane.b32.xlu0 %v2252, 111
    %v2257 = vpop.permute.xlu0 %2256
    %2258 = vrot.lane.b32.xlu0 %v2253, 111
    %v2259 = vpop.permute.xlu0 %2258
    %v2260 = vsel %vm384, %v2257, %v2259
    %v2264 = vadd.f32 %v2225, %v2257
    %v2265 = vadd.f32 %v2226, %v2260
    %v2266 = vadd.f32 %v2227, %v2259
    %s2267 = sld [smem:[#allocation9 + $0x8d]]
    %v2268 = vstv %s2267
    %v2269 = vmul.f32 %v2268, %v2094
    %v2270 = vmul.f32 %v2268, %v2095
    %2273 = vrot.lane.b32.xlu0 %v2269, 111
    %v2274 = vpop.permute.xlu0 %2273
    %2275 = vrot.lane.b32.xlu0 %v2270, 111
    %v2276 = vpop.permute.xlu0 %2275
    %v2277 = vsel %vm384, %v2274, %v2276
    %v2281 = vadd.f32 %v2247, %v2274
    %v2282 = vadd.f32 %v2248, %v2277
    %v2283 = vadd.f32 %v2249, %v2276
    %s2284 = sld [smem:[#allocation9 + $0xe]]
    %v2285 = vstv %s2284
    %v2286 = vmul.f32 %v2285, %v2100
    %v2287 = vmul.f32 %v2285, %v2101
    %v2288 = vmul.f32 %v2285, 0.0
    %2292 = vrot.lane.b32.xlu0 %v2286, 110
    %v2293 = vpop.permute.xlu0 %2292
    %2294 = vrot.lane.b32.xlu0 %v2287, 110
    %v2295 = vpop.permute.xlu0 %2294
    %2296 = vrot.lane.b32.xlu0 %v2288, 110
    %v2297 = vpop.permute.xlu0 %2296
    %v2298 = vsel %vm423, %v2293, %v2295
    %v2299 = vsel %vm423, %v2295, %v2297
    %v2303 = vadd.f32 %v2264, %v2293
    %v2304 = vadd.f32 %v2265, %v2298
    %v2305 = vadd.f32 %v2266, %v2299
    %s2306 = sld [smem:[#allocation9 + $0x8e]]
    %v2307 = vstv %s2306
    %v2308 = vmul.f32 %v2307, %v2100
    %v2309 = vmul.f32 %v2307, %v2101
    %v2310 = vmul.f32 %v2307, 0.0
    %2314 = vrot.lane.b32.xlu0 %v2308, 110
    %v2315 = vpop.permute.xlu0 %2314
    %2316 = vrot.lane.b32.xlu0 %v2309, 110
    %v2317 = vpop.permute.xlu0 %2316
    %2318 = vrot.lane.b32.xlu0 %v2310, 110
    %v2319 = vpop.permute.xlu0 %2318
    %v2320 = vsel %vm423, %v2315, %v2317
    %v2321 = vsel %vm423, %v2317, %v2319
    %v2325 = vadd.f32 %v2281, %v2315
    %v2326 = vadd.f32 %v2282, %v2320
    %v2327 = vadd.f32 %v2283, %v2321
    %s2328 = sld [smem:[#allocation9 + $0xf]]
    %v2329 = vstv %s2328
    %v2330 = vmul.f32 %v2329, %v2098
    %v2331 = vmul.f32 %v2329, %v2099
    %v2332 = vmul.f32 %v2329, 0.0
    %2336 = vrot.lane.b32.xlu0 %v2330, 96
    %v2337 = vpop.permute.xlu0 %2336
    %2338 = vrot.lane.b32.xlu0 %v2331, 96
    %v2339 = vpop.permute.xlu0 %2338
    %2340 = vrot.lane.b32.xlu0 %v2332, 96
    %v2341 = vpop.permute.xlu0 %2340
    %v2342 = vsel %vm468, %v2337, %v2339
    %v2343 = vsel %vm468, %v2339, %v2341
    %v2347 = vadd.f32 %v2303, %v2337
    %v2348 = vadd.f32 %v2304, %v2342
    %v2349 = vadd.f32 %v2305, %v2343
    %s2350 = sld [smem:[#allocation9 + $0x8f]]
    %v2351 = vstv %s2350
    %v2352 = vmul.f32 %v2351, %v2098
    %v2353 = vmul.f32 %v2351, %v2099
    %v2354 = vmul.f32 %v2351, 0.0
    %2358 = vrot.lane.b32.xlu0 %v2352, 96
    %v2359 = vpop.permute.xlu0 %2358
    %2360 = vrot.lane.b32.xlu0 %v2353, 96
    %v2361 = vpop.permute.xlu0 %2360
    %2362 = vrot.lane.b32.xlu0 %v2354, 96
    %v2363 = vpop.permute.xlu0 %2362
    %v2364 = vsel %vm468, %v2359, %v2361
    %v2365 = vsel %vm468, %v2361, %v2363
    %v2369 = vadd.f32 %v2325, %v2359
    %v2370 = vadd.f32 %v2326, %v2364
    %v2371 = vadd.f32 %v2327, %v2365
    %s2372 = sld [smem:[#allocation9 + $0x10]]
    %v2373 = vstv %s2372
    %v2374 = vmul.f32 %v2373, %v2094
    %v2375 = vmul.f32 %v2373, %v2095
    %v2376 = vmul.f32 %v2373, 0.0
    %2380 = vrot.lane.b32.xlu0 %v2374, 95
    %v2381 = vpop.permute.xlu0 %2380
    %2382 = vrot.lane.b32.xlu0 %v2375, 95
    %v2383 = vpop.permute.xlu0 %2382
    %2384 = vrot.lane.b32.xlu0 %v2376, 95
    %v2385 = vpop.permute.xlu0 %2384
    %v2386 = vsel %vm513, %v2381, %v2383
    %v2387 = vsel %vm513, %v2383, %v2385
    %v2391 = vadd.f32 %v2347, %v2381
    %v2392 = vadd.f32 %v2348, %v2386
    %v2393 = vadd.f32 %v2349, %v2387
    %s2394 = sld [smem:[#allocation9 + $0x90]]
    %v2395 = vstv %s2394
    %v2396 = vmul.f32 %v2395, %v2094
    %v2397 = vmul.f32 %v2395, %v2095
    %v2398 = vmul.f32 %v2395, 0.0
    %2402 = vrot.lane.b32.xlu0 %v2396, 95
    %v2403 = vpop.permute.xlu0 %2402
    %2404 = vrot.lane.b32.xlu0 %v2397, 95
    %v2405 = vpop.permute.xlu0 %2404
    %2406 = vrot.lane.b32.xlu0 %v2398, 95
    %v2407 = vpop.permute.xlu0 %2406
    %v2408 = vsel %vm513, %v2403, %v2405
    %v2409 = vsel %vm513, %v2405, %v2407
    %v2413 = vadd.f32 %v2369, %v2403
    %v2414 = vadd.f32 %v2370, %v2408
    %v2415 = vadd.f32 %v2371, %v2409
    %s2416 = sld [smem:[#allocation9 + $0x11]]
    %v2417 = vstv %s2416
    %v2418 = vmul.f32 %v2417, %v2100
    %v2419 = vmul.f32 %v2417, %v2101
    %v2420 = vmul.f32 %v2417, 0.0
    %2424 = vrot.lane.b32.xlu0 %v2418, 94
    %v2425 = vpop.permute.xlu0 %2424
    %2426 = vrot.lane.b32.xlu0 %v2419, 94
    %v2427 = vpop.permute.xlu0 %2426
    %2428 = vrot.lane.b32.xlu0 %v2420, 94
    %v2429 = vpop.permute.xlu0 %2428
    %v2430 = vsel %vm558, %v2425, %v2427
    %v2431 = vsel %vm558, %v2427, %v2429
    %v2435 = vadd.f32 %v2391, %v2425
    %v2436 = vadd.f32 %v2392, %v2430
    %v2437 = vadd.f32 %v2393, %v2431
    %s2438 = sld [smem:[#allocation9 + $0x91]]
    %v2439 = vstv %s2438
    %v2440 = vmul.f32 %v2439, %v2100
    %v2441 = vmul.f32 %v2439, %v2101
    %v2442 = vmul.f32 %v2439, 0.0
    %2446 = vrot.lane.b32.xlu0 %v2440, 94
    %v2447 = vpop.permute.xlu0 %2446
    %2448 = vrot.lane.b32.xlu0 %v2441, 94
    %v2449 = vpop.permute.xlu0 %2448
    %2450 = vrot.lane.b32.xlu0 %v2442, 94
    %v2451 = vpop.permute.xlu0 %2450
    %v2452 = vsel %vm558, %v2447, %v2449
    %v2453 = vsel %vm558, %v2449, %v2451
    %v2457 = vadd.f32 %v2413, %v2447
    %v2458 = vadd.f32 %v2414, %v2452
    %v2459 = vadd.f32 %v2415, %v2453
    %s2460 = sld [smem:[#allocation10]]
    %v2461 = vstv %s2460
    %v2462 = vadd.f32 %v2435, %v2461
    %v2463 = vadd.f32 %v2436, %v2461
    %v2464 = vadd.f32 %v2437, %v2461
    %v2465 = vmax.f32 %v2462, 0.0
    %v2466 = vmax.f32 %v2463, 0.0
    %v2467 = vmax.f32 %v2464, 0.0
    %s2468 = sld [smem:[#allocation10 + $0x1]]
    %v2469 = vstv %s2468
    %v2470 = vadd.f32 %v2457, %v2469
    %v2471 = vadd.f32 %v2458, %v2469
    %v2472 = vadd.f32 %v2459, %v2469
    %v2473 = vmax.f32 %v2470, 0.0
    %v2474 = vmax.f32 %v2471, 0.0
    %v2475 = vmax.f32 %v2472, 0.0
    %2476 = vst [vmem:[%s7] sm:$0xf] %v200
    %2477 = vst [vmem:[%s7 + $0x4] sm:$0xf] %v204
    %2478 = vst [vmem:[%s7 + $0x8] sm:$0xf] %v208
    %2479 = vst [vmem:[%s7 + $0xc] sm:$0xf] %v212
    %v2480 = vrot.slane %v1699, 6
    %v2481 = vrot.slane %v1700, 4
    %vm2482 = vcmask 1041408
    %v2483 = vsel %vm2482, %v1698, %v2480
    %vm2484 = vcmask 1043456
    %v2485 = vsel %vm2484, %v2483, %v2481
    %2486 = vrot.lane.b32.xlu0 %v2485, 17
    %v2487 = vpop.permute.xlu0 %2486
    %v2488 = vrot.slane %v2487, 2
    %v2489 = vsel %vm1718, %v2487, %v2488
    %2491 = vst [vmem:[%s7 + $0x10] sm:$0xf] %v2489
    %v2492 = vrot.slane %v1707, 6
    %v2493 = vrot.slane %v1708, 4
    %v2494 = vsel %vm2482, %v1706, %v2492
    %v2495 = vsel %vm2484, %v2494, %v2493
    %2496 = vrot.lane.b32.xlu0 %v2495, 17
    %v2497 = vpop.permute.xlu0 %2496
    %v2498 = vrot.slane %v2497, 2
    %v2499 = vsel %vm1718, %v2497, %v2498
    %2501 = vst [vmem:[%s7 + $0x14] sm:$0xf] %v2499
    %v2505 = vrot.slane %v2466, 6
    %v2506 = vrot.slane %v2467, 4
    %v2507 = vsel %vm2482, %v2465, %v2505
    %v2508 = vsel %vm2484, %v2507, %v2506
    %2509 = vrot.lane.b32.xlu0 %v2508, 17
    %v2510 = vpop.permute.xlu0 %2509
    %v2511 = vrot.slane %v2510, 2
    %v2512 = vsel %vm1718, %v2510, %v2511
    %2514 = vst [vmem:[%s7 + $0x18] sm:$0xf] %v2512
    %v2518 = vrot.slane %v2474, 6
    %v2519 = vrot.slane %v2475, 4
    %v2520 = vsel %vm2482, %v2473, %v2518
    %v2521 = vsel %vm2484, %v2520, %v2519
    %2522 = vrot.lane.b32.xlu0 %v2521, 17
    %v2523 = vpop.permute.xlu0 %2522
    %v2524 = vrot.slane %v2523, 2
    %v2525 = vsel %vm1718, %v2523, %v2524
    %2527 = vst [vmem:[%s7 + $0x1c] sm:$0xf] %v2525
    // Predicated region
    $region54: #{cat_bottleneck_forward.1} parent=1 // pred_check
      _
    $region55: #{cat_bottleneck_forward.1} parent=1 // pred_check_branch
      %2529 = sbr.rel (0) target = $region57
    $region56: #{cat_bottleneck_forward.1} parent=1 // pred_region
      _
    $region57: #{cat_bottleneck_forward.1} parent=1 // pred_fallthru
      _
    // Predicated region
    $region58: #{cat_bottleneck_forward.1} parent=1 // pred_check
      _
    $region59: #{cat_bottleneck_forward.1} parent=1 // pred_check_branch
      %2531 = sbr.rel (0) target = $region61
    $region60: #{cat_bottleneck_forward.1} parent=1 // pred_region
      _
    $region61: #{cat_bottleneck_forward.1} parent=1 // pred_fallthru
      _
    %2532 = vsyncpa [#allocation3], 1
    %2533 = vsyncpa [#allocation5], 1
    %2534 = vsyncpa [#allocation8], 1
    %2535 = vsyncpa [#allocation11], 1

</llo_original>
